<compile_context>
chip_gen: v7x
topology: tpu7x:2x2x1
jax: 0.10.0
libtpu: 0.0.40
codegen_flags: <defaults>
</compile_context>

<pallas_src>
import functools

import jax
import jax.numpy as jnp
from jax import lax
from jax.experimental import pallas as pl
from jax.experimental.pallas import tpu as pltpu

BN_EPS = 1e-5
LANE = 128
VMEM_LIMIT = 48 * 1024 * 1024


def _round_up(x, m):
    return (x + m - 1) // m * m


def _pick_th(ho, wp, target_rows):
    """Largest divisor of ho such that th*wp <= target_rows (>=1)."""
    best = 1
    for d in range(1, ho + 1):
        if ho % d == 0 and d * wp <= target_rows:
            best = d
    return best


# ----------------------------------------------------------------------------
# Pass-1 kernels: conv (bf16 x bf16 -> f32 acc) + per-tile channel sum / sumsq.
# ----------------------------------------------------------------------------
def _conv3x3_pass1_kernel(x_ref, w_ref, y_ref, sum_ref, sq_ref, *, th, wp, wo, cin):
    """Fused 3x3 stride-1 conv on a haloed, flattened row tile.

    x_ref: (1, (th+3)*wp, cin) bf16  -- padded input rows, flattened (h*wp + w)
    w_ref: (9*cin, cp) bf16          -- rows ordered (kh, kw, cin)
    y_ref: (1, th*wp, cp)            -- raw conv out (bf16), cols >= wo are garbage
    sum_ref/sq_ref: (1, 1, cp) f32   -- per-tile partial BN stats (garbage masked out)
    """
    rows = th * wp
    cp = y_ref.shape[-1]
    acc = jnp.zeros((rows, cp), jnp.float32)
    for kh in range(3):
        for kw in range(3):
            off = kh * wp + kw
            lhs = x_ref[0, off:off + rows, :]                      # (rows, cin) bf16
            w_t = w_ref[(kh * 3 + kw) * cin:(kh * 3 + kw + 1) * cin, :]
            acc = acc + jnp.dot(lhs, w_t, preferred_element_type=jnp.float32)
    y_ref[0] = acc.astype(y_ref.dtype)

    # Mask the wrap-around garbage columns (w >= wo) out of the statistics.
    col = lax.broadcasted_iota(jnp.int32, (rows, cp), 0) % wp
    accm = jnp.where(col < wo, acc, 0.0)
    sum_ref[0] = jnp.sum(accm, axis=0, keepdims=True)
    sq_ref[0] = jnp.sum(accm * accm, axis=0, keepdims=True)


def _matmul_pass1_kernel(x_ref, w_ref, y_ref, sum_ref, sq_ref):
    """Plain conv-as-matmul (1x1 shortcut, strided-conv1 fallback).

    Garbage/padded rows of x are all-zero, so they contribute 0 to the stats.
    """
    acc = jnp.dot(x_ref[0], w_ref[...], preferred_element_type=jnp.float32)
    y_ref[0] = acc.astype(y_ref.dtype)
    sum_ref[0] = jnp.sum(acc, axis=0, keepdims=True)
    sq_ref[0] = jnp.sum(acc * acc, axis=0, keepdims=True)


# ----------------------------------------------------------------------------
# Pass-2 kernel: BN affine (+ optional residual, optionally BN'd) (+ ReLU)
# ----------------------------------------------------------------------------
def _make_pass2_kernel(mode, relu):
    def kernel(*refs):
        if mode == "bn_add":
            y_ref, sc_ref, sh_ref, r_ref, rsc_ref, rsh_ref, o_ref = refs
        elif mode == "add":
            y_ref, sc_ref, sh_ref, r_ref, o_ref = refs
        else:
            y_ref, sc_ref, sh_ref, o_ref = refs
        out = y_ref[0].astype(jnp.float32) * sc_ref[...] + sh_ref[...]
        if mode == "add":
            out = out + r_ref[0].astype(jnp.float32)
        elif mode == "bn_add":
            out = out + (r_ref[0].astype(jnp.float32) * rsc_ref[...] + rsh_ref[...])
        if relu:
            out = jnp.maximum(out, 0.0)
        o_ref[0] = out.astype(o_ref.dtype)
    return kernel


# ----------------------------------------------------------------------------
# pallas_call drivers
# ----------------------------------------------------------------------------
def _pass1_call(kernel_fn, x_tiles, w2d, cp, r_out, out_dtype=jnp.bfloat16):
    t, rin, k_in = x_tiles.shape
    kdim, cpw = w2d.shape
    y, s, q = pl.pallas_call(
        kernel_fn,
        grid=(t,),
        in_specs=[pl.BlockSpec((1, rin, k_in), lambda i: (i, 0, 0)),
                  pl.BlockSpec((kdim, cpw), lambda i: (0, 0))],
        out_specs=(pl.BlockSpec((1, r_out, cp), lambda i: (i, 0, 0)),
                   pl.BlockSpec((1, 1, cp), lambda i: (i, 0, 0)),
                   pl.BlockSpec((1, 1, cp), lambda i: (i, 0, 0))),
        out_shape=(jax.ShapeDtypeStruct((t, r_out, cp), out_dtype),
                   jax.ShapeDtypeStruct((t, 1, cp), jnp.float32),
                   jax.ShapeDtypeStruct((t, 1, cp), jnp.float32)),
        compiler_params=pltpu.CompilerParams(
            dimension_semantics=("parallel",),       # per-tile partial stats -> parallel
            vmem_limit_bytes=VMEM_LIMIT),
    )(x_tiles, w2d)
    # Tiny (T, 1, Cp) partial-stat reduction stays in JAX.
    return y, jnp.sum(s, axis=0), jnp.sum(q, axis=0)


def _conv3x3_s1_pass1(x_nhwc_bf, w2d, cp, th, out_dtype=jnp.bfloat16):
    """3x3 stride-1 pad-1 conv via fused in-kernel patch extraction."""
    n, h, w, c = x_nhwc_bf.shape
    wp = w + 2
    # pad: 1 top, 2 bottom (1 conv pad + 1 tail row for the flattened-tap wrap), 1 L/R
    xp = jnp.pad(x_nhwc_bf, ((0, 0), (1, 2), (1, 1), (0, 0)))
    n_t = h // th
    tiles = jnp.stack([xp[:, r * th:r * th + th + 3] for r in range(n_t)], axis=1)
    tiles = tiles.reshape(n * n_t, (th + 3) * wp, c)            # ~1.1x of x, not 9x
    kfn = functools.partial(_conv3x3_pass1_kernel, th=th, wp=wp, wo=w, cin=c)
    return _pass1_call(kfn, tiles, w2d, cp, th * wp, out_dtype)


def _matmul_pass1(x_tiles, w2d, cp, out_dtype=jnp.bfloat16):
    return _pass1_call(_matmul_pass1_kernel, x_tiles, w2d, cp,
                       x_tiles.shape[1], out_dtype)


def _bn_act_pass2(y, scale, shift, *, residual=None, res_scale=None, res_shift=None,
                  relu=True, out_dtype=jnp.float32):
    t, r, cp = y.shape
    mode = "none"
    if residual is not None:
        mode = "bn_add" if res_scale is not None else "add"
    kernel = _make_pass2_kernel(mode, relu)
    args = [y, scale, shift]
    in_specs = [pl.BlockSpec((1, r, cp), lambda i: (i, 0, 0)),
                pl.BlockSpec((1, cp), lambda i: (0, 0)),
                pl.BlockSpec((1, cp), lambda i: (0, 0))]
    if residual is not None:
        args.append(residual)
        in_specs.append(pl.BlockSpec((1, r, cp), lambda i: (i, 0, 0)))
        if mode == "bn_add":
            args.extend([res_scale, res_shift])
            in_specs.extend([pl.BlockSpec((1, cp), lambda i: (0, 0)),
                             pl.BlockSpec((1, cp), lambda i: (0, 0))])
    return pl.pallas_call(
        kernel,
        grid=(t,),
        in_specs=in_specs,
        out_specs=pl.BlockSpec((1, r, cp), lambda i: (i, 0, 0)),
        out_shape=jax.ShapeDtypeStruct((t, r, cp), out_dtype),
        compiler_params=pltpu.CompilerParams(
            dimension_semantics=("parallel",),
            vmem_limit_bytes=VMEM_LIMIT),
    )(*args)


# ----------------------------------------------------------------------------
# JAX-side glue: parameter packing, tiling helpers, BN affine from global stats.
# ----------------------------------------------------------------------------
def _bn_affine(csum, csq, gamma_p, beta_p, m_true):
    inv_m = 1.0 / float(m_true)
    mean = csum * inv_m
    var = jnp.maximum(csq * inv_m - mean * mean, 0.0)    # biased (training-mode) var
    inv = lax.rsqrt(var + BN_EPS)
    scale = gamma_p * inv                                # padded channels: gamma=0
    shift = beta_p - mean * scale
    return scale, shift


def _weight2d(w_oihw, cp):
    co, ci, kh, kw = w_oihw.shape
    w2d = jnp.transpose(w_oihw, (2, 3, 1, 0)).reshape(kh * kw * ci, co)
    return jnp.pad(w2d, ((0, 0), (0, cp - co))).astype(jnp.bfloat16)


def _pad_vec(v, cp):
    v = jnp.asarray(v, jnp.float32).reshape(1, -1)
    return jnp.pad(v, ((0, 0), (0, cp - v.shape[1])))


def _tile_rows(a_nhwc, th, pad_c_to=None):
    """(N, Ho, Wo, C) -> (T, th*(Wo+2), C[pad]) in the kernels' flattened-row layout."""
    n, ho, wo, c = a_nhwc.shape
    cpad = 0 if pad_c_to is None else pad_c_to - c
    a = jnp.pad(a_nhwc, ((0, 0), (0, 0), (0, 2), (0, cpad)))
    return a.reshape(n * (ho // th), th * (wo + 2), c + cpad)


def _im2col_tiles(x_bf, stride, th):
    """im2col fallback for the strided 3x3 conv, emitted in the tiled row layout."""
    n, h, w, c = x_bf.shape
    xp = jnp.pad(x_bf, ((0, 0), (1, 1), (1, 1), (0, 0)))
    ho = (h - 1) // stride + 1
    wo = (w - 1) // stride + 1
    cols = [xp[:, kh:kh + stride * (ho - 1) + 1:stride,
               kw:kw + stride * (wo - 1) + 1:stride, :]
            for kh in range(3) for kw in range(3)]
    cols = jnp.concatenate(cols, axis=-1)                 # (N, Ho, Wo, 9C)
    return _tile_rows(cols, th)


# ----------------------------------------------------------------------------
# ResBlock forward
# ----------------------------------------------------------------------------
def resblock_forward(x_nchw, params, stride=1, target_rows=1024):
    """params: w1,g1,b1,w2,g2,b2 and optionally wsc,gsc,bsc (projection shortcut)."""
    x = jnp.transpose(x_nchw, (0, 2, 3, 1)).astype(jnp.float32)      # NCHW -> NHWC
    n, h, w, cin = x.shape
    cout = params["w1"].shape[0]
    cp = _round_up(cout, LANE)                                       # lane-dense out
    x_bf = x.astype(jnp.bfloat16)                                    # MXU operand dtype

    ho = (h - 1) // stride + 1
    wo = (w - 1) // stride + 1
    wp = wo + 2
    th = _pick_th(ho, wp, target_rows)
    m_true = n * ho * wo

    # --- res_block1: Conv3x3(stride, pad=1) + BN -> ReLU  (bf16 activation out)
    w1 = _weight2d(params["w1"], cp)
    if stride == 1:
        y1_raw, s1, q1 = _conv3x3_s1_pass1(x_bf, w1, cp, th)
    else:
        y1_raw, s1, q1 = _matmul_pass1(_im2col_tiles(x_bf, stride, th), w1, cp)
    sc1, sh1 = _bn_affine(s1, q1, _pad_vec(params["g1"], cp),
                          _pad_vec(params["b1"], cp), m_true)
    y1 = _bn_act_pass2(y1_raw, sc1, sh1, relu=True, out_dtype=jnp.bfloat16)

    # --- shortcut: raw Conv1x1(stride) output (its BN affine is fused into the final
    #     pass-2), or the exact identity tensor.
    if "wsc" in params:
        xs = _tile_rows(x_bf[:, ::stride, ::stride, :], th)
        sc_raw, ss, qs = _matmul_pass1(xs, _weight2d(params["wsc"], cp), cp)
        r_scale, r_shift = _bn_affine(ss, qs, _pad_vec(params["gsc"], cp),
                                      _pad_vec(params["bsc"], cp), m_true)
        res = sc_raw                                                 # bf16 residual
    else:
        assert stride == 1 and cin == cout
        res = _tile_rows(x, th, pad_c_to=cp)                         # f32 identity
        r_scale = r_shift = None

    # --- res_block2: Conv3x3(1, pad=1) + BN, fused (+ shortcut BN + add + ReLU)
    y1_nhwc = y1.reshape(n, ho, wp, cp)[:, :, :wo, :cout]            # drop garbage cols
    w2 = _weight2d(params["w2"], cp)
    y2_raw, s2, q2 = _conv3x3_s1_pass1(y1_nhwc, w2, cp, th)
    sc2, sh2 = _bn_affine(s2, q2, _pad_vec(params["g2"], cp),
                          _pad_vec(params["b2"], cp), m_true)
    out = _bn_act_pass2(y2_raw, sc2, sh2, residual=res, res_scale=r_scale,
                        res_shift=r_shift, relu=True, out_dtype=jnp.float32)

    out = out.reshape(n, ho, wp, cp)[:, :, :wo, :cout]
    return jnp.transpose(out, (0, 3, 1, 2))                          # NHWC -> NCHW


# ----------------------------------------------------------------------------
# Pure-JAX references.  op_dtype=bf16 mirrors the kernel's MXU operand casts;
# op_dtype=f32 is the exact module semantics.
# ----------------------------------------------------------------------------
def _ref_conv_bn(x_nhwc, w_oihw, gamma, beta, stride, padding, op_dtype):
    xo = x_nhwc.astype(op_dtype)
    w_hwio = jnp.transpose(w_oihw, (2, 3, 1, 0)).astype(op_dtype)
    y = lax.conv_general_dilated(
        xo, w_hwio, window_strides=(stride, stride),
        padding=[(padding, padding), (padding, padding)],
        dimension_numbers=("NHWC", "HWIO", "NHWC"),
        preferred_element_type=jnp.float32)
    m = y.mean(axis=(0, 1, 2))
    v = ((y - m) ** 2).mean(axis=(0, 1, 2))
    g = jnp.asarray(gamma, jnp.float32).reshape(-1)
    b = jnp.asarray(beta, jnp.float32).reshape(-1)
    return g * (y - m) * lax.rsqrt(v + BN_EPS) + b


def _ref_resblock(x_nchw, params, stride=1, op_dtype=jnp.float32):
    x = jnp.transpose(x_nchw, (0, 2, 3, 1)).astype(jnp.float32)
    y1 = jax.nn.relu(_ref_conv_bn(x, params["w1"], params["g1"], params["b1"],
                                  stride, 1, op_dtype))
    y2 = _ref_conv_bn(y1, params["w2"], params["g2"], params["b2"], 1, 1, op_dtype)
    if "wsc" in params:
        sc = _ref_conv_bn(x, params["wsc"], params["gsc"], params["bsc"],
                          stride, 0, op_dtype)
    else:
        sc = x
    out = jax.nn.relu(y2 + sc)
    return jnp.transpose(out, (0, 3, 1, 2))


# ----------------------------------------------------------------------------
if __name__ == "__main__":
    key = jax.random.PRNGKey(0)

    def conv_init(k, co, ci, ks):
        fan_in = ci * ks * ks
        return jax.random.normal(k, (co, ci, ks, ks), jnp.float32) * (fan_in ** -0.5)

    def make_params(k, cin, cout, shortcut):
        ks = jax.random.split(k, 7)
        p = {
            "w1": conv_init(ks[0], cout, cin, 3),
            "g1": 1.0 + 0.1 * jax.random.normal(ks[3], (cout,), jnp.float32),
            "b1": 0.1 * jax.random.normal(ks[4], (cout,), jnp.float32),
            "w2": conv_init(ks[1], cout, cout, 3),
            "g2": 1.0 + 0.1 * jax.random.normal(ks[5], (cout,), jnp.float32),
            "b2": 0.1 * jax.random.normal(ks[6], (cout,), jnp.float32),
        }
        if shortcut:
            p["wsc"] = conv_init(ks[2], cout, cin, 1)
            p["gsc"] = jnp.ones((cout,), jnp.float32)
            p["bsc"] = jnp.zeros((cout,), jnp.float32)
        return p

    configs = [
        # (N, Cin, H, W, Cout, stride)
        (2, 4, 16, 16, 8, 1),    # projection shortcut (Conv1x1 + BN)
        (2, 8, 16, 16, 8, 1),    # identity shortcut
        (2, 4, 16, 16, 8, 2),    # strided projection shortcut (im2col fallback path)
    ]

    for cfg_i, (N, Cin, H, W, Cout, stride) in enumerate(configs):
        kx, kp, key = jax.random.split(key, 3)
        x = jax.random.normal(kx, (N, Cin, H, W), jnp.float32)
        needs_sc = (stride != 1) or (Cin != Cout)
        params = make_params(kp, Cin, Cout, needs_sc)

        # target_rows=64 forces several row tiles per image -> exercises the multi-tile
        # grid, the partial-stat reduction and the haloed fused-conv path at test size.
        fwd = jax.jit(functools.partial(resblock_forward, stride=stride, target_rows=64))
        out = jax.block_until_ready(fwd(x, params))

        Ho, Wo = H // stride, W // stride
        assert out.shape == (N, Cout, Ho, Wo), (cfg_i, out.shape)

        ref_bf = _ref_resblock(x, params, stride, jnp.bfloat16)   # matches kernel math
        ref_f32 = _ref_resblock(x, params, stride, jnp.float32)   # exact module math
        err_bf = float(jnp.max(jnp.abs(out - ref_bf)))
        err_f32 = float(jnp.max(jnp.abs(out - ref_f32)))
        # bf16 intermediates (raw conv outs / activations) add ~1e-2 on top of the
        # bf16-operand reference; f32 reference tolerance unchanged.
        assert jnp.allclose(out, ref_bf, atol=3e-2, rtol=3e-2), (cfg_i, err_bf)
        assert jnp.allclose(out, ref_f32, atol=1e-1, rtol=1e-1), (cfg_i, err_f32)

    print("KERNEL_OK")
</pallas_src>

<mosaic_0001>
module attributes {stable_mosaic.version = 11 : i64} {
  func.func @_conv3x3_pass1_kernel(%arg0: i32, %arg1: memref<1x90x4xbf16, #tpu.memory_space<vmem>>, %arg2: memref<36x128xbf16, #tpu.memory_space<vmem>>, %arg3: memref<1x36x128xbf16, #tpu.memory_space<vmem>>, %arg4: memref<1x1x128xf32, #tpu.memory_space<vmem>>, %arg5: memref<1x1x128xf32, #tpu.memory_space<vmem>>) attributes {dimension_semantics = [#tpu.dimension_semantics<parallel>], iteration_bounds = array<i64: 16>, scalar_prefetch = 0 : i64, scratch_operands = 0 : i64, tpu.core_type = #tpu.core_type<tc>, window_params = [{transform_indices = @transform_0, window_bounds = array<i64: 1, 90, 4>}, {pipeline_mode = #tpu.pipeline_mode<synchronous>, transform_indices = @transform_1, window_bounds = array<i64: 36, 128>}, {transform_indices = @transform_2, window_bounds = array<i64: 1, 36, 128>}, {transform_indices = @transform_3, window_bounds = array<i64: 1, 1, 128>}, {transform_indices = @transform_4, window_bounds = array<i64: 1, 1, 128>}]} {
    %cst = arith.constant 0.000000e+00 : f32
    %0 = vector.broadcast %cst : f32 to vector<36x128xf32>
    %c0 = arith.constant 0 : index
    %c0_0 = arith.constant 0 : index
    %c0_1 = arith.constant 0 : index
    %1 = vector.load %arg1[%c0, %c0_0, %c0_1] : memref<1x90x4xbf16, #tpu.memory_space<vmem>>, vector<1x36x4xbf16>
    %2 = vector.shape_cast %1 : vector<1x36x4xbf16> to vector<36x4xbf16>
    %c0_2 = arith.constant 0 : index
    %c0_3 = arith.constant 0 : index
    %3 = vector.load %arg2[%c0_2, %c0_3] : memref<36x128xbf16, #tpu.memory_space<vmem>>, vector<4x128xbf16>
    %cst_4 = arith.constant dense<0.000000e+00> : vector<36x128xf32>
    %4 = tpu.matmul %2, %3, %cst_4 {dimension_numbers = #tpu.dot_dimension_numbers<[1], [0], [0], [1], [0, 0, 1, 1], [], []>} : vector<36x4xbf16>, vector<4x128xbf16>, vector<36x128xf32> -> vector<36x128xf32>
    %5 = arith.addf %0, %4 : vector<36x128xf32>
    %c0_5 = arith.constant 0 : index
    %c1 = arith.constant 1 : index
    %c0_6 = arith.constant 0 : index
    %6 = vector.load %arg1[%c0_5, %c1, %c0_6] : memref<1x90x4xbf16, #tpu.memory_space<vmem>>, vector<1x36x4xbf16>
    %7 = vector.shape_cast %6 : vector<1x36x4xbf16> to vector<36x4xbf16>
    %c4 = arith.constant 4 : index
    %c0_7 = arith.constant 0 : index
    %8 = vector.load %arg2[%c4, %c0_7] : memref<36x128xbf16, #tpu.memory_space<vmem>>, vector<4x128xbf16>
    %cst_8 = arith.constant dense<0.000000e+00> : vector<36x128xf32>
    %9 = tpu.matmul %7, %8, %cst_8 {dimension_numbers = #tpu.dot_dimension_numbers<[1], [0], [0], [1], [0, 0, 1, 1], [], []>} : vector<36x4xbf16>, vector<4x128xbf16>, vector<36x128xf32> -> vector<36x128xf32>
    %10 = arith.addf %5, %9 : vector<36x128xf32>
    %c0_9 = arith.constant 0 : index
    %c2 = arith.constant 2 : index
    %c0_10 = arith.constant 0 : index
    %11 = vector.load %arg1[%c0_9, %c2, %c0_10] : memref<1x90x4xbf16, #tpu.memory_space<vmem>>, vector<1x36x4xbf16>
    %12 = vector.shape_cast %11 : vector<1x36x4xbf16> to vector<36x4xbf16>
    %c8 = arith.constant 8 : index
    %c0_11 = arith.constant 0 : index
    %13 = vector.load %arg2[%c8, %c0_11] : memref<36x128xbf16, #tpu.memory_space<vmem>>, vector<4x128xbf16>
    %cst_12 = arith.constant dense<0.000000e+00> : vector<36x128xf32>
    %14 = tpu.matmul %12, %13, %cst_12 {dimension_numbers = #tpu.dot_dimension_numbers<[1], [0], [0], [1], [0, 0, 1, 1], [], []>} : vector<36x4xbf16>, vector<4x128xbf16>, vector<36x128xf32> -> vector<36x128xf32>
    %15 = arith.addf %10, %14 : vector<36x128xf32>
    %c0_13 = arith.constant 0 : index
    %c18 = arith.constant 18 : index
    %c0_14 = arith.constant 0 : index
    %16 = vector.load %arg1[%c0_13, %c18, %c0_14] : memref<1x90x4xbf16, #tpu.memory_space<vmem>>, vector<1x36x4xbf16>
    %17 = vector.shape_cast %16 : vector<1x36x4xbf16> to vector<36x4xbf16>
    %c12 = arith.constant 12 : index
    %c0_15 = arith.constant 0 : index
    %18 = vector.load %arg2[%c12, %c0_15] : memref<36x128xbf16, #tpu.memory_space<vmem>>, vector<4x128xbf16>
    %cst_16 = arith.constant dense<0.000000e+00> : vector<36x128xf32>
    %19 = tpu.matmul %17, %18, %cst_16 {dimension_numbers = #tpu.dot_dimension_numbers<[1], [0], [0], [1], [0, 0, 1, 1], [], []>} : vector<36x4xbf16>, vector<4x128xbf16>, vector<36x128xf32> -> vector<36x128xf32>
    %20 = arith.addf %15, %19 : vector<36x128xf32>
    %c0_17 = arith.constant 0 : index
    %c19 = arith.constant 19 : index
    %c0_18 = arith.constant 0 : index
    %21 = vector.load %arg1[%c0_17, %c19, %c0_18] : memref<1x90x4xbf16, #tpu.memory_space<vmem>>, vector<1x36x4xbf16>
    %22 = vector.shape_cast %21 : vector<1x36x4xbf16> to vector<36x4xbf16>
    %c16 = arith.constant 16 : index
    %c0_19 = arith.constant 0 : index
    %23 = vector.load %arg2[%c16, %c0_19] : memref<36x128xbf16, #tpu.memory_space<vmem>>, vector<4x128xbf16>
    %cst_20 = arith.constant dense<0.000000e+00> : vector<36x128xf32>
    %24 = tpu.matmul %22, %23, %cst_20 {dimension_numbers = #tpu.dot_dimension_numbers<[1], [0], [0], [1], [0, 0, 1, 1], [], []>} : vector<36x4xbf16>, vector<4x128xbf16>, vector<36x128xf32> -> vector<36x128xf32>
    %25 = arith.addf %20, %24 : vector<36x128xf32>
    %c0_21 = arith.constant 0 : index
    %c20 = arith.constant 20 : index
    %c0_22 = arith.constant 0 : index
    %26 = vector.load %arg1[%c0_21, %c20, %c0_22] : memref<1x90x4xbf16, #tpu.memory_space<vmem>>, vector<1x36x4xbf16>
    %27 = vector.shape_cast %26 : vector<1x36x4xbf16> to vector<36x4xbf16>
    %c20_23 = arith.constant 20 : index
    %c0_24 = arith.constant 0 : index
    %28 = vector.load %arg2[%c20_23, %c0_24] : memref<36x128xbf16, #tpu.memory_space<vmem>>, vector<4x128xbf16>
    %cst_25 = arith.constant dense<0.000000e+00> : vector<36x128xf32>
    %29 = tpu.matmul %27, %28, %cst_25 {dimension_numbers = #tpu.dot_dimension_numbers<[1], [0], [0], [1], [0, 0, 1, 1], [], []>} : vector<36x4xbf16>, vector<4x128xbf16>, vector<36x128xf32> -> vector<36x128xf32>
    %30 = arith.addf %25, %29 : vector<36x128xf32>
    %c0_26 = arith.constant 0 : index
    %c36 = arith.constant 36 : index
    %c0_27 = arith.constant 0 : index
    %31 = vector.load %arg1[%c0_26, %c36, %c0_27] : memref<1x90x4xbf16, #tpu.memory_space<vmem>>, vector<1x36x4xbf16>
    %32 = vector.shape_cast %31 : vector<1x36x4xbf16> to vector<36x4xbf16>
    %c24 = arith.constant 24 : index
    %c0_28 = arith.constant 0 : index
    %33 = vector.load %arg2[%c24, %c0_28] : memref<36x128xbf16, #tpu.memory_space<vmem>>, vector<4x128xbf16>
    %cst_29 = arith.constant dense<0.000000e+00> : vector<36x128xf32>
    %34 = tpu.matmul %32, %33, %cst_29 {dimension_numbers = #tpu.dot_dimension_numbers<[1], [0], [0], [1], [0, 0, 1, 1], [], []>} : vector<36x4xbf16>, vector<4x128xbf16>, vector<36x128xf32> -> vector<36x128xf32>
    %35 = arith.addf %30, %34 : vector<36x128xf32>
    %c0_30 = arith.constant 0 : index
    %c37 = arith.constant 37 : index
    %c0_31 = arith.constant 0 : index
    %36 = vector.load %arg1[%c0_30, %c37, %c0_31] : memref<1x90x4xbf16, #tpu.memory_space<vmem>>, vector<1x36x4xbf16>
    %37 = vector.shape_cast %36 : vector<1x36x4xbf16> to vector<36x4xbf16>
    %c28 = arith.constant 28 : index
    %c0_32 = arith.constant 0 : index
    %38 = vector.load %arg2[%c28, %c0_32] : memref<36x128xbf16, #tpu.memory_space<vmem>>, vector<4x128xbf16>
    %cst_33 = arith.constant dense<0.000000e+00> : vector<36x128xf32>
    %39 = tpu.matmul %37, %38, %cst_33 {dimension_numbers = #tpu.dot_dimension_numbers<[1], [0], [0], [1], [0, 0, 1, 1], [], []>} : vector<36x4xbf16>, vector<4x128xbf16>, vector<36x128xf32> -> vector<36x128xf32>
    %40 = arith.addf %35, %39 : vector<36x128xf32>
    %c0_34 = arith.constant 0 : index
    %c38 = arith.constant 38 : index
    %c0_35 = arith.constant 0 : index
    %41 = vector.load %arg1[%c0_34, %c38, %c0_35] : memref<1x90x4xbf16, #tpu.memory_space<vmem>>, vector<1x36x4xbf16>
    %42 = vector.shape_cast %41 : vector<1x36x4xbf16> to vector<36x4xbf16>
    %c32 = arith.constant 32 : index
    %c0_36 = arith.constant 0 : index
    %43 = vector.load %arg2[%c32, %c0_36] : memref<36x128xbf16, #tpu.memory_space<vmem>>, vector<4x128xbf16>
    %cst_37 = arith.constant dense<0.000000e+00> : vector<36x128xf32>
    %44 = tpu.matmul %42, %43, %cst_37 {dimension_numbers = #tpu.dot_dimension_numbers<[1], [0], [0], [1], [0, 0, 1, 1], [], []>} : vector<36x4xbf16>, vector<4x128xbf16>, vector<36x128xf32> -> vector<36x128xf32>
    %45 = arith.addf %40, %44 : vector<36x128xf32>
    %46 = arith.truncf %45 : vector<36x128xf32> to vector<36x128xbf16>
    %c0_38 = arith.constant 0 : index
    %c0_39 = arith.constant 0 : index
    %c0_40 = arith.constant 0 : index
    %47 = vector.load %arg3[%c0_38, %c0_39, %c0_40] : memref<1x36x128xbf16, #tpu.memory_space<vmem>>, vector<1x36x128xbf16>
    %48 = vector.shape_cast %47 : vector<1x36x128xbf16> to vector<36x128xbf16>
    %49 = vector.shape_cast %46 : vector<36x128xbf16> to vector<1x36x128xbf16>
    tpu.vector_store %arg3[%c0_38, %c0_39, %c0_40], %49 {strides = array<i32>} : memref<1x36x128xbf16, #tpu.memory_space<vmem>>, vector<1x36x128xbf16>,
    %50 = tpu.iota {dimensions = array<i32: 0>} : vector<36x128xi32>
    %c18_i32 = arith.constant 18 : i32
    %c0_i32 = arith.constant 0 : i32
    %51 = arith.cmpi eq, %c18_i32, %c0_i32 : i32
    %c1_i32 = arith.constant 1 : i32
    %52 = arith.select %51, %c1_i32, %c18_i32 : i32
    %53 = vector.broadcast %52 : i32 to vector<36x128xi32>
    %54 = arith.remsi %50, %53 : vector<36x128xi32>
    %c0_i32_41 = arith.constant 0 : i32
    %55 = vector.broadcast %c0_i32_41 : i32 to vector<36x128xi32>
    %56 = arith.cmpi ne, %54, %55 : vector<36x128xi32>
    %c0_i32_42 = arith.constant 0 : i32
    %57 = vector.broadcast %c0_i32_42 : i32 to vector<36x128xi32>
    %58 = arith.cmpi slt, %54, %57 : vector<36x128xi32>
    %c0_i32_43 = arith.constant 0 : i32
    %59 = arith.cmpi slt, %52, %c0_i32_43 : i32
    %60 = vector.broadcast %59 : i1 to vector<36x128xi1>
    %61 = vector.broadcast %60 : vector<36x128xi1> to vector<36x128xi1>
    %62 = arith.xori %58, %61 : vector<36x128xi1>
    %63 = arith.andi %62, %56 : vector<36x128xi1>
    %64 = vector.broadcast %52 : i32 to vector<36x128xi32>
    %65 = arith.addi %54, %64 : vector<36x128xi32>
    %66 = arith.select %63, %65, %54 : vector<36x128xi1>, vector<36x128xi32>
    %c16_i32 = arith.constant 16 : i32
    %67 = vector.broadcast %c16_i32 : i32 to vector<36x128xi32>
    %68 = arith.cmpi slt, %66, %67 : vector<36x128xi32>
    %cst_44 = arith.constant 0.000000e+00 : f32
    %69 = vector.broadcast %cst_44 : f32 to vector<36x128xf32>
    %70 = arith.select %68, %45, %69 : vector<36x128xi1>, vector<36x128xf32>
    %cst_45 = arith.constant dense<0.000000e+00> : vector<128xf32>
    %71 = vector.multi_reduction <add>, %70, %cst_45 [0] : vector<36x128xf32> to vector<128xf32>
    %72 = vector.shape_cast %71 : vector<128xf32> to vector<1x128xf32>
    %c0_46 = arith.constant 0 : index
    %c0_47 = arith.constant 0 : index
    %c0_48 = arith.constant 0 : index
    %73 = vector.load %arg4[%c0_46, %c0_47, %c0_48] : memref<1x1x128xf32, #tpu.memory_space<vmem>>, vector<1x1x128xf32>
    %74 = vector.shape_cast %73 : vector<1x1x128xf32> to vector<1x128xf32>
    %75 = vector.shape_cast %72 : vector<1x128xf32> to vector<1x1x128xf32>
    tpu.vector_store %arg4[%c0_46, %c0_47, %c0_48], %75 {strides = array<i32>} : memref<1x1x128xf32, #tpu.memory_space<vmem>>, vector<1x1x128xf32>,
    %76 = arith.mulf %70, %70 : vector<36x128xf32>
    %cst_49 = arith.constant dense<0.000000e+00> : vector<128xf32>
    %77 = vector.multi_reduction <add>, %76, %cst_49 [0] : vector<36x128xf32> to vector<128xf32>
    %78 = vector.shape_cast %77 : vector<128xf32> to vector<1x128xf32>
    %c0_50 = arith.constant 0 : index
    %c0_51 = arith.constant 0 : index
    %c0_52 = arith.constant 0 : index
    %79 = vector.load %arg5[%c0_50, %c0_51, %c0_52] : memref<1x1x128xf32, #tpu.memory_space<vmem>>, vector<1x1x128xf32>
    %80 = vector.shape_cast %79 : vector<1x1x128xf32> to vector<1x128xf32>
    %81 = vector.shape_cast %78 : vector<1x128xf32> to vector<1x1x128xf32>
    tpu.vector_store %arg5[%c0_50, %c0_51, %c0_52], %81 {strides = array<i32>} : memref<1x1x128xf32, #tpu.memory_space<vmem>>, vector<1x1x128xf32>,
    return
  }
  func.func @transform_0(%arg0: i32) -> (i32, i32, i32) {
    %c0_i32 = arith.constant 0 : i32
    %c0_i32_0 = arith.constant 0 : i32
    %c0_i32_1 = arith.constant 0 : i32
    return %arg0, %c0_i32, %c0_i32_0 : i32, i32, i32
  }
  func.func @transform_1(%arg0: i32) -> (i32, i32) {
    %c0_i32 = arith.constant 0 : i32
    %c0_i32_0 = arith.constant 0 : i32
    %c0_i32_1 = arith.constant 0 : i32
    return %c0_i32, %c0_i32_0 : i32, i32
  }
  func.func @transform_2(%arg0: i32) -> (i32, i32, i32) {
    %c0_i32 = arith.constant 0 : i32
    %c0_i32_0 = arith.constant 0 : i32
    %c0_i32_1 = arith.constant 0 : i32
    return %arg0, %c0_i32, %c0_i32_0 : i32, i32, i32
  }
  func.func @transform_3(%arg0: i32) -> (i32, i32, i32) {
    %c0_i32 = arith.constant 0 : i32
    %c0_i32_0 = arith.constant 0 : i32
    %c0_i32_1 = arith.constant 0 : i32
    return %arg0, %c0_i32, %c0_i32_0 : i32, i32, i32
  }
  func.func @transform_4(%arg0: i32) -> (i32, i32, i32) {
    %c0_i32 = arith.constant 0 : i32
    %c0_i32_0 = arith.constant 0 : i32
    %c0_i32_1 = arith.constant 0 : i32
    return %arg0, %c0_i32, %c0_i32_0 : i32, i32, i32
  }
}

module attributes {stable_mosaic.version = 11 : i64} {
  func.func @kernel(%arg0: i32, %arg1: memref<1x36x128xbf16, #tpu.memory_space<vmem>>, %arg2: memref<1x128xf32, #tpu.memory_space<vmem>>, %arg3: memref<1x128xf32, #tpu.memory_space<vmem>>, %arg4: memref<1x36x128xbf16, #tpu.memory_space<vmem>>) attributes {dimension_semantics = [#tpu.dimension_semantics<parallel>], iteration_bounds = array<i64: 16>, scalar_prefetch = 0 : i64, scratch_operands = 0 : i64, tpu.core_type = #tpu.core_type<tc>, window_params = [{transform_indices = @transform_0, window_bounds = array<i64: 1, 36, 128>}, {pipeline_mode = #tpu.pipeline_mode<synchronous>, transform_indices = @transform_1, window_bounds = array<i64: 1, 128>}, {pipeline_mode = #tpu.pipeline_mode<synchronous>, transform_indices = @transform_2, window_bounds = array<i64: 1, 128>}, {transform_indices = @transform_3, window_bounds = array<i64: 1, 36, 128>}]} {
    %c0 = arith.constant 0 : index
    %c0_0 = arith.constant 0 : index
    %c0_1 = arith.constant 0 : index
    %0 = vector.load %arg1[%c0, %c0_0, %c0_1] : memref<1x36x128xbf16, #tpu.memory_space<vmem>>, vector<1x36x128xbf16>
    %1 = vector.shape_cast %0 : vector<1x36x128xbf16> to vector<36x128xbf16>
    %2 = arith.extf %1 : vector<36x128xbf16> to vector<36x128xf32>
    %c0_2 = arith.constant 0 : index
    %c0_3 = arith.constant 0 : index
    %3 = vector.load %arg2[%c0_2, %c0_3] : memref<1x128xf32, #tpu.memory_space<vmem>>, vector<1x128xf32>
    %4 = vector.broadcast %3 : vector<1x128xf32> to vector<36x128xf32>
    %5 = arith.mulf %2, %4 : vector<36x128xf32>
    %c0_4 = arith.constant 0 : index
    %c0_5 = arith.constant 0 : index
    %6 = vector.load %arg3[%c0_4, %c0_5] : memref<1x128xf32, #tpu.memory_space<vmem>>, vector<1x128xf32>
    %7 = vector.broadcast %6 : vector<1x128xf32> to vector<36x128xf32>
    %8 = arith.addf %5, %7 : vector<36x128xf32>
    %cst = arith.constant 0.000000e+00 : f32
    %9 = vector.broadcast %cst : f32 to vector<36x128xf32>
    %10 = arith.maximumf %8, %9 : vector<36x128xf32>
    %11 = arith.truncf %10 : vector<36x128xf32> to vector<36x128xbf16>
    %c0_6 = arith.constant 0 : index
    %c0_7 = arith.constant 0 : index
    %c0_8 = arith.constant 0 : index
    %12 = vector.load %arg4[%c0_6, %c0_7, %c0_8] : memref<1x36x128xbf16, #tpu.memory_space<vmem>>, vector<1x36x128xbf16>
    %13 = vector.shape_cast %12 : vector<1x36x128xbf16> to vector<36x128xbf16>
    %14 = vector.shape_cast %11 : vector<36x128xbf16> to vector<1x36x128xbf16>
    tpu.vector_store %arg4[%c0_6, %c0_7, %c0_8], %14 {strides = array<i32>} : memref<1x36x128xbf16, #tpu.memory_space<vmem>>, vector<1x36x128xbf16>,
    return
  }
  func.func @transform_0(%arg0: i32) -> (i32, i32, i32) {
    %c0_i32 = arith.constant 0 : i32
    %c0_i32_0 = arith.constant 0 : i32
    %c0_i32_1 = arith.constant 0 : i32
    return %arg0, %c0_i32, %c0_i32_0 : i32, i32, i32
  }
  func.func @transform_1(%arg0: i32) -> (i32, i32) {
    %c0_i32 = arith.constant 0 : i32
    %c0_i32_0 = arith.constant 0 : i32
    %c0_i32_1 = arith.constant 0 : i32
    return %c0_i32, %c0_i32_0 : i32, i32
  }
  func.func @transform_2(%arg0: i32) -> (i32, i32) {
    %c0_i32 = arith.constant 0 : i32
    %c0_i32_0 = arith.constant 0 : i32
    %c0_i32_1 = arith.constant 0 : i32
    return %c0_i32, %c0_i32_0 : i32, i32
  }
  func.func @transform_3(%arg0: i32) -> (i32, i32, i32) {
    %c0_i32 = arith.constant 0 : i32
    %c0_i32_0 = arith.constant 0 : i32
    %c0_i32_1 = arith.constant 0 : i32
    return %arg0, %c0_i32, %c0_i32_0 : i32, i32, i32
  }
}

module attributes {stable_mosaic.version = 11 : i64} {
  func.func @_conv3x3_pass1_kernel(%arg0: i32, %arg1: memref<1x90x8xbf16, #tpu.memory_space<vmem>>, %arg2: memref<72x128xbf16, #tpu.memory_space<vmem>>, %arg3: memref<1x36x128xbf16, #tpu.memory_space<vmem>>, %arg4: memref<1x1x128xf32, #tpu.memory_space<vmem>>, %arg5: memref<1x1x128xf32, #tpu.memory_space<vmem>>) attributes {dimension_semantics = [#tpu.dimension_semantics<parallel>], iteration_bounds = array<i64: 16>, scalar_prefetch = 0 : i64, scratch_operands = 0 : i64, tpu.core_type = #tpu.core_type<tc>, window_params = [{transform_indices = @transform_0, window_bounds = array<i64: 1, 90, 8>}, {pipeline_mode = #tpu.pipeline_mode<synchronous>, transform_indices = @transform_1, window_bounds = array<i64: 72, 128>}, {transform_indices = @transform_2, window_bounds = array<i64: 1, 36, 128>}, {transform_indices = @transform_3, window_bounds = array<i64: 1, 1, 128>}, {transform_indices = @transform_4, window_bounds = array<i64: 1, 1, 128>}]} {
    %cst = arith.constant 0.000000e+00 : f32
    %0 = vector.broadcast %cst : f32 to vector<36x128xf32>
    %c0 = arith.constant 0 : index
    %c0_0 = arith.constant 0 : index
    %c0_1 = arith.constant 0 : index
    %1 = vector.load %arg1[%c0, %c0_0, %c0_1] : memref<1x90x8xbf16, #tpu.memory_space<vmem>>, vector<1x36x8xbf16>
    %2 = vector.shape_cast %1 : vector<1x36x8xbf16> to vector<36x8xbf16>
    %c0_2 = arith.constant 0 : index
    %c0_3 = arith.constant 0 : index
    %3 = vector.load %arg2[%c0_2, %c0_3] : memref<72x128xbf16, #tpu.memory_space<vmem>>, vector<8x128xbf16>
    %cst_4 = arith.constant dense<0.000000e+00> : vector<36x128xf32>
    %4 = tpu.matmul %2, %3, %cst_4 {dimension_numbers = #tpu.dot_dimension_numbers<[1], [0], [0], [1], [0, 0, 1, 1], [], []>} : vector<36x8xbf16>, vector<8x128xbf16>, vector<36x128xf32> -> vector<36x128xf32>
    %5 = arith.addf %0, %4 : vector<36x128xf32>
    %c0_5 = arith.constant 0 : index
    %c1 = arith.constant 1 : index
    %c0_6 = arith.constant 0 : index
    %6 = vector.load %arg1[%c0_5, %c1, %c0_6] : memref<1x90x8xbf16, #tpu.memory_space<vmem>>, vector<1x36x8xbf16>
    %7 = vector.shape_cast %6 : vector<1x36x8xbf16> to vector<36x8xbf16>
    %c8 = arith.constant 8 : index
    %c0_7 = arith.constant 0 : index
    %8 = vector.load %arg2[%c8, %c0_7] : memref<72x128xbf16, #tpu.memory_space<vmem>>, vector<8x128xbf16>
    %cst_8 = arith.constant dense<0.000000e+00> : vector<36x128xf32>
    %9 = tpu.matmul %7, %8, %cst_8 {dimension_numbers = #tpu.dot_dimension_numbers<[1], [0], [0], [1], [0, 0, 1, 1], [], []>} : vector<36x8xbf16>, vector<8x128xbf16>, vector<36x128xf32> -> vector<36x128xf32>
    %10 = arith.addf %5, %9 : vector<36x128xf32>
    %c0_9 = arith.constant 0 : index
    %c2 = arith.constant 2 : index
    %c0_10 = arith.constant 0 : index
    %11 = vector.load %arg1[%c0_9, %c2, %c0_10] : memref<1x90x8xbf16, #tpu.memory_space<vmem>>, vector<1x36x8xbf16>
    %12 = vector.shape_cast %11 : vector<1x36x8xbf16> to vector<36x8xbf16>
    %c16 = arith.constant 16 : index
    %c0_11 = arith.constant 0 : index
    %13 = vector.load %arg2[%c16, %c0_11] : memref<72x128xbf16, #tpu.memory_space<vmem>>, vector<8x128xbf16>
    %cst_12 = arith.constant dense<0.000000e+00> : vector<36x128xf32>
    %14 = tpu.matmul %12, %13, %cst_12 {dimension_numbers = #tpu.dot_dimension_numbers<[1], [0], [0], [1], [0, 0, 1, 1], [], []>} : vector<36x8xbf16>, vector<8x128xbf16>, vector<36x128xf32> -> vector<36x128xf32>
    %15 = arith.addf %10, %14 : vector<36x128xf32>
    %c0_13 = arith.constant 0 : index
    %c18 = arith.constant 18 : index
    %c0_14 = arith.constant 0 : index
    %16 = vector.load %arg1[%c0_13, %c18, %c0_14] : memref<1x90x8xbf16, #tpu.memory_space<vmem>>, vector<1x36x8xbf16>
    %17 = vector.shape_cast %16 : vector<1x36x8xbf16> to vector<36x8xbf16>
    %c24 = arith.constant 24 : index
    %c0_15 = arith.constant 0 : index
    %18 = vector.load %arg2[%c24, %c0_15] : memref<72x128xbf16, #tpu.memory_space<vmem>>, vector<8x128xbf16>
    %cst_16 = arith.constant dense<0.000000e+00> : vector<36x128xf32>
    %19 = tpu.matmul %17, %18, %cst_16 {dimension_numbers = #tpu.dot_dimension_numbers<[1], [0], [0], [1], [0, 0, 1, 1], [], []>} : vector<36x8xbf16>, vector<8x128xbf16>, vector<36x128xf32> -> vector<36x128xf32>
    %20 = arith.addf %15, %19 : vector<36x128xf32>
    %c0_17 = arith.constant 0 : index
    %c19 = arith.constant 19 : index
    %c0_18 = arith.constant 0 : index
    %21 = vector.load %arg1[%c0_17, %c19, %c0_18] : memref<1x90x8xbf16, #tpu.memory_space<vmem>>, vector<1x36x8xbf16>
    %22 = vector.shape_cast %21 : vector<1x36x8xbf16> to vector<36x8xbf16>
    %c32 = arith.constant 32 : index
    %c0_19 = arith.constant 0 : index
    %23 = vector.load %arg2[%c32, %c0_19] : memref<72x128xbf16, #tpu.memory_space<vmem>>, vector<8x128xbf16>
    %cst_20 = arith.constant dense<0.000000e+00> : vector<36x128xf32>
    %24 = tpu.matmul %22, %23, %cst_20 {dimension_numbers = #tpu.dot_dimension_numbers<[1], [0], [0], [1], [0, 0, 1, 1], [], []>} : vector<36x8xbf16>, vector<8x128xbf16>, vector<36x128xf32> -> vector<36x128xf32>
    %25 = arith.addf %20, %24 : vector<36x128xf32>
    %c0_21 = arith.constant 0 : index
    %c20 = arith.constant 20 : index
    %c0_22 = arith.constant 0 : index
    %26 = vector.load %arg1[%c0_21, %c20, %c0_22] : memref<1x90x8xbf16, #tpu.memory_space<vmem>>, vector<1x36x8xbf16>
    %27 = vector.shape_cast %26 : vector<1x36x8xbf16> to vector<36x8xbf16>
    %c40 = arith.constant 40 : index
    %c0_23 = arith.constant 0 : index
    %28 = vector.load %arg2[%c40, %c0_23] : memref<72x128xbf16, #tpu.memory_space<vmem>>, vector<8x128xbf16>
    %cst_24 = arith.constant dense<0.000000e+00> : vector<36x128xf32>
    %29 = tpu.matmul %27, %28, %cst_24 {dimension_numbers = #tpu.dot_dimension_numbers<[1], [0], [0], [1], [0, 0, 1, 1], [], []>} : vector<36x8xbf16>, vector<8x128xbf16>, vector<36x128xf32> -> vector<36x128xf32>
    %30 = arith.addf %25, %29 : vector<36x128xf32>
    %c0_25 = arith.constant 0 : index
    %c36 = arith.constant 36 : index
    %c0_26 = arith.constant 0 : index
    %31 = vector.load %arg1[%c0_25, %c36, %c0_26] : memref<1x90x8xbf16, #tpu.memory_space<vmem>>, vector<1x36x8xbf16>
    %32 = vector.shape_cast %31 : vector<1x36x8xbf16> to vector<36x8xbf16>
    %c48 = arith.constant 48 : index
    %c0_27 = arith.constant 0 : index
    %33 = vector.load %arg2[%c48, %c0_27] : memref<72x128xbf16, #tpu.memory_space<vmem>>, vector<8x128xbf16>
    %cst_28 = arith.constant dense<0.000000e+00> : vector<36x128xf32>
    %34 = tpu.matmul %32, %33, %cst_28 {dimension_numbers = #tpu.dot_dimension_numbers<[1], [0], [0], [1], [0, 0, 1, 1], [], []>} : vector<36x8xbf16>, vector<8x128xbf16>, vector<36x128xf32> -> vector<36x128xf32>
    %35 = arith.addf %30, %34 : vector<36x128xf32>
    %c0_29 = arith.constant 0 : index
    %c37 = arith.constant 37 : index
    %c0_30 = arith.constant 0 : index
    %36 = vector.load %arg1[%c0_29, %c37, %c0_30] : memref<1x90x8xbf16, #tpu.memory_space<vmem>>, vector<1x36x8xbf16>
    %37 = vector.shape_cast %36 : vector<1x36x8xbf16> to vector<36x8xbf16>
    %c56 = arith.constant 56 : index
    %c0_31 = arith.constant 0 : index
    %38 = vector.load %arg2[%c56, %c0_31] : memref<72x128xbf16, #tpu.memory_space<vmem>>, vector<8x128xbf16>
    %cst_32 = arith.constant dense<0.000000e+00> : vector<36x128xf32>
    %39 = tpu.matmul %37, %38, %cst_32 {dimension_numbers = #tpu.dot_dimension_numbers<[1], [0], [0], [1], [0, 0, 1, 1], [], []>} : vector<36x8xbf16>, vector<8x128xbf16>, vector<36x128xf32> -> vector<36x128xf32>
    %40 = arith.addf %35, %39 : vector<36x128xf32>
    %c0_33 = arith.constant 0 : index
    %c38 = arith.constant 38 : index
    %c0_34 = arith.constant 0 : index
    %41 = vector.load %arg1[%c0_33, %c38, %c0_34] : memref<1x90x8xbf16, #tpu.memory_space<vmem>>, vector<1x36x8xbf16>
    %42 = vector.shape_cast %41 : vector<1x36x8xbf16> to vector<36x8xbf16>
    %c64 = arith.constant 64 : index
    %c0_35 = arith.constant 0 : index
    %43 = vector.load %arg2[%c64, %c0_35] : memref<72x128xbf16, #tpu.memory_space<vmem>>, vector<8x128xbf16>
    %cst_36 = arith.constant dense<0.000000e+00> : vector<36x128xf32>
    %44 = tpu.matmul %42, %43, %cst_36 {dimension_numbers = #tpu.dot_dimension_numbers<[1], [0], [0], [1], [0, 0, 1, 1], [], []>} : vector<36x8xbf16>, vector<8x128xbf16>, vector<36x128xf32> -> vector<36x128xf32>
    %45 = arith.addf %40, %44 : vector<36x128xf32>
    %46 = arith.truncf %45 : vector<36x128xf32> to vector<36x128xbf16>
    %c0_37 = arith.constant 0 : index
    %c0_38 = arith.constant 0 : index
    %c0_39 = arith.constant 0 : index
    %47 = vector.load %arg3[%c0_37, %c0_38, %c0_39] : memref<1x36x128xbf16, #tpu.memory_space<vmem>>, vector<1x36x128xbf16>
    %48 = vector.shape_cast %47 : vector<1x36x128xbf16> to vector<36x128xbf16>
    %49 = vector.shape_cast %46 : vector<36x128xbf16> to vector<1x36x128xbf16>
    tpu.vector_store %arg3[%c0_37, %c0_38, %c0_39], %49 {strides = array<i32>} : memref<1x36x128xbf16, #tpu.memory_space<vmem>>, vector<1x36x128xbf16>,
    %50 = tpu.iota {dimensions = array<i32: 0>} : vector<36x128xi32>
    %c18_i32 = arith.constant 18 : i32
    %c0_i32 = arith.constant 0 : i32
    %51 = arith.cmpi eq, %c18_i32, %c0_i32 : i32
    %c1_i32 = arith.constant 1 : i32
    %52 = arith.select %51, %c1_i32, %c18_i32 : i32
    %53 = vector.broadcast %52 : i32 to vector<36x128xi32>
    %54 = arith.remsi %50, %53 : vector<36x128xi32>
    %c0_i32_40 = arith.constant 0 : i32
    %55 = vector.broadcast %c0_i32_40 : i32 to vector<36x128xi32>
    %56 = arith.cmpi ne, %54, %55 : vector<36x128xi32>
    %c0_i32_41 = arith.constant 0 : i32
    %57 = vector.broadcast %c0_i32_41 : i32 to vector<36x128xi32>
    %58 = arith.cmpi slt, %54, %57 : vector<36x128xi32>
    %c0_i32_42 = arith.constant 0 : i32
    %59 = arith.cmpi slt, %52, %c0_i32_42 : i32
    %60 = vector.broadcast %59 : i1 to vector<36x128xi1>
    %61 = vector.broadcast %60 : vector<36x128xi1> to vector<36x128xi1>
    %62 = arith.xori %58, %61 : vector<36x128xi1>
    %63 = arith.andi %62, %56 : vector<36x128xi1>
    %64 = vector.broadcast %52 : i32 to vector<36x128xi32>
    %65 = arith.addi %54, %64 : vector<36x128xi32>
    %66 = arith.select %63, %65, %54 : vector<36x128xi1>, vector<36x128xi32>
    %c16_i32 = arith.constant 16 : i32
    %67 = vector.broadcast %c16_i32 : i32 to vector<36x128xi32>
    %68 = arith.cmpi slt, %66, %67 : vector<36x128xi32>
    %cst_43 = arith.constant 0.000000e+00 : f32
    %69 = vector.broadcast %cst_43 : f32 to vector<36x128xf32>
    %70 = arith.select %68, %45, %69 : vector<36x128xi1>, vector<36x128xf32>
    %cst_44 = arith.constant dense<0.000000e+00> : vector<128xf32>
    %71 = vector.multi_reduction <add>, %70, %cst_44 [0] : vector<36x128xf32> to vector<128xf32>
    %72 = vector.shape_cast %71 : vector<128xf32> to vector<1x128xf32>
    %c0_45 = arith.constant 0 : index
    %c0_46 = arith.constant 0 : index
    %c0_47 = arith.constant 0 : index
    %73 = vector.load %arg4[%c0_45, %c0_46, %c0_47] : memref<1x1x128xf32, #tpu.memory_space<vmem>>, vector<1x1x128xf32>
    %74 = vector.shape_cast %73 : vector<1x1x128xf32> to vector<1x128xf32>
    %75 = vector.shape_cast %72 : vector<1x128xf32> to vector<1x1x128xf32>
    tpu.vector_store %arg4[%c0_45, %c0_46, %c0_47], %75 {strides = array<i32>} : memref<1x1x128xf32, #tpu.memory_space<vmem>>, vector<1x1x128xf32>,
    %76 = arith.mulf %70, %70 : vector<36x128xf32>
    %cst_48 = arith.constant dense<0.000000e+00> : vector<128xf32>
    %77 = vector.multi_reduction <add>, %76, %cst_48 [0] : vector<36x128xf32> to vector<128xf32>
    %78 = vector.shape_cast %77 : vector<128xf32> to vector<1x128xf32>
    %c0_49 = arith.constant 0 : index
    %c0_50 = arith.constant 0 : index
    %c0_51 = arith.constant 0 : index
    %79 = vector.load %arg5[%c0_49, %c0_50, %c0_51] : memref<1x1x128xf32, #tpu.memory_space<vmem>>, vector<1x1x128xf32>
    %80 = vector.shape_cast %79 : vector<1x1x128xf32> to vector<1x128xf32>
    %81 = vector.shape_cast %78 : vector<1x128xf32> to vector<1x1x128xf32>
    tpu.vector_store %arg5[%c0_49, %c0_50, %c0_51], %81 {strides = array<i32>} : memref<1x1x128xf32, #tpu.memory_space<vmem>>, vector<1x1x128xf32>,
    return
  }
  func.func @transform_0(%arg0: i32) -> (i32, i32, i32) {
    %c0_i32 = arith.constant 0 : i32
    %c0_i32_0 = arith.constant 0 : i32
    %c0_i32_1 = arith.constant 0 : i32
    return %arg0, %c0_i32, %c0_i32_0 : i32, i32, i32
  }
  func.func @transform_1(%arg0: i32) -> (i32, i32) {
    %c0_i32 = arith.constant 0 : i32
    %c0_i32_0 = arith.constant 0 : i32
    %c0_i32_1 = arith.constant 0 : i32
    return %c0_i32, %c0_i32_0 : i32, i32
  }
  func.func @transform_2(%arg0: i32) -> (i32, i32, i32) {
    %c0_i32 = arith.constant 0 : i32
    %c0_i32_0 = arith.constant 0 : i32
    %c0_i32_1 = arith.constant 0 : i32
    return %arg0, %c0_i32, %c0_i32_0 : i32, i32, i32
  }
  func.func @transform_3(%arg0: i32) -> (i32, i32, i32) {
    %c0_i32 = arith.constant 0 : i32
    %c0_i32_0 = arith.constant 0 : i32
    %c0_i32_1 = arith.constant 0 : i32
    return %arg0, %c0_i32, %c0_i32_0 : i32, i32, i32
  }
  func.func @transform_4(%arg0: i32) -> (i32, i32, i32) {
    %c0_i32 = arith.constant 0 : i32
    %c0_i32_0 = arith.constant 0 : i32
    %c0_i32_1 = arith.constant 0 : i32
    return %arg0, %c0_i32, %c0_i32_0 : i32, i32, i32
  }
}

module attributes {stable_mosaic.version = 11 : i64} {
  func.func @_matmul_pass1_kernel(%arg0: i32, %arg1: memref<1x36x4xbf16, #tpu.memory_space<vmem>>, %arg2: memref<4x128xbf16, #tpu.memory_space<vmem>>, %arg3: memref<1x36x128xbf16, #tpu.memory_space<vmem>>, %arg4: memref<1x1x128xf32, #tpu.memory_space<vmem>>, %arg5: memref<1x1x128xf32, #tpu.memory_space<vmem>>) attributes {dimension_semantics = [#tpu.dimension_semantics<parallel>], iteration_bounds = array<i64: 16>, scalar_prefetch = 0 : i64, scratch_operands = 0 : i64, tpu.core_type = #tpu.core_type<tc>, window_params = [{transform_indices = @transform_0, window_bounds = array<i64: 1, 36, 4>}, {pipeline_mode = #tpu.pipeline_mode<synchronous>, transform_indices = @transform_1, window_bounds = array<i64: 4, 128>}, {transform_indices = @transform_2, window_bounds = array<i64: 1, 36, 128>}, {transform_indices = @transform_3, window_bounds = array<i64: 1, 1, 128>}, {transform_indices = @transform_4, window_bounds = array<i64: 1, 1, 128>}]} {
    %c0 = arith.constant 0 : index
    %c0_0 = arith.constant 0 : index
    %c0_1 = arith.constant 0 : index
    %0 = vector.load %arg1[%c0, %c0_0, %c0_1] : memref<1x36x4xbf16, #tpu.memory_space<vmem>>, vector<1x36x4xbf16>
    %1 = vector.shape_cast %0 : vector<1x36x4xbf16> to vector<36x4xbf16>
    %c0_2 = arith.constant 0 : index
    %c0_3 = arith.constant 0 : index
    %2 = vector.load %arg2[%c0_2, %c0_3] : memref<4x128xbf16, #tpu.memory_space<vmem>>, vector<4x128xbf16>
    %cst = arith.constant dense<0.000000e+00> : vector<36x128xf32>
    %3 = tpu.matmul %1, %2, %cst {dimension_numbers = #tpu.dot_dimension_numbers<[1], [0], [0], [1], [0, 0, 1, 1], [], []>} : vector<36x4xbf16>, vector<4x128xbf16>, vector<36x128xf32> -> vector<36x128xf32>
    %4 = arith.truncf %3 : vector<36x128xf32> to vector<36x128xbf16>
    %c0_4 = arith.constant 0 : index
    %c0_5 = arith.constant 0 : index
    %c0_6 = arith.constant 0 : index
    %5 = vector.load %arg3[%c0_4, %c0_5, %c0_6] : memref<1x36x128xbf16, #tpu.memory_space<vmem>>, vector<1x36x128xbf16>
    %6 = vector.shape_cast %5 : vector<1x36x128xbf16> to vector<36x128xbf16>
    %7 = vector.shape_cast %4 : vector<36x128xbf16> to vector<1x36x128xbf16>
    tpu.vector_store %arg3[%c0_4, %c0_5, %c0_6], %7 {strides = array<i32>} : memref<1x36x128xbf16, #tpu.memory_space<vmem>>, vector<1x36x128xbf16>,
    %cst_7 = arith.constant dense<0.000000e+00> : vector<128xf32>
    %8 = vector.multi_reduction <add>, %3, %cst_7 [0] : vector<36x128xf32> to vector<128xf32>
    %9 = vector.shape_cast %8 : vector<128xf32> to vector<1x128xf32>
    %c0_8 = arith.constant 0 : index
    %c0_9 = arith.constant 0 : index
    %c0_10 = arith.constant 0 : index
    %10 = vector.load %arg4[%c0_8, %c0_9, %c0_10] : memref<1x1x128xf32, #tpu.memory_space<vmem>>, vector<1x1x128xf32>
    %11 = vector.shape_cast %10 : vector<1x1x128xf32> to vector<1x128xf32>
    %12 = vector.shape_cast %9 : vector<1x128xf32> to vector<1x1x128xf32>
    tpu.vector_store %arg4[%c0_8, %c0_9, %c0_10], %12 {strides = array<i32>} : memref<1x1x128xf32, #tpu.memory_space<vmem>>, vector<1x1x128xf32>,
    %13 = arith.mulf %3, %3 : vector<36x128xf32>
    %cst_11 = arith.constant dense<0.000000e+00> : vector<128xf32>
    %14 = vector.multi_reduction <add>, %13, %cst_11 [0] : vector<36x128xf32> to vector<128xf32>
    %15 = vector.shape_cast %14 : vector<128xf32> to vector<1x128xf32>
    %c0_12 = arith.constant 0 : index
    %c0_13 = arith.constant 0 : index
    %c0_14 = arith.constant 0 : index
    %16 = vector.load %arg5[%c0_12, %c0_13, %c0_14] : memref<1x1x128xf32, #tpu.memory_space<vmem>>, vector<1x1x128xf32>
    %17 = vector.shape_cast %16 : vector<1x1x128xf32> to vector<1x128xf32>
    %18 = vector.shape_cast %15 : vector<1x128xf32> to vector<1x1x128xf32>
    tpu.vector_store %arg5[%c0_12, %c0_13, %c0_14], %18 {strides = array<i32>} : memref<1x1x128xf32, #tpu.memory_space<vmem>>, vector<1x1x128xf32>,
    return
  }
  func.func @transform_0(%arg0: i32) -> (i32, i32, i32) {
    %c0_i32 = arith.constant 0 : i32
    %c0_i32_0 = arith.constant 0 : i32
    %c0_i32_1 = arith.constant 0 : i32
    return %arg0, %c0_i32, %c0_i32_0 : i32, i32, i32
  }
  func.func @transform_1(%arg0: i32) -> (i32, i32) {
    %c0_i32 = arith.constant 0 : i32
    %c0_i32_0 = arith.constant 0 : i32
    %c0_i32_1 = arith.constant 0 : i32
    return %c0_i32, %c0_i32_0 : i32, i32
  }
  func.func @transform_2(%arg0: i32) -> (i32, i32, i32) {
    %c0_i32 = arith.constant 0 : i32
    %c0_i32_0 = arith.constant 0 : i32
    %c0_i32_1 = arith.constant 0 : i32
    return %arg0, %c0_i32, %c0_i32_0 : i32, i32, i32
  }
  func.func @transform_3(%arg0: i32) -> (i32, i32, i32) {
    %c0_i32 = arith.constant 0 : i32
    %c0_i32_0 = arith.constant 0 : i32
    %c0_i32_1 = arith.constant 0 : i32
    return %arg0, %c0_i32, %c0_i32_0 : i32, i32, i32
  }
  func.func @transform_4(%arg0: i32) -> (i32, i32, i32) {
    %c0_i32 = arith.constant 0 : i32
    %c0_i32_0 = arith.constant 0 : i32
    %c0_i32_1 = arith.constant 0 : i32
    return %arg0, %c0_i32, %c0_i32_0 : i32, i32, i32
  }
}

module attributes {stable_mosaic.version = 11 : i64} {
  func.func @kernel(%arg0: i32, %arg1: memref<1x36x128xbf16, #tpu.memory_space<vmem>>, %arg2: memref<1x128xf32, #tpu.memory_space<vmem>>, %arg3: memref<1x128xf32, #tpu.memory_space<vmem>>, %arg4: memref<1x36x128xbf16, #tpu.memory_space<vmem>>, %arg5: memref<1x128xf32, #tpu.memory_space<vmem>>, %arg6: memref<1x128xf32, #tpu.memory_space<vmem>>, %arg7: memref<1x36x128xf32, #tpu.memory_space<vmem>>) attributes {dimension_semantics = [#tpu.dimension_semantics<parallel>], iteration_bounds = array<i64: 16>, scalar_prefetch = 0 : i64, scratch_operands = 0 : i64, tpu.core_type = #tpu.core_type<tc>, window_params = [{transform_indices = @transform_0, window_bounds = array<i64: 1, 36, 128>}, {pipeline_mode = #tpu.pipeline_mode<synchronous>, transform_indices = @transform_1, window_bounds = array<i64: 1, 128>}, {pipeline_mode = #tpu.pipeline_mode<synchronous>, transform_indices = @transform_2, window_bounds = array<i64: 1, 128>}, {transform_indices = @transform_3, window_bounds = array<i64: 1, 36, 128>}, {pipeline_mode = #tpu.pipeline_mode<synchronous>, transform_indices = @transform_4, window_bounds = array<i64: 1, 128>}, {pipeline_mode = #tpu.pipeline_mode<synchronous>, transform_indices = @transform_5, window_bounds = array<i64: 1, 128>}, {transform_indices = @transform_6, window_bounds = array<i64: 1, 36, 128>}]} {
    %c0 = arith.constant 0 : index
    %c0_0 = arith.constant 0 : index
    %c0_1 = arith.constant 0 : index
    %0 = vector.load %arg1[%c0, %c0_0, %c0_1] : memref<1x36x128xbf16, #tpu.memory_space<vmem>>, vector<1x36x128xbf16>
    %1 = vector.shape_cast %0 : vector<1x36x128xbf16> to vector<36x128xbf16>
    %2 = arith.extf %1 : vector<36x128xbf16> to vector<36x128xf32>
    %c0_2 = arith.constant 0 : index
    %c0_3 = arith.constant 0 : index
    %3 = vector.load %arg2[%c0_2, %c0_3] : memref<1x128xf32, #tpu.memory_space<vmem>>, vector<1x128xf32>
    %4 = vector.broadcast %3 : vector<1x128xf32> to vector<36x128xf32>
    %5 = arith.mulf %2, %4 : vector<36x128xf32>
    %c0_4 = arith.constant 0 : index
    %c0_5 = arith.constant 0 : index
    %6 = vector.load %arg3[%c0_4, %c0_5] : memref<1x128xf32, #tpu.memory_space<vmem>>, vector<1x128xf32>
    %7 = vector.broadcast %6 : vector<1x128xf32> to vector<36x128xf32>
    %8 = arith.addf %5, %7 : vector<36x128xf32>
    %c0_6 = arith.constant 0 : index
    %c0_7 = arith.constant 0 : index
    %c0_8 = arith.constant 0 : index
    %9 = vector.load %arg4[%c0_6, %c0_7, %c0_8] : memref<1x36x128xbf16, #tpu.memory_space<vmem>>, vector<1x36x128xbf16>
    %10 = vector.shape_cast %9 : vector<1x36x128xbf16> to vector<36x128xbf16>
    %11 = arith.extf %10 : vector<36x128xbf16> to vector<36x128xf32>
    %c0_9 = arith.constant 0 : index
    %c0_10 = arith.constant 0 : index
    %12 = vector.load %arg5[%c0_9, %c0_10] : memref<1x128xf32, #tpu.memory_space<vmem>>, vector<1x128xf32>
    %13 = vector.broadcast %12 : vector<1x128xf32> to vector<36x128xf32>
    %14 = arith.mulf %11, %13 : vector<36x128xf32>
    %c0_11 = arith.constant 0 : index
    %c0_12 = arith.constant 0 : index
    %15 = vector.load %arg6[%c0_11, %c0_12] : memref<1x128xf32, #tpu.memory_space<vmem>>, vector<1x128xf32>
    %16 = vector.broadcast %15 : vector<1x128xf32> to vector<36x128xf32>
    %17 = arith.addf %14, %16 : vector<36x128xf32>
    %18 = arith.addf %8, %17 : vector<36x128xf32>
    %cst = arith.constant 0.000000e+00 : f32
    %19 = vector.broadcast %cst : f32 to vector<36x128xf32>
    %20 = arith.maximumf %18, %19 : vector<36x128xf32>
    %c0_13 = arith.constant 0 : index
    %c0_14 = arith.constant 0 : index
    %c0_15 = arith.constant 0 : index
    %21 = vector.load %arg7[%c0_13, %c0_14, %c0_15] : memref<1x36x128xf32, #tpu.memory_space<vmem>>, vector<1x36x128xf32>
    %22 = vector.shape_cast %21 : vector<1x36x128xf32> to vector<36x128xf32>
    %23 = vector.shape_cast %20 : vector<36x128xf32> to vector<1x36x128xf32>
    tpu.vector_store %arg7[%c0_13, %c0_14, %c0_15], %23 {strides = array<i32>} : memref<1x36x128xf32, #tpu.memory_space<vmem>>, vector<1x36x128xf32>,
    return
  }
  func.func @transform_0(%arg0: i32) -> (i32, i32, i32) {
    %c0_i32 = arith.constant 0 : i32
    %c0_i32_0 = arith.constant 0 : i32
    %c0_i32_1 = arith.constant 0 : i32
    return %arg0, %c0_i32, %c0_i32_0 : i32, i32, i32
  }
  func.func @transform_1(%arg0: i32) -> (i32, i32) {
    %c0_i32 = arith.constant 0 : i32
    %c0_i32_0 = arith.constant 0 : i32
    %c0_i32_1 = arith.constant 0 : i32
    return %c0_i32, %c0_i32_0 : i32, i32
  }
  func.func @transform_2(%arg0: i32) -> (i32, i32) {
    %c0_i32 = arith.constant 0 : i32
    %c0_i32_0 = arith.constant 0 : i32
    %c0_i32_1 = arith.constant 0 : i32
    return %c0_i32, %c0_i32_0 : i32, i32
  }
  func.func @transform_3(%arg0: i32) -> (i32, i32, i32) {
    %c0_i32 = arith.constant 0 : i32
    %c0_i32_0 = arith.constant 0 : i32
    %c0_i32_1 = arith.constant 0 : i32
    return %arg0, %c0_i32, %c0_i32_0 : i32, i32, i32
  }
  func.func @transform_4(%arg0: i32) -> (i32, i32) {
    %c0_i32 = arith.constant 0 : i32
    %c0_i32_0 = arith.constant 0 : i32
    %c0_i32_1 = arith.constant 0 : i32
    return %c0_i32, %c0_i32_0 : i32, i32
  }
  func.func @transform_5(%arg0: i32) -> (i32, i32) {
    %c0_i32 = arith.constant 0 : i32
    %c0_i32_0 = arith.constant 0 : i32
    %c0_i32_1 = arith.constant 0 : i32
    return %c0_i32, %c0_i32_0 : i32, i32
  }
  func.func @transform_6(%arg0: i32) -> (i32, i32, i32) {
    %c0_i32 = arith.constant 0 : i32
    %c0_i32_0 = arith.constant 0 : i32
    %c0_i32_1 = arith.constant 0 : i32
    return %arg0, %c0_i32, %c0_i32_0 : i32, i32, i32
  }
}

</mosaic_0001>

<llo_original>
// kernel: resblock_forward.6
$region0: #{resblock_forward.6}
  #allocation0 [shape = 'u32[]', space=smem, size = 0x4, offset = 0x4, fixed_abs, tag = 'smem constant byte address 0x4 - core index']
  #allocation1 [shape = 'u32[144,128]{1,0:T(1,128)}', space=vmem, size = 0x12000, scoped, tag = 'internal scratch']
  %s0 = inlined_call_operand.vmem [shape: bf16[16,36,128], index: 0, kind: input, shape index: {}]
  %s1 = inlined_call_operand.vmem [shape: f32[1,128], index: 1, kind: input, shape index: {}]
  %s2 = inlined_call_operand.vmem [shape: f32[1,128], index: 2, kind: input, shape index: {}]
  %s3 = inlined_call_operand.vmem [shape: bf16[16,36,128], index: 3, kind: output, shape index: {}]
  %s4 = sld [smem:[#allocation0]]
  $region45: #{resblock_forward.6} parent=0
    _
  %s6 = ssub.s32 1, %s4
  %s7 = scalar_select 0, %s6, %s4
  loop: start=0, step=1, limit=18
  $region2: #{resblock_forward.6} parent=0 // loop_pre_header
    _
  $region3: #{resblock_forward.6} parent=0 // loop_header
    %s9 = sphi 0, %s13
    %p10 = scmp.ge.s32.totalorder %s9, 18
    %s19 = sphi 0, %s21
    %s22 = sphi 0, %s19
    %s23 = sphi 0, %s22
    %s39 = sphi 0, %s23
    %s43 = sphi 0, %s43
    %s45 = sphi 0, %s43
    %s46 = sphi 0, %s45
    %s60 = sphi 0, %s46
    %s64 = sphi 0, %s64
    %s66 = sphi 0, %s64
    %s67 = sphi 0, %s66
    %s81 = sphi 0, %s67
    %s87 = sphi 0, %s89
    %s90 = sphi 0, %s87
    %s91 = sphi 0, %s90
    %s107 = sphi 0, %s91
  $region4: #{resblock_forward.6} parent=0 // loop_header_branch
    %12 = sbr.rel (%p10) target = $region8
  $region5: #{resblock_forward.6} parent=0 // loop_body
    %s14 = ssub.s32 %s9, 1
    %s15 = ssub.s32 %s9, 2
    %s16 = sadd.s32 %s9, 1
    %s17 = ssub.s32 %s9, %s16
    %p18 = scmp.eq.s32.totalorder %s17, 0
    %s20 = sadd.s32 %s19, 1
    %s21 = scalar_select %p18, %s19, %s20
    %p24 = pneg %p18
    %p25 = scmp.eq.s32.totalorder %s9, 15
    %p26 = por %p24, %p25
    %p27 = scmp.ne.s32.totalorder %s19, %s22
    %p28 = scmp.eq.s32.totalorder %s9, 0
    %p29 = por %p27, %p28
    %p30 = scmp.ne.s32.totalorder %s19, %s22
    %p31 = scmp.eq.s32.totalorder %s14, 15
    %p32 = por %p30, %p31
    %p33 = scmp.ne.s32.totalorder %s22, %s23
    %p34 = scmp.eq.s32.totalorder %s14, 0
    %p35 = por %p33, %p34
    %p36 = scmp.ne.s32.totalorder %s22, %s23
    %p37 = scmp.eq.s32.totalorder %s15, 15
    %p38 = por %p36, %p37
    %p40 = scmp.ne.s32.totalorder %s23, %s39
    %p41 = scmp.eq.s32.totalorder %s15, 0
    %p42 = por %p40, %p41
    %s44 = sadd.s32 %s43, 1
    %p47 = scmp.eq.s32.totalorder %s9, 15
    %p48 = scmp.ne.s32.totalorder %s43, %s45
    %p49 = scmp.eq.s32.totalorder %s9, 0
    %p50 = por %p48, %p49
    %p51 = scmp.ne.s32.totalorder %s43, %s45
    %p52 = scmp.eq.s32.totalorder %s14, 15
    %p53 = por %p51, %p52
    %p54 = scmp.ne.s32.totalorder %s45, %s46
    %p55 = scmp.eq.s32.totalorder %s14, 0
    %p56 = por %p54, %p55
    %p57 = scmp.ne.s32.totalorder %s45, %s46
    %p58 = scmp.eq.s32.totalorder %s15, 15
    %p59 = por %p57, %p58
    %p61 = scmp.ne.s32.totalorder %s46, %s60
    %p62 = scmp.eq.s32.totalorder %s15, 0
    %p63 = por %p61, %p62
    %s65 = sadd.s32 %s64, 1
    %p68 = scmp.eq.s32.totalorder %s9, 15
    %p69 = scmp.ne.s32.totalorder %s64, %s66
    %p70 = scmp.eq.s32.totalorder %s9, 0
    %p71 = por %p69, %p70
    %p72 = scmp.ne.s32.totalorder %s64, %s66
    %p73 = scmp.eq.s32.totalorder %s14, 15
    %p74 = por %p72, %p73
    %p75 = scmp.ne.s32.totalorder %s66, %s67
    %p76 = scmp.eq.s32.totalorder %s14, 0
    %p77 = por %p75, %p76
    %p78 = scmp.ne.s32.totalorder %s66, %s67
    %p79 = scmp.eq.s32.totalorder %s15, 15
    %p80 = por %p78, %p79
    %p82 = scmp.ne.s32.totalorder %s67, %s81
    %p83 = scmp.eq.s32.totalorder %s15, 0
    %p84 = por %p82, %p83
    %s85 = ssub.s32 %s9, %s16
    %p86 = scmp.eq.s32.totalorder %s85, 0
    %s88 = sadd.s32 %s87, 1
    %s89 = scalar_select %p86, %s87, %s88
    %p92 = pneg %p86
    %p93 = scmp.eq.s32.totalorder %s9, 15
    %p94 = por %p92, %p93
    %p95 = scmp.ne.s32.totalorder %s87, %s90
    %p96 = scmp.eq.s32.totalorder %s9, 0
    %p97 = por %p95, %p96
    %p98 = scmp.ne.s32.totalorder %s87, %s90
    %p99 = scmp.eq.s32.totalorder %s14, 15
    %p100 = por %p98, %p99
    %p101 = scmp.ne.s32.totalorder %s90, %s91
    %p102 = scmp.eq.s32.totalorder %s14, 0
    %p103 = por %p101, %p102
    %p104 = scmp.ne.s32.totalorder %s90, %s91
    %p105 = scmp.eq.s32.totalorder %s15, 15
    %p106 = por %p104, %p105
    %p108 = scmp.ne.s32.totalorder %s91, %s107
    %p109 = scmp.eq.s32.totalorder %s15, 0
    %p110 = por %p108, %p109
    %p111 = scmp.le.s32.totalorder 1, %s9
    %p112 = scmp.lt.s32.totalorder %s9, 17
    %p113 = pnand %p111, %p112
    %p114 = pneg %p113
    // Predicated region
    $region9: #{resblock_forward.6} parent=5 // pred_check
      _
    $region10: #{resblock_forward.6} parent=5 // pred_check_branch
      %116 = sbr.rel (%p113) target = $region12
    $region11: #{resblock_forward.6} parent=5 // pred_region
      %s117 = ssub.s32 %s9, 1
      // Predicated region
      $region13: #{resblock_forward.6} parent=11 // pred_check
        %p118 = pneg %p56
      $region14: #{resblock_forward.6} parent=11 // pred_check_branch
        %120 = sbr.rel (%p118) target = $region16
      $region15: #{resblock_forward.6} parent=11 // pred_region
        _
      $region16: #{resblock_forward.6} parent=11 // pred_fallthru
        _
      // Predicated region
      $region17: #{resblock_forward.6} parent=11 // pred_check
        %p121 = pneg %p77
      $region18: #{resblock_forward.6} parent=11 // pred_check_branch
        %123 = sbr.rel (%p121) target = $region20
      $region19: #{resblock_forward.6} parent=11 // pred_region
        _
      $region20: #{resblock_forward.6} parent=11 // pred_fallthru
        _
    $region12: #{resblock_forward.6} parent=5 // pred_fallthru
      _
    %p124 = scmp.lt.s32.totalorder %s9, 16
    // Predicated region
    $region21: #{resblock_forward.6} parent=5 // pred_check
      %p125 = pneg %p124
    $region22: #{resblock_forward.6} parent=5 // pred_check_branch
      %127 = sbr.rel (%p125) target = $region24
    $region23: #{resblock_forward.6} parent=5 // pred_region
      // Predicated region
      $region25: #{resblock_forward.6} parent=23 // pred_check
        %p128 = pneg %p29
      $region26: #{resblock_forward.6} parent=23 // pred_check_branch
        %130 = sbr.rel (%p128) target = $region28
      $region27: #{resblock_forward.6} parent=23 // pred_region
        %p131 = scmp.lt.s32.totalorder %s9, 15
        %s132 = scalar_select %p131, %s9, 15
        %s133 = smul.addr %s132, 5
        %s134 = smul.addr %s133, 4
        %s135 = scalar_lea.vmem %s0, %s134
      $region28: #{resblock_forward.6} parent=23 // pred_fallthru
        _
    $region24: #{resblock_forward.6} parent=5 // pred_fallthru
      _
    %p136 = scmp.le.s32.totalorder 1, %s9
    %p137 = scmp.lt.s32.totalorder %s9, 17
    %p138 = pnand %p136, %p137
    %p139 = pneg %p138
    // Predicated region
    $region29: #{resblock_forward.6} parent=5 // pred_check
      _
    $region30: #{resblock_forward.6} parent=5 // pred_check_branch
      %141 = sbr.rel (%p138) target = $region32
    $region31: #{resblock_forward.6} parent=5 // pred_region
      %s142 = ssub.s32 %s9, 1
      %p143 = scmp.lt.s32.totalorder %s14, 15
      %s144 = scalar_select %p143, %s14, 15
      %s145 = smul.addr %s144, 5
      %s146 = smul.addr %s145, 4
      %s147 = scalar_lea.vmem %s0, %s146
      %p148 = pneg %p35
      %p149 = pneg %p32
      %p150 = pneg %p56
      %p151 = pneg %p53
      %p152 = pneg %p77
      %p153 = pneg %p74
      %p154 = pneg %p103
      %p155 = pneg %p100
      %p156 = scmp.lt.s32.totalorder %s14, 15
      %s157 = scalar_select %p156, %s14, 15
      %s158 = smul.addr %s157, 5
      %s159 = smul.addr %s158, 4
      %s160 = scalar_lea.vmem %s3, %s159
      %p161 = scmp.lt.s32.totalorder %s14, 15
      %s162 = scalar_select %p161, %s14, 15
      %s163 = smul.addr %s162, 5
      %s164 = smul.addr %s163, 4
      %s165 = scalar_lea.vmem %s0, %s164
      %p166 = scmp.lt.s32.totalorder %s14, 15
      %s167 = scalar_select %p166, %s14, 15
      %s168 = smul.addr %s167, 5
      %s169 = smul.addr %s168, 4
      %s170 = scalar_lea.vmem %s3, %s169
      %v171 = vld [vmem:[%s165] sm:$0xf]
      %v172 = vld [vmem:[%s165 + $0x4] sm:$0xf]
      %v173 = vld [vmem:[%s165 + $0x8] sm:$0xf]
      %v174 = vld [vmem:[%s165 + $0xc] sm:$0xf]
      %v175 = vld [vmem:[%s165 + $0x10] sm:$0x3]
      %v176 = vunpack.c.l.bf16 %v171
      %v177 = vunpack.c.l.bf16 %v172
      %v178 = vunpack.c.l.bf16 %v173
      %v179 = vunpack.c.l.bf16 %v174
      %v180 = vunpack.c.l.bf16 %v175
      %v181 = vld [vmem:[%s1] sm:$0x1]
      %v183 = vlaneseq
      %v184 = vshrl.u32 %v183, 7
      %v185 = vsub.s32 0, %v184
      %v186 = vrot.slane %v181, %v185
      %v188 = vmul.f32 %v176, %v186
      %v189 = vmul.f32 %v177, %v186
      %v190 = vmul.f32 %v178, %v186
      %v191 = vmul.f32 %v179, %v186
      %v192 = vmul.f32 %v180, %v186
      %v193 = vld [vmem:[%s2] sm:$0x1]
      %v195 = vlaneseq
      %v196 = vshrl.u32 %v195, 7
      %v197 = vsub.s32 0, %v196
      %v198 = vrot.slane %v193, %v197
      %v200 = vadd.f32 %v188, %v198
      %v201 = vadd.f32 %v189, %v198
      %v202 = vadd.f32 %v190, %v198
      %v203 = vadd.f32 %v191, %v198
      %v204 = vadd.f32 %v192, %v198
      %v205 = vmax.f32 %v200, 0.0
      %v206 = vmax.f32 %v201, 0.0
      %v207 = vmax.f32 %v202, 0.0
      %v208 = vmax.f32 %v203, 0.0
      %v209 = vmax.f32 %v204, 0.0
      %v210 = vpack.c.bf16 %v206, %v205
      %v211 = vpack.c.bf16 %v208, %v207
      %v212 = vpack.c.bf16 %v209, %v209
      %v216 = vunpack.c.l.b16 %v210
      %v217 = vunpack.c.h.b16 %v210
      %v218 = vunpack.c.l.b16 %v211
      %v219 = vunpack.c.h.b16 %v211
      %v220 = vunpack.c.l.b16 %v212
      %v221 = vpack.c.b16 %v216, %v216
      %v222 = vpack.c.b16 %v217, %v217
      %v223 = vpack.c.b16 %v218, %v218
      %v224 = vpack.c.b16 %v219, %v219
      %v225 = vpack.c.b16 %v220, %v220
      %231 = vst [vmem:[%s170] sm:$0xf] %v221
      %232 = vst [vmem:[%s170 + $0x4] sm:$0xf] %v222
      %233 = vst [vmem:[%s170 + $0x8] sm:$0xf] %v223
      %234 = vst [vmem:[%s170 + $0xc] sm:$0xf] %v224
      %235 = vst [vmem:[%s170 + $0x10] sm:$0x3] %v225
      %p236 = scmp.lt.s32.totalorder %s14, 15
      %s237 = scalar_select %p236, %s14, 15
      %s238 = smul.addr %s237, 5
      %s239 = smul.addr %s238, 4
      %s240 = scalar_lea.vmem %s3, %s239
      // Predicated region
      $region33: #{resblock_forward.6} parent=31 // pred_check
        %p241 = pneg %p100
      $region34: #{resblock_forward.6} parent=31 // pred_check_branch
        %243 = sbr.rel (%p241) target = $region36
      $region35: #{resblock_forward.6} parent=31 // pred_region
        _
      $region36: #{resblock_forward.6} parent=31 // pred_fallthru
        _
    $region32: #{resblock_forward.6} parent=5 // pred_fallthru
      _
    %p244 = scmp.le.s32.totalorder 2, %s9
    // Predicated region
    $region37: #{resblock_forward.6} parent=5 // pred_check
      %p245 = pneg %p244
    $region38: #{resblock_forward.6} parent=5 // pred_check_branch
      %247 = sbr.rel (%p245) target = $region40
    $region39: #{resblock_forward.6} parent=5 // pred_region
      %s248 = ssub.s32 %s9, 2
      // Predicated region
      $region41: #{resblock_forward.6} parent=39 // pred_check
        %p249 = pneg %p106
      $region42: #{resblock_forward.6} parent=39 // pred_check_branch
        %251 = sbr.rel (%p249) target = $region44
      $region43: #{resblock_forward.6} parent=39 // pred_region
        %p252 = scmp.lt.s32.totalorder %s15, 15
        %s253 = scalar_select %p252, %s15, 15
        %s254 = smul.addr %s253, 5
        %s255 = smul.addr %s254, 4
        %s256 = scalar_lea.vmem %s3, %s255
      $region44: #{resblock_forward.6} parent=39 // pred_fallthru
        _
    $region40: #{resblock_forward.6} parent=5 // pred_fallthru
      _
  $region6: #{resblock_forward.6} parent=0 // loop_footer
    %s13 = sadd.s32 1, %s9
  $region7: #{resblock_forward.6} parent=0 // loop_footer_branch
    %8 = sbr.rel target = $region3
  $region8: #{resblock_forward.6} parent=0 // loop_exit
    _

// kernel: resblock_forward.5
$region0: #{resblock_forward.5}
  #allocation0 [shape = 'u32[]', space=smem, size = 0x4, offset = 0x4, fixed_abs, tag = 'smem constant byte address 0x4 - core index']
  #allocation1 [shape = 'u32[144,128]{1,0:T(1,128)}', space=vmem, size = 0x12000, scoped, tag = 'internal scratch']
  %s0 = inlined_call_operand.vmem [shape: bf16[16,90,4], index: 0, kind: input, shape index: {}]
  %s1 = inlined_call_operand.vmem [shape: bf16[36,128], index: 1, kind: input, shape index: {}]
  %s2 = inlined_call_operand.vmem [shape: bf16[16,36,128], index: 2, kind: output, shape index: {0}]
  %s3 = inlined_call_operand.vmem [shape: f32[16,1,128], index: 3, kind: output, shape index: {1}]
  %s4 = inlined_call_operand.vmem [shape: f32[16,1,128], index: 4, kind: output, shape index: {2}]
  %5 = xla_tuple %s2, %s3, %s4
  %s6 = sld [smem:[#allocation0]]
  $region57: #{resblock_forward.5} parent=0
    _
  %s8 = ssub.s32 1, %s6
  %s9 = scalar_select 0, %s8, %s6
  loop: start=0, step=1, limit=18
  $region2: #{resblock_forward.5} parent=0 // loop_pre_header
    _
  $region3: #{resblock_forward.5} parent=0 // loop_header
    %s11 = sphi 0, %s15
    %p12 = scmp.ge.s32.totalorder %s11, 18
    %s21 = sphi 0, %s23
    %s24 = sphi 0, %s21
    %s25 = sphi 0, %s24
    %s41 = sphi 0, %s25
    %s45 = sphi 0, %s45
    %s47 = sphi 0, %s45
    %s48 = sphi 0, %s47
    %s62 = sphi 0, %s48
    %s68 = sphi 0, %s70
    %s71 = sphi 0, %s68
    %s72 = sphi 0, %s71
    %s88 = sphi 0, %s72
    %s94 = sphi 0, %s96
    %s97 = sphi 0, %s94
    %s98 = sphi 0, %s97
    %s114 = sphi 0, %s98
    %s120 = sphi 0, %s122
    %s123 = sphi 0, %s120
    %s124 = sphi 0, %s123
    %s140 = sphi 0, %s124
  $region4: #{resblock_forward.5} parent=0 // loop_header_branch
    %14 = sbr.rel (%p12) target = $region8
  $region5: #{resblock_forward.5} parent=0 // loop_body
    %s16 = ssub.s32 %s11, 1
    %s17 = ssub.s32 %s11, 2
    %s18 = sadd.s32 %s11, 1
    %s19 = ssub.s32 %s11, %s18
    %p20 = scmp.eq.s32.totalorder %s19, 0
    %s22 = sadd.s32 %s21, 1
    %s23 = scalar_select %p20, %s21, %s22
    %p26 = pneg %p20
    %p27 = scmp.eq.s32.totalorder %s11, 15
    %p28 = por %p26, %p27
    %p29 = scmp.ne.s32.totalorder %s21, %s24
    %p30 = scmp.eq.s32.totalorder %s11, 0
    %p31 = por %p29, %p30
    %p32 = scmp.ne.s32.totalorder %s21, %s24
    %p33 = scmp.eq.s32.totalorder %s16, 15
    %p34 = por %p32, %p33
    %p35 = scmp.ne.s32.totalorder %s24, %s25
    %p36 = scmp.eq.s32.totalorder %s16, 0
    %p37 = por %p35, %p36
    %p38 = scmp.ne.s32.totalorder %s24, %s25
    %p39 = scmp.eq.s32.totalorder %s17, 15
    %p40 = por %p38, %p39
    %p42 = scmp.ne.s32.totalorder %s25, %s41
    %p43 = scmp.eq.s32.totalorder %s17, 0
    %p44 = por %p42, %p43
    %s46 = sadd.s32 %s45, 1
    %p49 = scmp.eq.s32.totalorder %s11, 15
    %p50 = scmp.ne.s32.totalorder %s45, %s47
    %p51 = scmp.eq.s32.totalorder %s11, 0
    %p52 = por %p50, %p51
    %p53 = scmp.ne.s32.totalorder %s45, %s47
    %p54 = scmp.eq.s32.totalorder %s16, 15
    %p55 = por %p53, %p54
    %p56 = scmp.ne.s32.totalorder %s47, %s48
    %p57 = scmp.eq.s32.totalorder %s16, 0
    %p58 = por %p56, %p57
    %p59 = scmp.ne.s32.totalorder %s47, %s48
    %p60 = scmp.eq.s32.totalorder %s17, 15
    %p61 = por %p59, %p60
    %p63 = scmp.ne.s32.totalorder %s48, %s62
    %p64 = scmp.eq.s32.totalorder %s17, 0
    %p65 = por %p63, %p64
    %s66 = ssub.s32 %s11, %s18
    %p67 = scmp.eq.s32.totalorder %s66, 0
    %s69 = sadd.s32 %s68, 1
    %s70 = scalar_select %p67, %s68, %s69
    %p73 = pneg %p67
    %p74 = scmp.eq.s32.totalorder %s11, 15
    %p75 = por %p73, %p74
    %p76 = scmp.ne.s32.totalorder %s68, %s71
    %p77 = scmp.eq.s32.totalorder %s11, 0
    %p78 = por %p76, %p77
    %p79 = scmp.ne.s32.totalorder %s68, %s71
    %p80 = scmp.eq.s32.totalorder %s16, 15
    %p81 = por %p79, %p80
    %p82 = scmp.ne.s32.totalorder %s71, %s72
    %p83 = scmp.eq.s32.totalorder %s16, 0
    %p84 = por %p82, %p83
    %p85 = scmp.ne.s32.totalorder %s71, %s72
    %p86 = scmp.eq.s32.totalorder %s17, 15
    %p87 = por %p85, %p86
    %p89 = scmp.ne.s32.totalorder %s72, %s88
    %p90 = scmp.eq.s32.totalorder %s17, 0
    %p91 = por %p89, %p90
    %s92 = ssub.s32 %s11, %s18
    %p93 = scmp.eq.s32.totalorder %s92, 0
    %s95 = sadd.s32 %s94, 1
    %s96 = scalar_select %p93, %s94, %s95
    %p99 = pneg %p93
    %p100 = scmp.eq.s32.totalorder %s11, 15
    %p101 = por %p99, %p100
    %p102 = scmp.ne.s32.totalorder %s94, %s97
    %p103 = scmp.eq.s32.totalorder %s11, 0
    %p104 = por %p102, %p103
    %p105 = scmp.ne.s32.totalorder %s94, %s97
    %p106 = scmp.eq.s32.totalorder %s16, 15
    %p107 = por %p105, %p106
    %p108 = scmp.ne.s32.totalorder %s97, %s98
    %p109 = scmp.eq.s32.totalorder %s16, 0
    %p110 = por %p108, %p109
    %p111 = scmp.ne.s32.totalorder %s97, %s98
    %p112 = scmp.eq.s32.totalorder %s17, 15
    %p113 = por %p111, %p112
    %p115 = scmp.ne.s32.totalorder %s98, %s114
    %p116 = scmp.eq.s32.totalorder %s17, 0
    %p117 = por %p115, %p116
    %s118 = ssub.s32 %s11, %s18
    %p119 = scmp.eq.s32.totalorder %s118, 0
    %s121 = sadd.s32 %s120, 1
    %s122 = scalar_select %p119, %s120, %s121
    %p125 = pneg %p119
    %p126 = scmp.eq.s32.totalorder %s11, 15
    %p127 = por %p125, %p126
    %p128 = scmp.ne.s32.totalorder %s120, %s123
    %p129 = scmp.eq.s32.totalorder %s11, 0
    %p130 = por %p128, %p129
    %p131 = scmp.ne.s32.totalorder %s120, %s123
    %p132 = scmp.eq.s32.totalorder %s16, 15
    %p133 = por %p131, %p132
    %p134 = scmp.ne.s32.totalorder %s123, %s124
    %p135 = scmp.eq.s32.totalorder %s16, 0
    %p136 = por %p134, %p135
    %p137 = scmp.ne.s32.totalorder %s123, %s124
    %p138 = scmp.eq.s32.totalorder %s17, 15
    %p139 = por %p137, %p138
    %p141 = scmp.ne.s32.totalorder %s124, %s140
    %p142 = scmp.eq.s32.totalorder %s17, 0
    %p143 = por %p141, %p142
    %p144 = scmp.le.s32.totalorder 1, %s11
    %p145 = scmp.lt.s32.totalorder %s11, 17
    %p146 = pnand %p144, %p145
    %p147 = pneg %p146
    // Predicated region
    $region9: #{resblock_forward.5} parent=5 // pred_check
      _
    $region10: #{resblock_forward.5} parent=5 // pred_check_branch
      %149 = sbr.rel (%p146) target = $region12
    $region11: #{resblock_forward.5} parent=5 // pred_region
      %s150 = ssub.s32 %s11, 1
      // Predicated region
      $region13: #{resblock_forward.5} parent=11 // pred_check
        %p151 = pneg %p58
      $region14: #{resblock_forward.5} parent=11 // pred_check_branch
        %153 = sbr.rel (%p151) target = $region16
      $region15: #{resblock_forward.5} parent=11 // pred_region
        _
      $region16: #{resblock_forward.5} parent=11 // pred_fallthru
        _
    $region12: #{resblock_forward.5} parent=5 // pred_fallthru
      _
    %p154 = scmp.lt.s32.totalorder %s11, 16
    // Predicated region
    $region17: #{resblock_forward.5} parent=5 // pred_check
      %p155 = pneg %p154
    $region18: #{resblock_forward.5} parent=5 // pred_check_branch
      %157 = sbr.rel (%p155) target = $region20
    $region19: #{resblock_forward.5} parent=5 // pred_region
      // Predicated region
      $region21: #{resblock_forward.5} parent=19 // pred_check
        %p158 = pneg %p31
      $region22: #{resblock_forward.5} parent=19 // pred_check_branch
        %160 = sbr.rel (%p158) target = $region24
      $region23: #{resblock_forward.5} parent=19 // pred_region
        %p161 = scmp.lt.s32.totalorder %s11, 15
        %s162 = scalar_select %p161, %s11, 15
        %s163 = smul.addr %s162, 12
        %s164 = smul.addr %s163, 4
        %s165 = scalar_lea.vmem %s0, %s164
      $region24: #{resblock_forward.5} parent=19 // pred_fallthru
        _
    $region20: #{resblock_forward.5} parent=5 // pred_fallthru
      _
    %p166 = scmp.le.s32.totalorder 1, %s11
    %p167 = scmp.lt.s32.totalorder %s11, 17
    %p168 = pnand %p166, %p167
    %p169 = pneg %p168
    // Predicated region
    $region25: #{resblock_forward.5} parent=5 // pred_check
      _
    $region26: #{resblock_forward.5} parent=5 // pred_check_branch
      %171 = sbr.rel (%p168) target = $region28
    $region27: #{resblock_forward.5} parent=5 // pred_region
      %s172 = ssub.s32 %s11, 1
      %p173 = scmp.lt.s32.totalorder %s16, 15
      %s174 = scalar_select %p173, %s16, 15
      %s175 = smul.addr %s174, 12
      %s176 = smul.addr %s175, 4
      %s177 = scalar_lea.vmem %s0, %s176
      %p178 = pneg %p37
      %p179 = pneg %p34
      %p180 = pneg %p58
      %p181 = pneg %p55
      %p182 = pneg %p84
      %p183 = pneg %p81
      %p184 = scmp.lt.s32.totalorder %s16, 15
      %s185 = scalar_select %p184, %s16, 15
      %s186 = smul.addr %s185, 5
      %s187 = smul.addr %s186, 4
      %s188 = scalar_lea.vmem %s2, %s187
      %p189 = pneg %p110
      %p190 = pneg %p107
      %p191 = scmp.lt.s32.totalorder %s16, 15
      %s192 = scalar_select %p191, %s16, 15
      %s193 = scalar_lea.vmem %s3, %s192
      %p194 = pneg %p136
      %p195 = pneg %p133
      %p196 = scmp.lt.s32.totalorder %s16, 15
      %s197 = scalar_select %p196, %s16, 15
      %s198 = scalar_lea.vmem %s4, %s197
      %p199 = scmp.lt.s32.totalorder %s16, 15
      %s200 = scalar_select %p199, %s16, 15
      %s201 = smul.addr %s200, 12
      %s202 = smul.addr %s201, 4
      %s203 = scalar_lea.vmem %s0, %s202
      %p204 = scmp.lt.s32.totalorder %s16, 15
      %s205 = scalar_select %p204, %s16, 15
      %s206 = smul.addr %s205, 5
      %s207 = smul.addr %s206, 4
      %s208 = scalar_lea.vmem %s2, %s207
      %p209 = scmp.lt.s32.totalorder %s16, 15
      %s210 = scalar_select %p209, %s16, 15
      %s211 = scalar_lea.vmem %s3, %s210
      %p212 = scmp.lt.s32.totalorder %s16, 15
      %s213 = scalar_select %p212, %s16, 15
      %s214 = scalar_lea.vmem %s4, %s213
      %v216 = vld [vmem:[%s203] sm:$0xf]
      %v217 = vld [vmem:[%s203 + $0x4] sm:$0xf]
      %v218 = vld [vmem:[%s203 + $0x8] sm:$0xf]
      %v219 = vld [vmem:[%s203 + $0xc] sm:$0xf]
      %v220 = vld [vmem:[%s203 + $0x10] sm:$0x3]
      %v221 = vld [vmem:[%s1] sm:$0x3]
      %v222 = vld [vmem:[%s203 + $0x10] sm:$0x7]
      %v223 = vld [vmem:[%s1] sm:$0xc]
      %v229 = vunpack.c.l.b16 %v216
      %v230 = vunpack.c.l.b16 %v217
      %v231 = vunpack.c.l.b16 %v218
      %v232 = vunpack.c.l.b16 %v219
      %v233 = vunpack.c.l.b16 %v222
      %v234 = vpack.c.b16 %v230, %v229
      %v235 = vpack.c.b16 %v232, %v231
      %v236 = vpack.c.b16 %v233, %v233
      %vm237 = vsmask.f32 7424
      %v239 = vshrl.u32 %v234, 16
      %v241 = vshll.u32 %v234, 16
      %v243 = vrot.slane %v241, 1
      %v244 = vor.u32 %v239, %v243
      %v246 = vshll.u32 %v235, 16
      %v248 = vrot.slane %v246, 1
      %v249 = vsel %vm237, %v244, %v248
      %v250 = vshrl.u32 %v235, 16
      %v252 = vor.u32 %v250, %v248
      %v254 = vshll.u32 %v236, 16
      %v256 = vrot.slane %v254, 1
      %v257 = vsel %vm237, %v252, %v256
      %v258 = vshrl.u32 %v236, 16
      %v260 = vor.u32 %v258, %v256
      %v262 = vunpack.c.l.b16 %v223
      %v263 = vpack.c.b16 %v262, %v262
      %v264 = vrot.slane %v263, 2
      %vm265 = vcmask 31744
      %v267 = vsel %vm265, %v249, 0
      %v270 = vsel %vm265, %v257, 0
      %v273 = vsel %vm265, %v260, 0
      %vm275 = vcmask 1041408
      %v277 = vsel %vm275, %v264, 0
      %279 = vmatprep.subr.bf16.mxu0 0
      %280 = vmatpush1.bf16.msra.mxu0 %v277
      %281 = vmatprep.subr.bf16.mxu0 0
      %282 = vmatpush1.bf16.msra.mxu0 0
      %283 = vmatprep.subr.bf16.mxu0 0
      %284 = vmatpush1.bf16.msra.mxu0 0
      %285 = vmatprep.subr.bf16.mxu0 0
      %286 = vmatpush1.bf16.msra.mxu0 0
      %287 = vmatprep.subr.bf16.mxu0 0
      %288 = vmatpush1.bf16.msra.mxu0 0
      %289 = vmatprep.subr.bf16.mxu0 0
      %290 = vmatpush1.bf16.msra.mxu0 0
      %291 = vmatprep.subr.bf16.mxu0 0
      %292 = vmatpush1.bf16.msra.mxu0 0
      %293 = vmatprep.subr.bf16.mxu0 0
      %294 = vmatpush1.bf16.msra.mxu0 0
      %295 = vmatprep.subr.bf16.mxu0 0
      %296 = vmatpush1.bf16.msra.mxu0 0
      %297 = vmatprep.subr.bf16.mxu0 0
      %298 = vmatpush1.bf16.msra.mxu0 0
      %299 = vmatprep.subr.bf16.mxu0 0
      %300 = vmatpush1.bf16.msra.mxu0 0
      %301 = vmatprep.subr.bf16.mxu0 0
      %302 = vmatpush1.bf16.msra.mxu0 0
      %303 = vmatprep.subr.bf16.mxu0 0
      %304 = vmatpush1.bf16.msra.mxu0 0
      %305 = vmatprep.subr.bf16.mxu0 0
      %306 = vmatpush1.bf16.msra.mxu0 0
      %307 = vmatprep.subr.bf16.mxu0 0
      %308 = vmatpush1.bf16.msra.mxu0 0
      %309 = vmatprep.subr.bf16.mxu0 0
      %310 = vmatpush1.bf16.msra.mxu0 0
      %311 = vmatprep.mubr.bf16.mxu0 0
      %312 = vmatmul.mubr.bf16.gmra.mrb[0].mxu0 %v267
      %v313 = vpop.f32.mrb[0].mxu0
      %v314 = vadd.f32 0.0, %v313
      %v315 = vpop.f32.mrb[0].mxu0
      %v316 = vpop.f32.mrb[0].mxu0
      %v317 = vadd.f32 0.0, %v316
      %v318 = vpop.f32.mrb[0].mxu0
      %319 = vmatprep.mubr.bf16.mxu0 0
      %320 = vmatmul.mubr.bf16.gmra.mrb[0].mxu0 %v270
      %v321 = vpop.f32.mrb[0].mxu0
      %v322 = vadd.f32 0.0, %v321
      %v323 = vpop.f32.mrb[0].mxu0
      %v324 = vpop.f32.mrb[0].mxu0
      %v325 = vadd.f32 0.0, %v324
      %v326 = vpop.f32.mrb[0].mxu0
      %327 = vmatprep.mubr.bf16.mxu0 0
      %328 = vmatmul.mubr.bf16.gmra.mrb[0].mxu0 %v273
      %v329 = vpop.f32.mrb[0].mxu0
      %v330 = vadd.f32 0.0, %v329
      %v331 = vpop.f32.mrb[0].mxu0
      %v332 = vpop.f32.mrb[0].mxu0
      %v333 = vpop.f32.mrb[0].mxu0
      %334 = vdwg.mxu0
      %v336 = vunpack.c.l.b16 %v220
      %v337 = vpack.c.b16 %v336, %v336
      %v338 = vsel %vm265, %v234, 0
      %v340 = vsel %vm265, %v235, 0
      %v343 = vsel %vm265, %v337, 0
      %v346 = vsel %vm275, %v221, 0
      %348 = vmatprep.subr.bf16.mxu0 0
      %349 = vmatpush1.bf16.msra.mxu0 %v346
      %350 = vmatprep.subr.bf16.mxu0 0
      %351 = vmatpush1.bf16.msra.mxu0 0
      %352 = vmatprep.subr.bf16.mxu0 0
      %353 = vmatpush1.bf16.msra.mxu0 0
      %354 = vmatprep.subr.bf16.mxu0 0
      %355 = vmatpush1.bf16.msra.mxu0 0
      %356 = vmatprep.subr.bf16.mxu0 0
      %357 = vmatpush1.bf16.msra.mxu0 0
      %358 = vmatprep.subr.bf16.mxu0 0
      %359 = vmatpush1.bf16.msra.mxu0 0
      %360 = vmatprep.subr.bf16.mxu0 0
      %361 = vmatpush1.bf16.msra.mxu0 0
      %362 = vmatprep.subr.bf16.mxu0 0
      %363 = vmatpush1.bf16.msra.mxu0 0
      %364 = vmatprep.subr.bf16.mxu0 0
      %365 = vmatpush1.bf16.msra.mxu0 0
      %366 = vmatprep.subr.bf16.mxu0 0
      %367 = vmatpush1.bf16.msra.mxu0 0
      %368 = vmatprep.subr.bf16.mxu0 0
      %369 = vmatpush1.bf16.msra.mxu0 0
      %370 = vmatprep.subr.bf16.mxu0 0
      %371 = vmatpush1.bf16.msra.mxu0 0
      %372 = vmatprep.subr.bf16.mxu0 0
      %373 = vmatpush1.bf16.msra.mxu0 0
      %374 = vmatprep.subr.bf16.mxu0 0
      %375 = vmatpush1.bf16.msra.mxu0 0
      %376 = vmatprep.subr.bf16.mxu0 0
      %377 = vmatpush1.bf16.msra.mxu0 0
      %378 = vmatprep.subr.bf16.mxu0 0
      %379 = vmatpush1.bf16.msra.mxu0 0
      %380 = vmatprep.mubr.bf16.mxu0 0
      %381 = vmatmul.mubr.bf16.gmra.mrb[0].mxu0 %v338
      %v382 = vpop.f32.mrb[0].mxu0
      %v383 = vadd.f32 %v314, %v382
      %v384 = vpop.f32.mrb[0].mxu0
      %v385 = vpop.f32.mrb[0].mxu0
      %v386 = vadd.f32 %v317, %v385
      %v387 = vpop.f32.mrb[0].mxu0
      %388 = vmatprep.mubr.bf16.mxu0 0
      %389 = vmatmul.mubr.bf16.gmra.mrb[0].mxu0 %v340
      %v390 = vpop.f32.mrb[0].mxu0
      %v391 = vadd.f32 %v322, %v390
      %v392 = vpop.f32.mrb[0].mxu0
      %v393 = vpop.f32.mrb[0].mxu0
      %v394 = vadd.f32 %v325, %v393
      %v395 = vpop.f32.mrb[0].mxu0
      %396 = vmatprep.mubr.bf16.mxu0 0
      %397 = vmatmul.mubr.bf16.gmra.mrb[0].mxu0 %v343
      %v398 = vpop.f32.mrb[0].mxu0
      %v399 = vadd.f32 %v330, %v398
      %v400 = vpop.f32.mrb[0].mxu0
      %v401 = vpop.f32.mrb[0].mxu0
      %v402 = vpop.f32.mrb[0].mxu0
      %403 = vdwg.mxu0
      %v404 = vld [vmem:[%s203] sm:$0xe]
      %v405 = vld [vmem:[%s1 + $0x4] sm:$0x3]
      %v407 = vunpack.c.l.b16 %v404
      %v408 = vpack.c.b16 %v230, %v407
      %vm409 = vcmask 1046528
      %v410 = vrot.slane %v408, 1
      %v411 = vrot.slane %v235, 1
      %v412 = vsel %vm409, %v410, %v411
      %v413 = vrot.slane %v236, 1
      %v414 = vsel %vm409, %v411, %v413
      %v416 = vsel %vm265, %v412, 0
      %v419 = vsel %vm265, %v414, 0
      %v422 = vsel %vm265, %v413, 0
      %v425 = vsel %vm275, %v405, 0
      %427 = vmatprep.subr.bf16.mxu0 0
      %428 = vmatpush1.bf16.msra.mxu0 %v425
      %429 = vmatprep.subr.bf16.mxu0 0
      %430 = vmatpush1.bf16.msra.mxu0 0
      %431 = vmatprep.subr.bf16.mxu0 0
      %432 = vmatpush1.bf16.msra.mxu0 0
      %433 = vmatprep.subr.bf16.mxu0 0
      %434 = vmatpush1.bf16.msra.mxu0 0
      %435 = vmatprep.subr.bf16.mxu0 0
      %436 = vmatpush1.bf16.msra.mxu0 0
      %437 = vmatprep.subr.bf16.mxu0 0
      %438 = vmatpush1.bf16.msra.mxu0 0
      %439 = vmatprep.subr.bf16.mxu0 0
      %440 = vmatpush1.bf16.msra.mxu0 0
      %441 = vmatprep.subr.bf16.mxu0 0
      %442 = vmatpush1.bf16.msra.mxu0 0
      %443 = vmatprep.subr.bf16.mxu0 0
      %444 = vmatpush1.bf16.msra.mxu0 0
      %445 = vmatprep.subr.bf16.mxu0 0
      %446 = vmatpush1.bf16.msra.mxu0 0
      %447 = vmatprep.subr.bf16.mxu0 0
      %448 = vmatpush1.bf16.msra.mxu0 0
      %449 = vmatprep.subr.bf16.mxu0 0
      %450 = vmatpush1.bf16.msra.mxu0 0
      %451 = vmatprep.subr.bf16.mxu0 0
      %452 = vmatpush1.bf16.msra.mxu0 0
      %453 = vmatprep.subr.bf16.mxu0 0
      %454 = vmatpush1.bf16.msra.mxu0 0
      %455 = vmatprep.subr.bf16.mxu0 0
      %456 = vmatpush1.bf16.msra.mxu0 0
      %457 = vmatprep.subr.bf16.mxu0 0
      %458 = vmatpush1.bf16.msra.mxu0 0
      %459 = vmatprep.mubr.bf16.mxu0 0
      %460 = vmatmul.mubr.bf16.gmra.mrb[0].mxu0 %v416
      %v461 = vpop.f32.mrb[0].mxu0
      %v462 = vadd.f32 0.0, %v461
      %v463 = vpop.f32.mrb[0].mxu0
      %v464 = vpop.f32.mrb[0].mxu0
      %v465 = vadd.f32 0.0, %v464
      %v466 = vpop.f32.mrb[0].mxu0
      %467 = vmatprep.mubr.bf16.mxu0 0
      %468 = vmatmul.mubr.bf16.gmra.mrb[0].mxu0 %v419
      %v469 = vpop.f32.mrb[0].mxu0
      %v470 = vadd.f32 0.0, %v469
      %v471 = vpop.f32.mrb[0].mxu0
      %v472 = vpop.f32.mrb[0].mxu0
      %v473 = vadd.f32 0.0, %v472
      %v474 = vpop.f32.mrb[0].mxu0
      %475 = vmatprep.mubr.bf16.mxu0 0
      %476 = vmatmul.mubr.bf16.gmra.mrb[0].mxu0 %v422
      %v477 = vpop.f32.mrb[0].mxu0
      %v478 = vadd.f32 0.0, %v477
      %v479 = vpop.f32.mrb[0].mxu0
      %v480 = vpop.f32.mrb[0].mxu0
      %v481 = vpop.f32.mrb[0].mxu0
      %482 = vdwg.mxu0
      %v483 = vadd.f32 %v383, %v462
      %v484 = vadd.f32 %v386, %v465
      %v485 = vadd.f32 %v391, %v470
      %v486 = vadd.f32 %v394, %v473
      %v487 = vadd.f32 %v399, %v478
      %v488 = vld [vmem:[%s203 + $0x8] sm:$0xe]
      %v489 = vld [vmem:[%s203 + $0xc] sm:$0xf]
      %v490 = vld [vmem:[%s203 + $0x10] sm:$0xf]
      %v491 = vld [vmem:[%s203 + $0x14] sm:$0xf]
      %v492 = vld [vmem:[%s203 + $0x18] sm:$0x7]
      %v493 = vld [vmem:[%s1 + $0x4] sm:$0xc]
      %v499 = vunpack.c.l.b16 %v488
      %v500 = vunpack.c.l.b16 %v489
      %v501 = vunpack.c.l.b16 %v490
      %v502 = vunpack.c.l.b16 %v491
      %v503 = vunpack.c.l.b16 %v492
      %v504 = vpack.c.b16 %v500, %v499
      %v505 = vpack.c.b16 %v502, %v501
      %v506 = vpack.c.b16 %v503, %v503
      %v507 = vrot.slane %v504, 1
      %v508 = vrot.slane %v505, 1
      %v509 = vsel %vm409, %v507, %v508
      %v510 = vrot.slane %v506, 1
      %v511 = vsel %vm409, %v508, %v510
      %v513 = vunpack.c.l.b16 %v493
      %v514 = vpack.c.b16 %v513, %v513
      %v515 = vrot.slane %v514, 2
      %v517 = vsel %vm265, %v509, 0
      %v520 = vsel %vm265, %v511, 0
      %v523 = vsel %vm265, %v510, 0
      %v526 = vsel %vm275, %v515, 0
      %528 = vmatprep.subr.bf16.mxu0 0
      %529 = vmatpush1.bf16.msra.mxu0 %v526
      %530 = vmatprep.subr.bf16.mxu0 0
      %531 = vmatpush1.bf16.msra.mxu0 0
      %532 = vmatprep.subr.bf16.mxu0 0
      %533 = vmatpush1.bf16.msra.mxu0 0
      %534 = vmatprep.subr.bf16.mxu0 0
      %535 = vmatpush1.bf16.msra.mxu0 0
      %536 = vmatprep.subr.bf16.mxu0 0
      %537 = vmatpush1.bf16.msra.mxu0 0
      %538 = vmatprep.subr.bf16.mxu0 0
      %539 = vmatpush1.bf16.msra.mxu0 0
      %540 = vmatprep.subr.bf16.mxu0 0
      %541 = vmatpush1.bf16.msra.mxu0 0
      %542 = vmatprep.subr.bf16.mxu0 0
      %543 = vmatpush1.bf16.msra.mxu0 0
      %544 = vmatprep.subr.bf16.mxu0 0
      %545 = vmatpush1.bf16.msra.mxu0 0
      %546 = vmatprep.subr.bf16.mxu0 0
      %547 = vmatpush1.bf16.msra.mxu0 0
      %548 = vmatprep.subr.bf16.mxu0 0
      %549 = vmatpush1.bf16.msra.mxu0 0
      %550 = vmatprep.subr.bf16.mxu0 0
      %551 = vmatpush1.bf16.msra.mxu0 0
      %552 = vmatprep.subr.bf16.mxu0 0
      %553 = vmatpush1.bf16.msra.mxu0 0
      %554 = vmatprep.subr.bf16.mxu0 0
      %555 = vmatpush1.bf16.msra.mxu0 0
      %556 = vmatprep.subr.bf16.mxu0 0
      %557 = vmatpush1.bf16.msra.mxu0 0
      %558 = vmatprep.subr.bf16.mxu0 0
      %559 = vmatpush1.bf16.msra.mxu0 0
      %560 = vmatprep.mubr.bf16.mxu0 0
      %561 = vmatmul.mubr.bf16.gmra.mrb[0].mxu0 %v517
      %v562 = vpop.f32.mrb[0].mxu0
      %v563 = vadd.f32 0.0, %v562
      %v564 = vpop.f32.mrb[0].mxu0
      %v565 = vpop.f32.mrb[0].mxu0
      %v566 = vadd.f32 0.0, %v565
      %v567 = vpop.f32.mrb[0].mxu0
      %568 = vmatprep.mubr.bf16.mxu0 0
      %569 = vmatmul.mubr.bf16.gmra.mrb[0].mxu0 %v520
      %v570 = vpop.f32.mrb[0].mxu0
      %v571 = vadd.f32 0.0, %v570
      %v572 = vpop.f32.mrb[0].mxu0
      %v573 = vpop.f32.mrb[0].mxu0
      %v574 = vadd.f32 0.0, %v573
      %v575 = vpop.f32.mrb[0].mxu0
      %576 = vmatprep.mubr.bf16.mxu0 0
      %577 = vmatmul.mubr.bf16.gmra.mrb[0].mxu0 %v523
      %v578 = vpop.f32.mrb[0].mxu0
      %v579 = vadd.f32 0.0, %v578
      %v580 = vpop.f32.mrb[0].mxu0
      %v581 = vpop.f32.mrb[0].mxu0
      %v582 = vpop.f32.mrb[0].mxu0
      %583 = vdwg.mxu0
      %v584 = vadd.f32 %v483, %v563
      %v585 = vadd.f32 %v484, %v566
      %v586 = vadd.f32 %v485, %v571
      %v587 = vadd.f32 %v486, %v574
      %v588 = vadd.f32 %v487, %v579
      %v589 = vld [vmem:[%s203 + $0x18] sm:$0xf]
      %v590 = vld [vmem:[%s1 + $0x8] sm:$0x3]
      %v592 = vunpack.c.l.b16 %v589
      %v593 = vpack.c.b16 %v592, %v592
      %vm594 = vsmask.f32 6400
      %v596 = vshrl.u32 %v504, 16
      %v598 = vrot.slane %v596, 1
      %v599 = vshll.u32 %v504, 16
      %v601 = vrot.slane %v599, 2
      %v602 = vor.u32 %v598, %v601
      %v604 = vshrl.u32 %v505, 16
      %v606 = vrot.slane %v604, 1
      %v607 = vshll.u32 %v505, 16
      %v609 = vrot.slane %v607, 2
      %v610 = vor.u32 %v606, %v609
      %v611 = vsel %vm594, %v602, %v610
      %v613 = vshrl.u32 %v593, 16
      %v615 = vrot.slane %v613, 1
      %v616 = vshll.u32 %v593, 16
      %v618 = vrot.slane %v616, 2
      %v619 = vor.u32 %v615, %v618
      %v620 = vsel %vm594, %v610, %v619
      %v622 = vsel %vm265, %v611, 0
      %v625 = vsel %vm265, %v620, 0
      %v628 = vsel %vm265, %v619, 0
      %v631 = vsel %vm275, %v590, 0
      %633 = vmatprep.subr.bf16.mxu0 0
      %634 = vmatpush1.bf16.msra.mxu0 %v631
      %635 = vmatprep.subr.bf16.mxu0 0
      %636 = vmatpush1.bf16.msra.mxu0 0
      %637 = vmatprep.subr.bf16.mxu0 0
      %638 = vmatpush1.bf16.msra.mxu0 0
      %639 = vmatprep.subr.bf16.mxu0 0
      %640 = vmatpush1.bf16.msra.mxu0 0
      %641 = vmatprep.subr.bf16.mxu0 0
      %642 = vmatpush1.bf16.msra.mxu0 0
      %643 = vmatprep.subr.bf16.mxu0 0
      %644 = vmatpush1.bf16.msra.mxu0 0
      %645 = vmatprep.subr.bf16.mxu0 0
      %646 = vmatpush1.bf16.msra.mxu0 0
      %647 = vmatprep.subr.bf16.mxu0 0
      %648 = vmatpush1.bf16.msra.mxu0 0
      %649 = vmatprep.subr.bf16.mxu0 0
      %650 = vmatpush1.bf16.msra.mxu0 0
      %651 = vmatprep.subr.bf16.mxu0 0
      %652 = vmatpush1.bf16.msra.mxu0 0
      %653 = vmatprep.subr.bf16.mxu0 0
      %654 = vmatpush1.bf16.msra.mxu0 0
      %655 = vmatprep.subr.bf16.mxu0 0
      %656 = vmatpush1.bf16.msra.mxu0 0
      %657 = vmatprep.subr.bf16.mxu0 0
      %658 = vmatpush1.bf16.msra.mxu0 0
      %659 = vmatprep.subr.bf16.mxu0 0
      %660 = vmatpush1.bf16.msra.mxu0 0
      %661 = vmatprep.subr.bf16.mxu0 0
      %662 = vmatpush1.bf16.msra.mxu0 0
      %663 = vmatprep.subr.bf16.mxu0 0
      %664 = vmatpush1.bf16.msra.mxu0 0
      %665 = vmatprep.mubr.bf16.mxu0 0
      %666 = vmatmul.mubr.bf16.gmra.mrb[0].mxu0 %v622
      %v667 = vpop.f32.mrb[0].mxu0
      %v668 = vadd.f32 0.0, %v667
      %v669 = vpop.f32.mrb[0].mxu0
      %v670 = vpop.f32.mrb[0].mxu0
      %v671 = vadd.f32 0.0, %v670
      %v672 = vpop.f32.mrb[0].mxu0
      %673 = vmatprep.mubr.bf16.mxu0 0
      %674 = vmatmul.mubr.bf16.gmra.mrb[0].mxu0 %v625
      %v675 = vpop.f32.mrb[0].mxu0
      %v676 = vadd.f32 0.0, %v675
      %v677 = vpop.f32.mrb[0].mxu0
      %v678 = vpop.f32.mrb[0].mxu0
      %v679 = vadd.f32 0.0, %v678
      %v680 = vpop.f32.mrb[0].mxu0
      %681 = vmatprep.mubr.bf16.mxu0 0
      %682 = vmatmul.mubr.bf16.gmra.mrb[0].mxu0 %v628
      %v683 = vpop.f32.mrb[0].mxu0
      %v684 = vadd.f32 0.0, %v683
      %v685 = vpop.f32.mrb[0].mxu0
      %v686 = vpop.f32.mrb[0].mxu0
      %v687 = vpop.f32.mrb[0].mxu0
      %688 = vdwg.mxu0
      %v689 = vadd.f32 %v584, %v668
      %v690 = vadd.f32 %v585, %v671
      %v691 = vadd.f32 %v586, %v676
      %v692 = vadd.f32 %v587, %v679
      %v693 = vadd.f32 %v588, %v684
      %v694 = vld [vmem:[%s203 + $0x8] sm:$0xc]
      %v695 = vld [vmem:[%s1 + $0x8] sm:$0xc]
      %v697 = vunpack.c.l.b16 %v694
      %v698 = vpack.c.b16 %v500, %v697
      %vm699 = vcmask 1045504
      %v700 = vrot.slane %v698, 2
      %v701 = vrot.slane %v505, 2
      %v702 = vsel %vm699, %v700, %v701
      %v703 = vrot.slane %v593, 2
      %v704 = vsel %vm699, %v701, %v703
      %v706 = vunpack.c.l.b16 %v695
      %v707 = vpack.c.b16 %v706, %v706
      %v708 = vrot.slane %v707, 2
      %v710 = vsel %vm265, %v702, 0
      %v713 = vsel %vm265, %v704, 0
      %v716 = vsel %vm265, %v703, 0
      %v719 = vsel %vm275, %v708, 0
      %721 = vmatprep.subr.bf16.mxu0 0
      %722 = vmatpush1.bf16.msra.mxu0 %v719
      %723 = vmatprep.subr.bf16.mxu0 0
      %724 = vmatpush1.bf16.msra.mxu0 0
      %725 = vmatprep.subr.bf16.mxu0 0
      %726 = vmatpush1.bf16.msra.mxu0 0
      %727 = vmatprep.subr.bf16.mxu0 0
      %728 = vmatpush1.bf16.msra.mxu0 0
      %729 = vmatprep.subr.bf16.mxu0 0
      %730 = vmatpush1.bf16.msra.mxu0 0
      %731 = vmatprep.subr.bf16.mxu0 0
      %732 = vmatpush1.bf16.msra.mxu0 0
      %733 = vmatprep.subr.bf16.mxu0 0
      %734 = vmatpush1.bf16.msra.mxu0 0
      %735 = vmatprep.subr.bf16.mxu0 0
      %736 = vmatpush1.bf16.msra.mxu0 0
      %737 = vmatprep.subr.bf16.mxu0 0
      %738 = vmatpush1.bf16.msra.mxu0 0
      %739 = vmatprep.subr.bf16.mxu0 0
      %740 = vmatpush1.bf16.msra.mxu0 0
      %741 = vmatprep.subr.bf16.mxu0 0
      %742 = vmatpush1.bf16.msra.mxu0 0
      %743 = vmatprep.subr.bf16.mxu0 0
      %744 = vmatpush1.bf16.msra.mxu0 0
      %745 = vmatprep.subr.bf16.mxu0 0
      %746 = vmatpush1.bf16.msra.mxu0 0
      %747 = vmatprep.subr.bf16.mxu0 0
      %748 = vmatpush1.bf16.msra.mxu0 0
      %749 = vmatprep.subr.bf16.mxu0 0
      %750 = vmatpush1.bf16.msra.mxu0 0
      %751 = vmatprep.subr.bf16.mxu0 0
      %752 = vmatpush1.bf16.msra.mxu0 0
      %753 = vmatprep.mubr.bf16.mxu0 0
      %754 = vmatmul.mubr.bf16.gmra.mrb[0].mxu0 %v710
      %v755 = vpop.f32.mrb[0].mxu0
      %v756 = vadd.f32 0.0, %v755
      %v757 = vpop.f32.mrb[0].mxu0
      %v758 = vpop.f32.mrb[0].mxu0
      %v759 = vadd.f32 0.0, %v758
      %v760 = vpop.f32.mrb[0].mxu0
      %761 = vmatprep.mubr.bf16.mxu0 0
      %762 = vmatmul.mubr.bf16.gmra.mrb[0].mxu0 %v713
      %v763 = vpop.f32.mrb[0].mxu0
      %v764 = vadd.f32 0.0, %v763
      %v765 = vpop.f32.mrb[0].mxu0
      %v766 = vpop.f32.mrb[0].mxu0
      %v767 = vadd.f32 0.0, %v766
      %v768 = vpop.f32.mrb[0].mxu0
      %769 = vmatprep.mubr.bf16.mxu0 0
      %770 = vmatmul.mubr.bf16.gmra.mrb[0].mxu0 %v716
      %v771 = vpop.f32.mrb[0].mxu0
      %v772 = vadd.f32 0.0, %v771
      %v773 = vpop.f32.mrb[0].mxu0
      %v774 = vpop.f32.mrb[0].mxu0
      %v775 = vpop.f32.mrb[0].mxu0
      %776 = vdwg.mxu0
      %v777 = vadd.f32 %v689, %v756
      %v778 = vadd.f32 %v690, %v759
      %v779 = vadd.f32 %v691, %v764
      %v780 = vadd.f32 %v692, %v767
      %v781 = vadd.f32 %v693, %v772
      %v782 = vld [vmem:[%s203 + $0x10] sm:$0xc]
      %v783 = vld [vmem:[%s203 + $0x14] sm:$0xf]
      %v784 = vld [vmem:[%s203 + $0x18] sm:$0xf]
      %v785 = vld [vmem:[%s203 + $0x1c] sm:$0xf]
      %v786 = vld [vmem:[%s203 + $0x20] sm:$0xf]
      %v787 = vld [vmem:[%s1 + $0xc] sm:$0x3]
      %v793 = vunpack.c.l.b16 %v782
      %v794 = vunpack.c.l.b16 %v783
      %v795 = vunpack.c.l.b16 %v784
      %v796 = vunpack.c.l.b16 %v785
      %v797 = vunpack.c.l.b16 %v786
      %v798 = vpack.c.b16 %v794, %v793
      %v799 = vpack.c.b16 %v796, %v795
      %v800 = vpack.c.b16 %v797, %v797
      %v801 = vrot.slane %v798, 2
      %v802 = vrot.slane %v799, 2
      %v803 = vsel %vm699, %v801, %v802
      %v804 = vrot.slane %v800, 2
      %v805 = vsel %vm699, %v802, %v804
      %v807 = vsel %vm265, %v803, 0
      %v810 = vsel %vm265, %v805, 0
      %v813 = vsel %vm265, %v804, 0
      %v816 = vsel %vm275, %v787, 0
      %818 = vmatprep.subr.bf16.mxu0 0
      %819 = vmatpush1.bf16.msra.mxu0 %v816
      %820 = vmatprep.subr.bf16.mxu0 0
      %821 = vmatpush1.bf16.msra.mxu0 0
      %822 = vmatprep.subr.bf16.mxu0 0
      %823 = vmatpush1.bf16.msra.mxu0 0
      %824 = vmatprep.subr.bf16.mxu0 0
      %825 = vmatpush1.bf16.msra.mxu0 0
      %826 = vmatprep.subr.bf16.mxu0 0
      %827 = vmatpush1.bf16.msra.mxu0 0
      %828 = vmatprep.subr.bf16.mxu0 0
      %829 = vmatpush1.bf16.msra.mxu0 0
      %830 = vmatprep.subr.bf16.mxu0 0
      %831 = vmatpush1.bf16.msra.mxu0 0
      %832 = vmatprep.subr.bf16.mxu0 0
      %833 = vmatpush1.bf16.msra.mxu0 0
      %834 = vmatprep.subr.bf16.mxu0 0
      %835 = vmatpush1.bf16.msra.mxu0 0
      %836 = vmatprep.subr.bf16.mxu0 0
      %837 = vmatpush1.bf16.msra.mxu0 0
      %838 = vmatprep.subr.bf16.mxu0 0
      %839 = vmatpush1.bf16.msra.mxu0 0
      %840 = vmatprep.subr.bf16.mxu0 0
      %841 = vmatpush1.bf16.msra.mxu0 0
      %842 = vmatprep.subr.bf16.mxu0 0
      %843 = vmatpush1.bf16.msra.mxu0 0
      %844 = vmatprep.subr.bf16.mxu0 0
      %845 = vmatpush1.bf16.msra.mxu0 0
      %846 = vmatprep.subr.bf16.mxu0 0
      %847 = vmatpush1.bf16.msra.mxu0 0
      %848 = vmatprep.subr.bf16.mxu0 0
      %849 = vmatpush1.bf16.msra.mxu0 0
      %850 = vmatprep.mubr.bf16.mxu0 0
      %851 = vmatmul.mubr.bf16.gmra.mrb[0].mxu0 %v807
      %v852 = vpop.f32.mrb[0].mxu0
      %v853 = vadd.f32 0.0, %v852
      %v854 = vpop.f32.mrb[0].mxu0
      %v855 = vpop.f32.mrb[0].mxu0
      %v856 = vadd.f32 0.0, %v855
      %v857 = vpop.f32.mrb[0].mxu0
      %858 = vmatprep.mubr.bf16.mxu0 0
      %859 = vmatmul.mubr.bf16.gmra.mrb[0].mxu0 %v810
      %v860 = vpop.f32.mrb[0].mxu0
      %v861 = vadd.f32 0.0, %v860
      %v862 = vpop.f32.mrb[0].mxu0
      %v863 = vpop.f32.mrb[0].mxu0
      %v864 = vadd.f32 0.0, %v863
      %v865 = vpop.f32.mrb[0].mxu0
      %866 = vmatprep.mubr.bf16.mxu0 0
      %867 = vmatmul.mubr.bf16.gmra.mrb[0].mxu0 %v813
      %v868 = vpop.f32.mrb[0].mxu0
      %v869 = vadd.f32 0.0, %v868
      %v870 = vpop.f32.mrb[0].mxu0
      %v871 = vpop.f32.mrb[0].mxu0
      %v872 = vpop.f32.mrb[0].mxu0
      %873 = vdwg.mxu0
      %v874 = vadd.f32 %v777, %v853
      %v875 = vadd.f32 %v778, %v856
      %v876 = vadd.f32 %v779, %v861
      %v877 = vadd.f32 %v780, %v864
      %v878 = vadd.f32 %v781, %v869
      %v879 = vld [vmem:[%s203 + $0x10] sm:$0xc]
      %v880 = vld [vmem:[%s203 + $0x14] sm:$0xf]
      %v881 = vld [vmem:[%s203 + $0x18] sm:$0xf]
      %v882 = vld [vmem:[%s203 + $0x1c] sm:$0xf]
      %v883 = vld [vmem:[%s203 + $0x20] sm:$0xf]
      %v884 = vld [vmem:[%s203 + $0x24] sm:$0x1]
      %v885 = vld [vmem:[%s1 + $0xc] sm:$0xc]
      %v892 = vunpack.c.l.b16 %v879
      %v893 = vunpack.c.l.b16 %v880
      %v894 = vunpack.c.l.b16 %v881
      %v895 = vunpack.c.l.b16 %v882
      %v896 = vunpack.c.l.b16 %v883
      %v897 = vunpack.c.l.b16 %v884
      %v898 = vpack.c.b16 %v893, %v892
      %v899 = vpack.c.b16 %v895, %v894
      %v900 = vpack.c.b16 %v897, %v896
      %vm901 = vsmask.f32 5376
      %v903 = vshrl.u32 %v898, 16
      %v905 = vrot.slane %v903, 2
      %v906 = vshll.u32 %v898, 16
      %v908 = vrot.slane %v906, 3
      %v909 = vor.u32 %v905, %v908
      %v911 = vshrl.u32 %v899, 16
      %v913 = vrot.slane %v911, 2
      %v914 = vshll.u32 %v899, 16
      %v916 = vrot.slane %v914, 3
      %v917 = vor.u32 %v913, %v916
      %v918 = vsel %vm901, %v909, %v917
      %v920 = vshrl.u32 %v900, 16
      %v922 = vrot.slane %v920, 2
      %v923 = vshll.u32 %v900, 16
      %v925 = vrot.slane %v923, 3
      %v926 = vor.u32 %v922, %v925
      %v927 = vsel %vm901, %v917, %v926
      %v929 = vunpack.c.l.b16 %v885
      %v930 = vpack.c.b16 %v929, %v929
      %v931 = vrot.slane %v930, 2
      %v933 = vsel %vm265, %v918, 0
      %v936 = vsel %vm265, %v927, 0
      %v939 = vsel %vm265, %v926, 0
      %v942 = vsel %vm275, %v931, 0
      %944 = vmatprep.subr.bf16.mxu0 0
      %945 = vmatpush1.bf16.msra.mxu0 %v942
      %946 = vmatprep.subr.bf16.mxu0 0
      %947 = vmatpush1.bf16.msra.mxu0 0
      %948 = vmatprep.subr.bf16.mxu0 0
      %949 = vmatpush1.bf16.msra.mxu0 0
      %950 = vmatprep.subr.bf16.mxu0 0
      %951 = vmatpush1.bf16.msra.mxu0 0
      %952 = vmatprep.subr.bf16.mxu0 0
      %953 = vmatpush1.bf16.msra.mxu0 0
      %954 = vmatprep.subr.bf16.mxu0 0
      %955 = vmatpush1.bf16.msra.mxu0 0
      %956 = vmatprep.subr.bf16.mxu0 0
      %957 = vmatpush1.bf16.msra.mxu0 0
      %958 = vmatprep.subr.bf16.mxu0 0
      %959 = vmatpush1.bf16.msra.mxu0 0
      %960 = vmatprep.subr.bf16.mxu0 0
      %961 = vmatpush1.bf16.msra.mxu0 0
      %962 = vmatprep.subr.bf16.mxu0 0
      %963 = vmatpush1.bf16.msra.mxu0 0
      %964 = vmatprep.subr.bf16.mxu0 0
      %965 = vmatpush1.bf16.msra.mxu0 0
      %966 = vmatprep.subr.bf16.mxu0 0
      %967 = vmatpush1.bf16.msra.mxu0 0
      %968 = vmatprep.subr.bf16.mxu0 0
      %969 = vmatpush1.bf16.msra.mxu0 0
      %970 = vmatprep.subr.bf16.mxu0 0
      %971 = vmatpush1.bf16.msra.mxu0 0
      %972 = vmatprep.subr.bf16.mxu0 0
      %973 = vmatpush1.bf16.msra.mxu0 0
      %974 = vmatprep.subr.bf16.mxu0 0
      %975 = vmatpush1.bf16.msra.mxu0 0
      %976 = vmatprep.mubr.bf16.mxu0 0
      %977 = vmatmul.mubr.bf16.gmra.mrb[0].mxu0 %v933
      %v978 = vpop.f32.mrb[0].mxu0
      %v979 = vadd.f32 0.0, %v978
      %v980 = vpop.f32.mrb[0].mxu0
      %v981 = vpop.f32.mrb[0].mxu0
      %v982 = vadd.f32 0.0, %v981
      %v983 = vpop.f32.mrb[0].mxu0
      %984 = vmatprep.mubr.bf16.mxu0 0
      %985 = vmatmul.mubr.bf16.gmra.mrb[0].mxu0 %v936
      %v986 = vpop.f32.mrb[0].mxu0
      %v987 = vadd.f32 0.0, %v986
      %v988 = vpop.f32.mrb[0].mxu0
      %v989 = vpop.f32.mrb[0].mxu0
      %v990 = vadd.f32 0.0, %v989
      %v991 = vpop.f32.mrb[0].mxu0
      %992 = vmatprep.mubr.bf16.mxu0 0
      %993 = vmatmul.mubr.bf16.gmra.mrb[0].mxu0 %v939
      %v994 = vpop.f32.mrb[0].mxu0
      %v995 = vadd.f32 0.0, %v994
      %v996 = vpop.f32.mrb[0].mxu0
      %v997 = vpop.f32.mrb[0].mxu0
      %v998 = vpop.f32.mrb[0].mxu0
      %999 = vdwg.mxu0
      %v1000 = vadd.f32 %v874, %v979
      %v1001 = vadd.f32 %v875, %v982
      %v1002 = vadd.f32 %v876, %v987
      %v1003 = vadd.f32 %v877, %v990
      %v1004 = vadd.f32 %v878, %v995
      %v1005 = vld [vmem:[%s203 + $0x10] sm:$0x8]
      %v1006 = vld [vmem:[%s1 + $0x10] sm:$0x3]
      %v1008 = vunpack.c.l.b16 %v1005
      %v1009 = vpack.c.b16 %v893, %v1008
      %vm1010 = vcmask 1044480
      %v1011 = vrot.slane %v1009, 3
      %v1012 = vrot.slane %v899, 3
      %v1013 = vsel %vm1010, %v1011, %v1012
      %v1014 = vrot.slane %v900, 3
      %v1015 = vsel %vm1010, %v1012, %v1014
      %v1017 = vsel %vm265, %v1013, 0
      %v1020 = vsel %vm265, %v1015, 0
      %v1023 = vsel %vm265, %v1014, 0
      %v1026 = vsel %vm275, %v1006, 0
      %1028 = vmatprep.subr.bf16.mxu0 0
      %1029 = vmatpush1.bf16.msra.mxu0 %v1026
      %1030 = vmatprep.subr.bf16.mxu0 0
      %1031 = vmatpush1.bf16.msra.mxu0 0
      %1032 = vmatprep.subr.bf16.mxu0 0
      %1033 = vmatpush1.bf16.msra.mxu0 0
      %1034 = vmatprep.subr.bf16.mxu0 0
      %1035 = vmatpush1.bf16.msra.mxu0 0
      %1036 = vmatprep.subr.bf16.mxu0 0
      %1037 = vmatpush1.bf16.msra.mxu0 0
      %1038 = vmatprep.subr.bf16.mxu0 0
      %1039 = vmatpush1.bf16.msra.mxu0 0
      %1040 = vmatprep.subr.bf16.mxu0 0
      %1041 = vmatpush1.bf16.msra.mxu0 0
      %1042 = vmatprep.subr.bf16.mxu0 0
      %1043 = vmatpush1.bf16.msra.mxu0 0
      %1044 = vmatprep.subr.bf16.mxu0 0
      %1045 = vmatpush1.bf16.msra.mxu0 0
      %1046 = vmatprep.subr.bf16.mxu0 0
      %1047 = vmatpush1.bf16.msra.mxu0 0
      %1048 = vmatprep.subr.bf16.mxu0 0
      %1049 = vmatpush1.bf16.msra.mxu0 0
      %1050 = vmatprep.subr.bf16.mxu0 0
      %1051 = vmatpush1.bf16.msra.mxu0 0
      %1052 = vmatprep.subr.bf16.mxu0 0
      %1053 = vmatpush1.bf16.msra.mxu0 0
      %1054 = vmatprep.subr.bf16.mxu0 0
      %1055 = vmatpush1.bf16.msra.mxu0 0
      %1056 = vmatprep.subr.bf16.mxu0 0
      %1057 = vmatpush1.bf16.msra.mxu0 0
      %1058 = vmatprep.subr.bf16.mxu0 0
      %1059 = vmatpush1.bf16.msra.mxu0 0
      %1060 = vmatprep.mubr.bf16.mxu0 0
      %1061 = vmatmul.mubr.bf16.gmra.mrb[0].mxu0 %v1017
      %v1062 = vpop.f32.mrb[0].mxu0
      %v1063 = vadd.f32 0.0, %v1062
      %v1064 = vpop.f32.mrb[0].mxu0
      %v1065 = vpop.f32.mrb[0].mxu0
      %v1066 = vadd.f32 0.0, %v1065
      %v1067 = vpop.f32.mrb[0].mxu0
      %1068 = vmatprep.mubr.bf16.mxu0 0
      %1069 = vmatmul.mubr.bf16.gmra.mrb[0].mxu0 %v1020
      %v1070 = vpop.f32.mrb[0].mxu0
      %v1071 = vadd.f32 0.0, %v1070
      %v1072 = vpop.f32.mrb[0].mxu0
      %v1073 = vpop.f32.mrb[0].mxu0
      %v1074 = vadd.f32 0.0, %v1073
      %v1075 = vpop.f32.mrb[0].mxu0
      %1076 = vmatprep.mubr.bf16.mxu0 0
      %1077 = vmatmul.mubr.bf16.gmra.mrb[0].mxu0 %v1023
      %v1078 = vpop.f32.mrb[0].mxu0
      %v1079 = vadd.f32 0.0, %v1078
      %v1080 = vpop.f32.mrb[0].mxu0
      %v1081 = vpop.f32.mrb[0].mxu0
      %v1082 = vpop.f32.mrb[0].mxu0
      %1083 = vdwg.mxu0
      %v1084 = vadd.f32 %v1000, %v1063
      %v1085 = vadd.f32 %v1001, %v1066
      %v1086 = vadd.f32 %v1002, %v1071
      %v1087 = vadd.f32 %v1003, %v1074
      %v1088 = vadd.f32 %v1004, %v1079
      %v1089 = vpack.c.bf16 %v1085, %v1084
      %v1090 = vpack.c.bf16 %v1087, %v1086
      %v1091 = vpack.c.bf16 %v1088, %v1088
      %v1095 = vunpack.c.l.b16 %v1089
      %v1096 = vunpack.c.h.b16 %v1089
      %v1097 = vunpack.c.l.b16 %v1090
      %v1098 = vunpack.c.h.b16 %v1090
      %v1099 = vunpack.c.l.b16 %v1091
      %v1100 = vpack.c.b16 %v1095, %v1095
      %v1101 = vpack.c.b16 %v1096, %v1096
      %v1102 = vpack.c.b16 %v1097, %v1097
      %v1103 = vpack.c.b16 %v1098, %v1098
      %v1104 = vpack.c.b16 %v1099, %v1099
      %1110 = vst [vmem:[%s208] sm:$0xf] %v1100
      %1111 = vst [vmem:[%s208 + $0x4] sm:$0xf] %v1101
      %1112 = vst [vmem:[%s208 + $0x8] sm:$0xf] %v1102
      %1113 = vst [vmem:[%s208 + $0xc] sm:$0xf] %v1103
      %1114 = vst [vmem:[%s208 + $0x10] sm:$0x3] %v1104
      %v1115 = vlaneseq
      %v1116 = vshrl.u32 %v1115, 7
      %v1117 = vadd.s32 %v1116, 8
      %v1118 = vadd.s32 %v1116, 16
      %v1119 = vadd.s32 %v1116, 24
      %v1120 = vadd.s32 %v1116, 32
      %vm1121 = vcmp.lt.s32.totalorder %v1116, 0
      %v1122 = vsub.s32 0, %v1116
      %v1123 = vsel %vm1121, %v1122, %v1116
      %v1124 = vmul.u32.u64.compose %v1123, 3817748708
      %v1125 = vextract.low.u32 %v1124
      %v1126 = vextract.high.u32 %v1124
      %v1127 = vshrl.u32 %v1126, 4
      %v1128 = vmul.u32 %v1127, 18
      %v1129 = vsub.s32 %v1123, %v1128
      %v1130 = vsub.s32 0, %v1129
      %v1131 = vsel %vm1121, %v1130, %v1129
      %vm1132 = vcmp.lt.s32.totalorder %v1117, 0
      %v1133 = vsub.s32 0, %v1117
      %v1134 = vsel %vm1132, %v1133, %v1117
      %v1135 = vmul.u32.u64.compose %v1134, 3817748708
      %v1136 = vextract.low.u32 %v1135
      %v1137 = vextract.high.u32 %v1135
      %v1138 = vshrl.u32 %v1137, 4
      %v1139 = vmul.u32 %v1138, 18
      %v1140 = vsub.s32 %v1134, %v1139
      %v1141 = vsub.s32 0, %v1140
      %v1142 = vsel %vm1132, %v1141, %v1140
      %vm1143 = vcmp.lt.s32.totalorder %v1118, 0
      %v1144 = vsub.s32 0, %v1118
      %v1145 = vsel %vm1143, %v1144, %v1118
      %v1146 = vmul.u32.u64.compose %v1145, 3817748708
      %v1147 = vextract.low.u32 %v1146
      %v1148 = vextract.high.u32 %v1146
      %v1149 = vshrl.u32 %v1148, 4
      %v1150 = vmul.u32 %v1149, 18
      %v1151 = vsub.s32 %v1145, %v1150
      %v1152 = vsub.s32 0, %v1151
      %v1153 = vsel %vm1143, %v1152, %v1151
      %vm1154 = vcmp.lt.s32.totalorder %v1119, 0
      %v1155 = vsub.s32 0, %v1119
      %v1156 = vsel %vm1154, %v1155, %v1119
      %v1157 = vmul.u32.u64.compose %v1156, 3817748708
      %v1158 = vextract.low.u32 %v1157
      %v1159 = vextract.high.u32 %v1157
      %v1160 = vshrl.u32 %v1159, 4
      %v1161 = vmul.u32 %v1160, 18
      %v1162 = vsub.s32 %v1156, %v1161
      %v1163 = vsub.s32 0, %v1162
      %v1164 = vsel %vm1154, %v1163, %v1162
      %vm1165 = vcmp.lt.s32.totalorder %v1120, 0
      %v1166 = vsub.s32 0, %v1120
      %v1167 = vsel %vm1165, %v1166, %v1120
      %v1168 = vmul.u32.u64.compose %v1167, 3817748708
      %v1169 = vextract.low.u32 %v1168
      %v1170 = vextract.high.u32 %v1168
      %v1171 = vshrl.u32 %v1170, 4
      %v1172 = vmul.u32 %v1171, 18
      %v1173 = vsub.s32 %v1167, %v1172
      %v1174 = vsub.s32 0, %v1173
      %v1175 = vsel %vm1165, %v1174, %v1173
      %vm1176 = vcmp.ne.s32.totalorder %v1131, 0
      %vm1177 = vcmp.ne.s32.totalorder %v1142, 0
      %vm1178 = vcmp.ne.s32.totalorder %v1153, 0
      %vm1179 = vcmp.ne.s32.totalorder %v1164, 0
      %vm1180 = vcmp.ne.s32.totalorder %v1175, 0
      %vm1181 = vcmp.lt.s32.totalorder %v1131, 0
      %vm1182 = vcmp.lt.s32.totalorder %v1142, 0
      %vm1183 = vcmp.lt.s32.totalorder %v1153, 0
      %vm1184 = vcmp.lt.s32.totalorder %v1164, 0
      %vm1185 = vcmp.lt.s32.totalorder %v1175, 0
      %vm1186 = vmand %vm1181, %vm1176
      %vm1187 = vmand %vm1182, %vm1177
      %vm1188 = vmand %vm1183, %vm1178
      %vm1189 = vmand %vm1184, %vm1179
      %vm1190 = vmand %vm1185, %vm1180
      %v1191 = vadd.s32 %v1131, 18
      %v1192 = vadd.s32 %v1142, 18
      %v1193 = vadd.s32 %v1153, 18
      %v1194 = vadd.s32 %v1164, 18
      %v1195 = vadd.s32 %v1175, 18
      %v1196 = vsel %vm1186, %v1191, %v1131
      %v1197 = vsel %vm1187, %v1192, %v1142
      %v1198 = vsel %vm1188, %v1193, %v1153
      %v1199 = vsel %vm1189, %v1194, %v1164
      %v1200 = vsel %vm1190, %v1195, %v1175
      %vm1201 = vcmp.lt.s32.totalorder %v1196, 16
      %vm1202 = vcmp.lt.s32.totalorder %v1197, 16
      %vm1203 = vcmp.lt.s32.totalorder %v1198, 16
      %vm1204 = vcmp.lt.s32.totalorder %v1199, 16
      %vm1205 = vcmp.lt.s32.totalorder %v1200, 16
      %v1206 = vsel %vm1201, %v1084, 0.0
      %v1207 = vsel %vm1202, %v1085, 0.0
      %v1208 = vsel %vm1203, %v1086, 0.0
      %v1209 = vsel %vm1204, %v1087, 0.0
      %v1210 = vsel %vm1205, %v1088, 0.0
      %v1211 = vadd.f32 %v1206, %v1207
      %v1212 = vadd.f32 %v1211, %v1208
      %v1213 = vadd.f32 %v1212, %v1209
      %vm1214 = vcmask 1043456
      %v1215 = vsel %vm1214, %v1210, 0.0
      %v1216 = vadd.f32 %v1213, %v1215
      %v1217 = vrot.slane %v1216, 4
      %v1218 = vadd.f32 %v1216, %v1217
      %v1219 = vrot.slane %v1218, 2
      %v1220 = vadd.f32 %v1218, %v1219
      %v1221 = vrot.slane %v1220, 1
      %v1222 = vadd.f32 %v1220, %v1221
      %1223 = vst [vmem:[%s211] sm:$0x1] %v1222
      %v1224 = vmul.f32 %v1206, %v1206
      %v1225 = vmul.f32 %v1207, %v1207
      %v1226 = vmul.f32 %v1208, %v1208
      %v1227 = vmul.f32 %v1209, %v1209
      %v1228 = vmul.f32 %v1210, %v1210
      %v1229 = vadd.f32 %v1224, %v1225
      %v1230 = vadd.f32 %v1229, %v1226
      %v1231 = vadd.f32 %v1230, %v1227
      %v1232 = vsel %vm1214, %v1228, 0.0
      %v1233 = vadd.f32 %v1231, %v1232
      %v1234 = vrot.slane %v1233, 4
      %v1235 = vadd.f32 %v1233, %v1234
      %v1236 = vrot.slane %v1235, 2
      %v1237 = vadd.f32 %v1235, %v1236
      %v1238 = vrot.slane %v1237, 1
      %v1239 = vadd.f32 %v1237, %v1238
      %1240 = vst [vmem:[%s214] sm:$0x1] %v1239
      %p1241 = scmp.lt.s32.totalorder %s16, 15
      %s1242 = scalar_select %p1241, %s16, 15
      %s1243 = smul.addr %s1242, 5
      %s1244 = smul.addr %s1243, 4
      %s1245 = scalar_lea.vmem %s2, %s1244
      %p1246 = scmp.lt.s32.totalorder %s16, 15
      %s1247 = scalar_select %p1246, %s16, 15
      %s1248 = scalar_lea.vmem %s3, %s1247
      %p1249 = scmp.lt.s32.totalorder %s16, 15
      %s1250 = scalar_select %p1249, %s16, 15
      %s1251 = scalar_lea.vmem %s4, %s1250
      // Predicated region
      $region29: #{resblock_forward.5} parent=27 // pred_check
        %p1252 = pneg %p81
      $region30: #{resblock_forward.5} parent=27 // pred_check_branch
        %1254 = sbr.rel (%p1252) target = $region32
      $region31: #{resblock_forward.5} parent=27 // pred_region
        _
      $region32: #{resblock_forward.5} parent=27 // pred_fallthru
        _
      // Predicated region
      $region33: #{resblock_forward.5} parent=27 // pred_check
        %p1255 = pneg %p107
      $region34: #{resblock_forward.5} parent=27 // pred_check_branch
        %1257 = sbr.rel (%p1255) target = $region36
      $region35: #{resblock_forward.5} parent=27 // pred_region
        _
      $region36: #{resblock_forward.5} parent=27 // pred_fallthru
        _
      // Predicated region
      $region37: #{resblock_forward.5} parent=27 // pred_check
        %p1258 = pneg %p133
      $region38: #{resblock_forward.5} parent=27 // pred_check_branch
        %1260 = sbr.rel (%p1258) target = $region40
      $region39: #{resblock_forward.5} parent=27 // pred_region
        _
      $region40: #{resblock_forward.5} parent=27 // pred_fallthru
        _
    $region28: #{resblock_forward.5} parent=5 // pred_fallthru
      _
    %p1261 = scmp.le.s32.totalorder 2, %s11
    // Predicated region
    $region41: #{resblock_forward.5} parent=5 // pred_check
      %p1262 = pneg %p1261
    $region42: #{resblock_forward.5} parent=5 // pred_check_branch
      %1264 = sbr.rel (%p1262) target = $region44
    $region43: #{resblock_forward.5} parent=5 // pred_region
      %s1265 = ssub.s32 %s11, 2
      // Predicated region
      $region45: #{resblock_forward.5} parent=43 // pred_check
        %p1266 = pneg %p87
      $region46: #{resblock_forward.5} parent=43 // pred_check_branch
        %1268 = sbr.rel (%p1266) target = $region48
      $region47: #{resblock_forward.5} parent=43 // pred_region
        %p1269 = scmp.lt.s32.totalorder %s17, 15
        %s1270 = scalar_select %p1269, %s17, 15
        %s1271 = smul.addr %s1270, 5
        %s1272 = smul.addr %s1271, 4
        %s1273 = scalar_lea.vmem %s2, %s1272
      $region48: #{resblock_forward.5} parent=43 // pred_fallthru
        _
      // Predicated region
      $region49: #{resblock_forward.5} parent=43 // pred_check
        %p1274 = pneg %p113
      $region50: #{resblock_forward.5} parent=43 // pred_check_branch
        %1276 = sbr.rel (%p1274) target = $region52
      $region51: #{resblock_forward.5} parent=43 // pred_region
        %p1277 = scmp.lt.s32.totalorder %s17, 15
        %s1278 = scalar_select %p1277, %s17, 15
        %s1279 = scalar_lea.vmem %s3, %s1278
      $region52: #{resblock_forward.5} parent=43 // pred_fallthru
        _
      // Predicated region
      $region53: #{resblock_forward.5} parent=43 // pred_check
        %p1280 = pneg %p139
      $region54: #{resblock_forward.5} parent=43 // pred_check_branch
        %1282 = sbr.rel (%p1280) target = $region56
      $region55: #{resblock_forward.5} parent=43 // pred_region
        %p1283 = scmp.lt.s32.totalorder %s17, 15
        %s1284 = scalar_select %p1283, %s17, 15
        %s1285 = scalar_lea.vmem %s4, %s1284
      $region56: #{resblock_forward.5} parent=43 // pred_fallthru
        _
    $region44: #{resblock_forward.5} parent=5 // pred_fallthru
      _
  $region6: #{resblock_forward.5} parent=0 // loop_footer
    %s15 = sadd.s32 1, %s11
  $region7: #{resblock_forward.5} parent=0 // loop_footer_branch
    %10 = sbr.rel target = $region3
  $region8: #{resblock_forward.5} parent=0 // loop_exit
    _

// kernel: resblock_forward.8
$region0: #{resblock_forward.8}
  #allocation0 [shape = 'u32[]', space=smem, size = 0x4, offset = 0x4, fixed_abs, tag = 'smem constant byte address 0x4 - core index']
  #allocation1 [shape = 'u32[144,128]{1,0:T(1,128)}', space=vmem, size = 0x12000, scoped, tag = 'internal scratch']
  %s0 = inlined_call_operand.vmem [shape: bf16[16,90,8], index: 0, kind: input, shape index: {}]
  %s1 = inlined_call_operand.vmem [shape: bf16[72,128], index: 1, kind: input, shape index: {}]
  %s2 = inlined_call_operand.vmem [shape: bf16[16,36,128], index: 2, kind: output, shape index: {0}]
  %s3 = inlined_call_operand.vmem [shape: f32[16,1,128], index: 3, kind: output, shape index: {1}]
  %s4 = inlined_call_operand.vmem [shape: f32[16,1,128], index: 4, kind: output, shape index: {2}]
  %5 = xla_tuple %s2, %s3, %s4
  %s6 = sld [smem:[#allocation0]]
  $region57: #{resblock_forward.8} parent=0
    _
  %s8 = ssub.s32 1, %s6
  %s9 = scalar_select 0, %s8, %s6
  loop: start=0, step=1, limit=18
  $region2: #{resblock_forward.8} parent=0 // loop_pre_header
    _
  $region3: #{resblock_forward.8} parent=0 // loop_header
    %s11 = sphi 0, %s15
    %p12 = scmp.ge.s32.totalorder %s11, 18
    %s21 = sphi 0, %s23
    %s24 = sphi 0, %s21
    %s25 = sphi 0, %s24
    %s41 = sphi 0, %s25
    %s45 = sphi 0, %s45
    %s47 = sphi 0, %s45
    %s48 = sphi 0, %s47
    %s62 = sphi 0, %s48
    %s68 = sphi 0, %s70
    %s71 = sphi 0, %s68
    %s72 = sphi 0, %s71
    %s88 = sphi 0, %s72
    %s94 = sphi 0, %s96
    %s97 = sphi 0, %s94
    %s98 = sphi 0, %s97
    %s114 = sphi 0, %s98
    %s120 = sphi 0, %s122
    %s123 = sphi 0, %s120
    %s124 = sphi 0, %s123
    %s140 = sphi 0, %s124
  $region4: #{resblock_forward.8} parent=0 // loop_header_branch
    %14 = sbr.rel (%p12) target = $region8
  $region5: #{resblock_forward.8} parent=0 // loop_body
    %s16 = ssub.s32 %s11, 1
    %s17 = ssub.s32 %s11, 2
    %s18 = sadd.s32 %s11, 1
    %s19 = ssub.s32 %s11, %s18
    %p20 = scmp.eq.s32.totalorder %s19, 0
    %s22 = sadd.s32 %s21, 1
    %s23 = scalar_select %p20, %s21, %s22
    %p26 = pneg %p20
    %p27 = scmp.eq.s32.totalorder %s11, 15
    %p28 = por %p26, %p27
    %p29 = scmp.ne.s32.totalorder %s21, %s24
    %p30 = scmp.eq.s32.totalorder %s11, 0
    %p31 = por %p29, %p30
    %p32 = scmp.ne.s32.totalorder %s21, %s24
    %p33 = scmp.eq.s32.totalorder %s16, 15
    %p34 = por %p32, %p33
    %p35 = scmp.ne.s32.totalorder %s24, %s25
    %p36 = scmp.eq.s32.totalorder %s16, 0
    %p37 = por %p35, %p36
    %p38 = scmp.ne.s32.totalorder %s24, %s25
    %p39 = scmp.eq.s32.totalorder %s17, 15
    %p40 = por %p38, %p39
    %p42 = scmp.ne.s32.totalorder %s25, %s41
    %p43 = scmp.eq.s32.totalorder %s17, 0
    %p44 = por %p42, %p43
    %s46 = sadd.s32 %s45, 1
    %p49 = scmp.eq.s32.totalorder %s11, 15
    %p50 = scmp.ne.s32.totalorder %s45, %s47
    %p51 = scmp.eq.s32.totalorder %s11, 0
    %p52 = por %p50, %p51
    %p53 = scmp.ne.s32.totalorder %s45, %s47
    %p54 = scmp.eq.s32.totalorder %s16, 15
    %p55 = por %p53, %p54
    %p56 = scmp.ne.s32.totalorder %s47, %s48
    %p57 = scmp.eq.s32.totalorder %s16, 0
    %p58 = por %p56, %p57
    %p59 = scmp.ne.s32.totalorder %s47, %s48
    %p60 = scmp.eq.s32.totalorder %s17, 15
    %p61 = por %p59, %p60
    %p63 = scmp.ne.s32.totalorder %s48, %s62
    %p64 = scmp.eq.s32.totalorder %s17, 0
    %p65 = por %p63, %p64
    %s66 = ssub.s32 %s11, %s18
    %p67 = scmp.eq.s32.totalorder %s66, 0
    %s69 = sadd.s32 %s68, 1
    %s70 = scalar_select %p67, %s68, %s69
    %p73 = pneg %p67
    %p74 = scmp.eq.s32.totalorder %s11, 15
    %p75 = por %p73, %p74
    %p76 = scmp.ne.s32.totalorder %s68, %s71
    %p77 = scmp.eq.s32.totalorder %s11, 0
    %p78 = por %p76, %p77
    %p79 = scmp.ne.s32.totalorder %s68, %s71
    %p80 = scmp.eq.s32.totalorder %s16, 15
    %p81 = por %p79, %p80
    %p82 = scmp.ne.s32.totalorder %s71, %s72
    %p83 = scmp.eq.s32.totalorder %s16, 0
    %p84 = por %p82, %p83
    %p85 = scmp.ne.s32.totalorder %s71, %s72
    %p86 = scmp.eq.s32.totalorder %s17, 15
    %p87 = por %p85, %p86
    %p89 = scmp.ne.s32.totalorder %s72, %s88
    %p90 = scmp.eq.s32.totalorder %s17, 0
    %p91 = por %p89, %p90
    %s92 = ssub.s32 %s11, %s18
    %p93 = scmp.eq.s32.totalorder %s92, 0
    %s95 = sadd.s32 %s94, 1
    %s96 = scalar_select %p93, %s94, %s95
    %p99 = pneg %p93
    %p100 = scmp.eq.s32.totalorder %s11, 15
    %p101 = por %p99, %p100
    %p102 = scmp.ne.s32.totalorder %s94, %s97
    %p103 = scmp.eq.s32.totalorder %s11, 0
    %p104 = por %p102, %p103
    %p105 = scmp.ne.s32.totalorder %s94, %s97
    %p106 = scmp.eq.s32.totalorder %s16, 15
    %p107 = por %p105, %p106
    %p108 = scmp.ne.s32.totalorder %s97, %s98
    %p109 = scmp.eq.s32.totalorder %s16, 0
    %p110 = por %p108, %p109
    %p111 = scmp.ne.s32.totalorder %s97, %s98
    %p112 = scmp.eq.s32.totalorder %s17, 15
    %p113 = por %p111, %p112
    %p115 = scmp.ne.s32.totalorder %s98, %s114
    %p116 = scmp.eq.s32.totalorder %s17, 0
    %p117 = por %p115, %p116
    %s118 = ssub.s32 %s11, %s18
    %p119 = scmp.eq.s32.totalorder %s118, 0
    %s121 = sadd.s32 %s120, 1
    %s122 = scalar_select %p119, %s120, %s121
    %p125 = pneg %p119
    %p126 = scmp.eq.s32.totalorder %s11, 15
    %p127 = por %p125, %p126
    %p128 = scmp.ne.s32.totalorder %s120, %s123
    %p129 = scmp.eq.s32.totalorder %s11, 0
    %p130 = por %p128, %p129
    %p131 = scmp.ne.s32.totalorder %s120, %s123
    %p132 = scmp.eq.s32.totalorder %s16, 15
    %p133 = por %p131, %p132
    %p134 = scmp.ne.s32.totalorder %s123, %s124
    %p135 = scmp.eq.s32.totalorder %s16, 0
    %p136 = por %p134, %p135
    %p137 = scmp.ne.s32.totalorder %s123, %s124
    %p138 = scmp.eq.s32.totalorder %s17, 15
    %p139 = por %p137, %p138
    %p141 = scmp.ne.s32.totalorder %s124, %s140
    %p142 = scmp.eq.s32.totalorder %s17, 0
    %p143 = por %p141, %p142
    %p144 = scmp.le.s32.totalorder 1, %s11
    %p145 = scmp.lt.s32.totalorder %s11, 17
    %p146 = pnand %p144, %p145
    %p147 = pneg %p146
    // Predicated region
    $region9: #{resblock_forward.8} parent=5 // pred_check
      _
    $region10: #{resblock_forward.8} parent=5 // pred_check_branch
      %149 = sbr.rel (%p146) target = $region12
    $region11: #{resblock_forward.8} parent=5 // pred_region
      %s150 = ssub.s32 %s11, 1
      // Predicated region
      $region13: #{resblock_forward.8} parent=11 // pred_check
        %p151 = pneg %p58
      $region14: #{resblock_forward.8} parent=11 // pred_check_branch
        %153 = sbr.rel (%p151) target = $region16
      $region15: #{resblock_forward.8} parent=11 // pred_region
        _
      $region16: #{resblock_forward.8} parent=11 // pred_fallthru
        _
    $region12: #{resblock_forward.8} parent=5 // pred_fallthru
      _
    %p154 = scmp.lt.s32.totalorder %s11, 16
    // Predicated region
    $region17: #{resblock_forward.8} parent=5 // pred_check
      %p155 = pneg %p154
    $region18: #{resblock_forward.8} parent=5 // pred_check_branch
      %157 = sbr.rel (%p155) target = $region20
    $region19: #{resblock_forward.8} parent=5 // pred_region
      // Predicated region
      $region21: #{resblock_forward.8} parent=19 // pred_check
        %p158 = pneg %p31
      $region22: #{resblock_forward.8} parent=19 // pred_check_branch
        %160 = sbr.rel (%p158) target = $region24
      $region23: #{resblock_forward.8} parent=19 // pred_region
        %p161 = scmp.lt.s32.totalorder %s11, 15
        %s162 = scalar_select %p161, %s11, 15
        %s163 = smul.addr %s162, 12
        %s164 = smul.addr %s163, 4
        %s165 = scalar_lea.vmem %s0, %s164
      $region24: #{resblock_forward.8} parent=19 // pred_fallthru
        _
    $region20: #{resblock_forward.8} parent=5 // pred_fallthru
      _
    %p166 = scmp.le.s32.totalorder 1, %s11
    %p167 = scmp.lt.s32.totalorder %s11, 17
    %p168 = pnand %p166, %p167
    %p169 = pneg %p168
    // Predicated region
    $region25: #{resblock_forward.8} parent=5 // pred_check
      _
    $region26: #{resblock_forward.8} parent=5 // pred_check_branch
      %171 = sbr.rel (%p168) target = $region28
    $region27: #{resblock_forward.8} parent=5 // pred_region
      %s172 = ssub.s32 %s11, 1
      %p173 = scmp.lt.s32.totalorder %s16, 15
      %s174 = scalar_select %p173, %s16, 15
      %s175 = smul.addr %s174, 12
      %s176 = smul.addr %s175, 4
      %s177 = scalar_lea.vmem %s0, %s176
      %p178 = pneg %p37
      %p179 = pneg %p34
      %p180 = pneg %p58
      %p181 = pneg %p55
      %p182 = pneg %p84
      %p183 = pneg %p81
      %p184 = scmp.lt.s32.totalorder %s16, 15
      %s185 = scalar_select %p184, %s16, 15
      %s186 = smul.addr %s185, 5
      %s187 = smul.addr %s186, 4
      %s188 = scalar_lea.vmem %s2, %s187
      %p189 = pneg %p110
      %p190 = pneg %p107
      %p191 = scmp.lt.s32.totalorder %s16, 15
      %s192 = scalar_select %p191, %s16, 15
      %s193 = scalar_lea.vmem %s3, %s192
      %p194 = pneg %p136
      %p195 = pneg %p133
      %p196 = scmp.lt.s32.totalorder %s16, 15
      %s197 = scalar_select %p196, %s16, 15
      %s198 = scalar_lea.vmem %s4, %s197
      %p199 = scmp.lt.s32.totalorder %s16, 15
      %s200 = scalar_select %p199, %s16, 15
      %s201 = smul.addr %s200, 12
      %s202 = smul.addr %s201, 4
      %s203 = scalar_lea.vmem %s0, %s202
      %p204 = scmp.lt.s32.totalorder %s16, 15
      %s205 = scalar_select %p204, %s16, 15
      %s206 = smul.addr %s205, 5
      %s207 = smul.addr %s206, 4
      %s208 = scalar_lea.vmem %s2, %s207
      %p209 = scmp.lt.s32.totalorder %s16, 15
      %s210 = scalar_select %p209, %s16, 15
      %s211 = scalar_lea.vmem %s3, %s210
      %p212 = scmp.lt.s32.totalorder %s16, 15
      %s213 = scalar_select %p212, %s16, 15
      %s214 = scalar_lea.vmem %s4, %s213
      %v216 = vld [vmem:[%s203] sm:$0xf]
      %v217 = vld [vmem:[%s203 + $0x4] sm:$0xf]
      %v218 = vld [vmem:[%s203 + $0x8] sm:$0xf]
      %v219 = vld [vmem:[%s203 + $0xc] sm:$0xf]
      %v220 = vld [vmem:[%s203 + $0x10] sm:$0x3]
      %v221 = vld [vmem:[%s1] sm:$0xf]
      %v222 = vld [vmem:[%s203 + $0x10] sm:$0x7]
      %v223 = vld [vmem:[%s1 + $0x4] sm:$0xf]
      %v229 = vunpack.c.l.b16 %v216
      %v230 = vunpack.c.l.b16 %v217
      %v231 = vunpack.c.l.b16 %v218
      %v232 = vunpack.c.l.b16 %v219
      %v233 = vunpack.c.l.b16 %v222
      %v234 = vpack.c.b16 %v230, %v229
      %v235 = vpack.c.b16 %v232, %v231
      %v236 = vpack.c.b16 %v233, %v233
      %vm237 = vsmask.f32 7424
      %v239 = vshrl.u32 %v234, 16
      %v241 = vshll.u32 %v234, 16
      %v243 = vrot.slane %v241, 1
      %v244 = vor.u32 %v239, %v243
      %v246 = vshll.u32 %v235, 16
      %v248 = vrot.slane %v246, 1
      %v249 = vsel %vm237, %v244, %v248
      %v250 = vshrl.u32 %v235, 16
      %v252 = vor.u32 %v250, %v248
      %v254 = vshll.u32 %v236, 16
      %v256 = vrot.slane %v254, 1
      %v257 = vsel %vm237, %v252, %v256
      %v258 = vshrl.u32 %v236, 16
      %v260 = vor.u32 %v258, %v256
      %vm261 = vcmask 64512
      %v263 = vsel %vm261, %v249, 0
      %v266 = vsel %vm261, %v257, 0
      %v269 = vsel %vm261, %v260, 0
      %vm271 = vcmask 1043456
      %v273 = vsel %vm271, %v223, 0
      %275 = vmatprep.subr.bf16.mxu0 0
      %276 = vmatpush1.bf16.msra.mxu0 %v273
      %277 = vmatprep.subr.bf16.mxu0 0
      %278 = vmatpush1.bf16.msra.mxu0 0
      %279 = vmatprep.subr.bf16.mxu0 0
      %280 = vmatpush1.bf16.msra.mxu0 0
      %281 = vmatprep.subr.bf16.mxu0 0
      %282 = vmatpush1.bf16.msra.mxu0 0
      %283 = vmatprep.subr.bf16.mxu0 0
      %284 = vmatpush1.bf16.msra.mxu0 0
      %285 = vmatprep.subr.bf16.mxu0 0
      %286 = vmatpush1.bf16.msra.mxu0 0
      %287 = vmatprep.subr.bf16.mxu0 0
      %288 = vmatpush1.bf16.msra.mxu0 0
      %289 = vmatprep.subr.bf16.mxu0 0
      %290 = vmatpush1.bf16.msra.mxu0 0
      %291 = vmatprep.subr.bf16.mxu0 0
      %292 = vmatpush1.bf16.msra.mxu0 0
      %293 = vmatprep.subr.bf16.mxu0 0
      %294 = vmatpush1.bf16.msra.mxu0 0
      %295 = vmatprep.subr.bf16.mxu0 0
      %296 = vmatpush1.bf16.msra.mxu0 0
      %297 = vmatprep.subr.bf16.mxu0 0
      %298 = vmatpush1.bf16.msra.mxu0 0
      %299 = vmatprep.subr.bf16.mxu0 0
      %300 = vmatpush1.bf16.msra.mxu0 0
      %301 = vmatprep.subr.bf16.mxu0 0
      %302 = vmatpush1.bf16.msra.mxu0 0
      %303 = vmatprep.subr.bf16.mxu0 0
      %304 = vmatpush1.bf16.msra.mxu0 0
      %305 = vmatprep.subr.bf16.mxu0 0
      %306 = vmatpush1.bf16.msra.mxu0 0
      %307 = vmatprep.mubr.bf16.mxu0 0
      %308 = vmatmul.mubr.bf16.gmra.mrb[0].mxu0 %v263
      %v309 = vpop.f32.mrb[0].mxu0
      %v310 = vadd.f32 0.0, %v309
      %v311 = vpop.f32.mrb[0].mxu0
      %v312 = vpop.f32.mrb[0].mxu0
      %v313 = vadd.f32 0.0, %v312
      %v314 = vpop.f32.mrb[0].mxu0
      %315 = vmatprep.mubr.bf16.mxu0 0
      %316 = vmatmul.mubr.bf16.gmra.mrb[0].mxu0 %v266
      %v317 = vpop.f32.mrb[0].mxu0
      %v318 = vadd.f32 0.0, %v317
      %v319 = vpop.f32.mrb[0].mxu0
      %v320 = vpop.f32.mrb[0].mxu0
      %v321 = vadd.f32 0.0, %v320
      %v322 = vpop.f32.mrb[0].mxu0
      %323 = vmatprep.mubr.bf16.mxu0 0
      %324 = vmatmul.mubr.bf16.gmra.mrb[0].mxu0 %v269
      %v325 = vpop.f32.mrb[0].mxu0
      %v326 = vadd.f32 0.0, %v325
      %v327 = vpop.f32.mrb[0].mxu0
      %v328 = vpop.f32.mrb[0].mxu0
      %v329 = vpop.f32.mrb[0].mxu0
      %330 = vdwg.mxu0
      %v332 = vunpack.c.l.b16 %v220
      %v333 = vpack.c.b16 %v332, %v332
      %v334 = vsel %vm261, %v234, 0
      %v336 = vsel %vm261, %v235, 0
      %v339 = vsel %vm261, %v333, 0
      %v342 = vsel %vm271, %v221, 0
      %344 = vmatprep.subr.bf16.mxu0 0
      %345 = vmatpush1.bf16.msra.mxu0 %v342
      %346 = vmatprep.subr.bf16.mxu0 0
      %347 = vmatpush1.bf16.msra.mxu0 0
      %348 = vmatprep.subr.bf16.mxu0 0
      %349 = vmatpush1.bf16.msra.mxu0 0
      %350 = vmatprep.subr.bf16.mxu0 0
      %351 = vmatpush1.bf16.msra.mxu0 0
      %352 = vmatprep.subr.bf16.mxu0 0
      %353 = vmatpush1.bf16.msra.mxu0 0
      %354 = vmatprep.subr.bf16.mxu0 0
      %355 = vmatpush1.bf16.msra.mxu0 0
      %356 = vmatprep.subr.bf16.mxu0 0
      %357 = vmatpush1.bf16.msra.mxu0 0
      %358 = vmatprep.subr.bf16.mxu0 0
      %359 = vmatpush1.bf16.msra.mxu0 0
      %360 = vmatprep.subr.bf16.mxu0 0
      %361 = vmatpush1.bf16.msra.mxu0 0
      %362 = vmatprep.subr.bf16.mxu0 0
      %363 = vmatpush1.bf16.msra.mxu0 0
      %364 = vmatprep.subr.bf16.mxu0 0
      %365 = vmatpush1.bf16.msra.mxu0 0
      %366 = vmatprep.subr.bf16.mxu0 0
      %367 = vmatpush1.bf16.msra.mxu0 0
      %368 = vmatprep.subr.bf16.mxu0 0
      %369 = vmatpush1.bf16.msra.mxu0 0
      %370 = vmatprep.subr.bf16.mxu0 0
      %371 = vmatpush1.bf16.msra.mxu0 0
      %372 = vmatprep.subr.bf16.mxu0 0
      %373 = vmatpush1.bf16.msra.mxu0 0
      %374 = vmatprep.subr.bf16.mxu0 0
      %375 = vmatpush1.bf16.msra.mxu0 0
      %376 = vmatprep.mubr.bf16.mxu0 0
      %377 = vmatmul.mubr.bf16.gmra.mrb[0].mxu0 %v334
      %v378 = vpop.f32.mrb[0].mxu0
      %v379 = vadd.f32 %v310, %v378
      %v380 = vpop.f32.mrb[0].mxu0
      %v381 = vpop.f32.mrb[0].mxu0
      %v382 = vadd.f32 %v313, %v381
      %v383 = vpop.f32.mrb[0].mxu0
      %384 = vmatprep.mubr.bf16.mxu0 0
      %385 = vmatmul.mubr.bf16.gmra.mrb[0].mxu0 %v336
      %v386 = vpop.f32.mrb[0].mxu0
      %v387 = vadd.f32 %v318, %v386
      %v388 = vpop.f32.mrb[0].mxu0
      %v389 = vpop.f32.mrb[0].mxu0
      %v390 = vadd.f32 %v321, %v389
      %v391 = vpop.f32.mrb[0].mxu0
      %392 = vmatprep.mubr.bf16.mxu0 0
      %393 = vmatmul.mubr.bf16.gmra.mrb[0].mxu0 %v339
      %v394 = vpop.f32.mrb[0].mxu0
      %v395 = vadd.f32 %v326, %v394
      %v396 = vpop.f32.mrb[0].mxu0
      %v397 = vpop.f32.mrb[0].mxu0
      %v398 = vpop.f32.mrb[0].mxu0
      %399 = vdwg.mxu0
      %v400 = vld [vmem:[%s203] sm:$0xe]
      %v401 = vld [vmem:[%s1 + $0x8] sm:$0xf]
      %v403 = vunpack.c.l.b16 %v400
      %v404 = vpack.c.b16 %v230, %v403
      %vm405 = vcmask 1046528
      %v406 = vrot.slane %v404, 1
      %v407 = vrot.slane %v235, 1
      %v408 = vsel %vm405, %v406, %v407
      %v409 = vrot.slane %v236, 1
      %v410 = vsel %vm405, %v407, %v409
      %v412 = vsel %vm261, %v408, 0
      %v415 = vsel %vm261, %v410, 0
      %v418 = vsel %vm261, %v409, 0
      %v421 = vsel %vm271, %v401, 0
      %423 = vmatprep.subr.bf16.mxu0 0
      %424 = vmatpush1.bf16.msra.mxu0 %v421
      %425 = vmatprep.subr.bf16.mxu0 0
      %426 = vmatpush1.bf16.msra.mxu0 0
      %427 = vmatprep.subr.bf16.mxu0 0
      %428 = vmatpush1.bf16.msra.mxu0 0
      %429 = vmatprep.subr.bf16.mxu0 0
      %430 = vmatpush1.bf16.msra.mxu0 0
      %431 = vmatprep.subr.bf16.mxu0 0
      %432 = vmatpush1.bf16.msra.mxu0 0
      %433 = vmatprep.subr.bf16.mxu0 0
      %434 = vmatpush1.bf16.msra.mxu0 0
      %435 = vmatprep.subr.bf16.mxu0 0
      %436 = vmatpush1.bf16.msra.mxu0 0
      %437 = vmatprep.subr.bf16.mxu0 0
      %438 = vmatpush1.bf16.msra.mxu0 0
      %439 = vmatprep.subr.bf16.mxu0 0
      %440 = vmatpush1.bf16.msra.mxu0 0
      %441 = vmatprep.subr.bf16.mxu0 0
      %442 = vmatpush1.bf16.msra.mxu0 0
      %443 = vmatprep.subr.bf16.mxu0 0
      %444 = vmatpush1.bf16.msra.mxu0 0
      %445 = vmatprep.subr.bf16.mxu0 0
      %446 = vmatpush1.bf16.msra.mxu0 0
      %447 = vmatprep.subr.bf16.mxu0 0
      %448 = vmatpush1.bf16.msra.mxu0 0
      %449 = vmatprep.subr.bf16.mxu0 0
      %450 = vmatpush1.bf16.msra.mxu0 0
      %451 = vmatprep.subr.bf16.mxu0 0
      %452 = vmatpush1.bf16.msra.mxu0 0
      %453 = vmatprep.subr.bf16.mxu0 0
      %454 = vmatpush1.bf16.msra.mxu0 0
      %455 = vmatprep.mubr.bf16.mxu0 0
      %456 = vmatmul.mubr.bf16.gmra.mrb[0].mxu0 %v412
      %v457 = vpop.f32.mrb[0].mxu0
      %v458 = vadd.f32 0.0, %v457
      %v459 = vpop.f32.mrb[0].mxu0
      %v460 = vpop.f32.mrb[0].mxu0
      %v461 = vadd.f32 0.0, %v460
      %v462 = vpop.f32.mrb[0].mxu0
      %463 = vmatprep.mubr.bf16.mxu0 0
      %464 = vmatmul.mubr.bf16.gmra.mrb[0].mxu0 %v415
      %v465 = vpop.f32.mrb[0].mxu0
      %v466 = vadd.f32 0.0, %v465
      %v467 = vpop.f32.mrb[0].mxu0
      %v468 = vpop.f32.mrb[0].mxu0
      %v469 = vadd.f32 0.0, %v468
      %v470 = vpop.f32.mrb[0].mxu0
      %471 = vmatprep.mubr.bf16.mxu0 0
      %472 = vmatmul.mubr.bf16.gmra.mrb[0].mxu0 %v418
      %v473 = vpop.f32.mrb[0].mxu0
      %v474 = vadd.f32 0.0, %v473
      %v475 = vpop.f32.mrb[0].mxu0
      %v476 = vpop.f32.mrb[0].mxu0
      %v477 = vpop.f32.mrb[0].mxu0
      %478 = vdwg.mxu0
      %v479 = vadd.f32 %v379, %v458
      %v480 = vadd.f32 %v382, %v461
      %v481 = vadd.f32 %v387, %v466
      %v482 = vadd.f32 %v390, %v469
      %v483 = vadd.f32 %v395, %v474
      %v484 = vld [vmem:[%s203 + $0x8] sm:$0xe]
      %v485 = vld [vmem:[%s203 + $0xc] sm:$0xf]
      %v486 = vld [vmem:[%s203 + $0x10] sm:$0xf]
      %v487 = vld [vmem:[%s203 + $0x14] sm:$0xf]
      %v488 = vld [vmem:[%s203 + $0x18] sm:$0x7]
      %v489 = vld [vmem:[%s1 + $0xc] sm:$0xf]
      %v495 = vunpack.c.l.b16 %v484
      %v496 = vunpack.c.l.b16 %v485
      %v497 = vunpack.c.l.b16 %v486
      %v498 = vunpack.c.l.b16 %v487
      %v499 = vunpack.c.l.b16 %v488
      %v500 = vpack.c.b16 %v496, %v495
      %v501 = vpack.c.b16 %v498, %v497
      %v502 = vpack.c.b16 %v499, %v499
      %v503 = vrot.slane %v500, 1
      %v504 = vrot.slane %v501, 1
      %v505 = vsel %vm405, %v503, %v504
      %v506 = vrot.slane %v502, 1
      %v507 = vsel %vm405, %v504, %v506
      %v509 = vsel %vm261, %v505, 0
      %v512 = vsel %vm261, %v507, 0
      %v515 = vsel %vm261, %v506, 0
      %v518 = vsel %vm271, %v489, 0
      %520 = vmatprep.subr.bf16.mxu0 0
      %521 = vmatpush1.bf16.msra.mxu0 %v518
      %522 = vmatprep.subr.bf16.mxu0 0
      %523 = vmatpush1.bf16.msra.mxu0 0
      %524 = vmatprep.subr.bf16.mxu0 0
      %525 = vmatpush1.bf16.msra.mxu0 0
      %526 = vmatprep.subr.bf16.mxu0 0
      %527 = vmatpush1.bf16.msra.mxu0 0
      %528 = vmatprep.subr.bf16.mxu0 0
      %529 = vmatpush1.bf16.msra.mxu0 0
      %530 = vmatprep.subr.bf16.mxu0 0
      %531 = vmatpush1.bf16.msra.mxu0 0
      %532 = vmatprep.subr.bf16.mxu0 0
      %533 = vmatpush1.bf16.msra.mxu0 0
      %534 = vmatprep.subr.bf16.mxu0 0
      %535 = vmatpush1.bf16.msra.mxu0 0
      %536 = vmatprep.subr.bf16.mxu0 0
      %537 = vmatpush1.bf16.msra.mxu0 0
      %538 = vmatprep.subr.bf16.mxu0 0
      %539 = vmatpush1.bf16.msra.mxu0 0
      %540 = vmatprep.subr.bf16.mxu0 0
      %541 = vmatpush1.bf16.msra.mxu0 0
      %542 = vmatprep.subr.bf16.mxu0 0
      %543 = vmatpush1.bf16.msra.mxu0 0
      %544 = vmatprep.subr.bf16.mxu0 0
      %545 = vmatpush1.bf16.msra.mxu0 0
      %546 = vmatprep.subr.bf16.mxu0 0
      %547 = vmatpush1.bf16.msra.mxu0 0
      %548 = vmatprep.subr.bf16.mxu0 0
      %549 = vmatpush1.bf16.msra.mxu0 0
      %550 = vmatprep.subr.bf16.mxu0 0
      %551 = vmatpush1.bf16.msra.mxu0 0
      %552 = vmatprep.mubr.bf16.mxu0 0
      %553 = vmatmul.mubr.bf16.gmra.mrb[0].mxu0 %v509
      %v554 = vpop.f32.mrb[0].mxu0
      %v555 = vadd.f32 0.0, %v554
      %v556 = vpop.f32.mrb[0].mxu0
      %v557 = vpop.f32.mrb[0].mxu0
      %v558 = vadd.f32 0.0, %v557
      %v559 = vpop.f32.mrb[0].mxu0
      %560 = vmatprep.mubr.bf16.mxu0 0
      %561 = vmatmul.mubr.bf16.gmra.mrb[0].mxu0 %v512
      %v562 = vpop.f32.mrb[0].mxu0
      %v563 = vadd.f32 0.0, %v562
      %v564 = vpop.f32.mrb[0].mxu0
      %v565 = vpop.f32.mrb[0].mxu0
      %v566 = vadd.f32 0.0, %v565
      %v567 = vpop.f32.mrb[0].mxu0
      %568 = vmatprep.mubr.bf16.mxu0 0
      %569 = vmatmul.mubr.bf16.gmra.mrb[0].mxu0 %v515
      %v570 = vpop.f32.mrb[0].mxu0
      %v571 = vadd.f32 0.0, %v570
      %v572 = vpop.f32.mrb[0].mxu0
      %v573 = vpop.f32.mrb[0].mxu0
      %v574 = vpop.f32.mrb[0].mxu0
      %575 = vdwg.mxu0
      %v576 = vadd.f32 %v479, %v555
      %v577 = vadd.f32 %v480, %v558
      %v578 = vadd.f32 %v481, %v563
      %v579 = vadd.f32 %v482, %v566
      %v580 = vadd.f32 %v483, %v571
      %v581 = vld [vmem:[%s203 + $0x18] sm:$0xf]
      %v582 = vld [vmem:[%s1 + $0x10] sm:$0xf]
      %v584 = vunpack.c.l.b16 %v581
      %v585 = vpack.c.b16 %v584, %v584
      %vm586 = vsmask.f32 6400
      %v588 = vshrl.u32 %v500, 16
      %v590 = vrot.slane %v588, 1
      %v591 = vshll.u32 %v500, 16
      %v593 = vrot.slane %v591, 2
      %v594 = vor.u32 %v590, %v593
      %v596 = vshrl.u32 %v501, 16
      %v598 = vrot.slane %v596, 1
      %v599 = vshll.u32 %v501, 16
      %v601 = vrot.slane %v599, 2
      %v602 = vor.u32 %v598, %v601
      %v603 = vsel %vm586, %v594, %v602
      %v605 = vshrl.u32 %v585, 16
      %v607 = vrot.slane %v605, 1
      %v608 = vshll.u32 %v585, 16
      %v610 = vrot.slane %v608, 2
      %v611 = vor.u32 %v607, %v610
      %v612 = vsel %vm586, %v602, %v611
      %v614 = vsel %vm261, %v603, 0
      %v617 = vsel %vm261, %v612, 0
      %v620 = vsel %vm261, %v611, 0
      %v623 = vsel %vm271, %v582, 0
      %625 = vmatprep.subr.bf16.mxu0 0
      %626 = vmatpush1.bf16.msra.mxu0 %v623
      %627 = vmatprep.subr.bf16.mxu0 0
      %628 = vmatpush1.bf16.msra.mxu0 0
      %629 = vmatprep.subr.bf16.mxu0 0
      %630 = vmatpush1.bf16.msra.mxu0 0
      %631 = vmatprep.subr.bf16.mxu0 0
      %632 = vmatpush1.bf16.msra.mxu0 0
      %633 = vmatprep.subr.bf16.mxu0 0
      %634 = vmatpush1.bf16.msra.mxu0 0
      %635 = vmatprep.subr.bf16.mxu0 0
      %636 = vmatpush1.bf16.msra.mxu0 0
      %637 = vmatprep.subr.bf16.mxu0 0
      %638 = vmatpush1.bf16.msra.mxu0 0
      %639 = vmatprep.subr.bf16.mxu0 0
      %640 = vmatpush1.bf16.msra.mxu0 0
      %641 = vmatprep.subr.bf16.mxu0 0
      %642 = vmatpush1.bf16.msra.mxu0 0
      %643 = vmatprep.subr.bf16.mxu0 0
      %644 = vmatpush1.bf16.msra.mxu0 0
      %645 = vmatprep.subr.bf16.mxu0 0
      %646 = vmatpush1.bf16.msra.mxu0 0
      %647 = vmatprep.subr.bf16.mxu0 0
      %648 = vmatpush1.bf16.msra.mxu0 0
      %649 = vmatprep.subr.bf16.mxu0 0
      %650 = vmatpush1.bf16.msra.mxu0 0
      %651 = vmatprep.subr.bf16.mxu0 0
      %652 = vmatpush1.bf16.msra.mxu0 0
      %653 = vmatprep.subr.bf16.mxu0 0
      %654 = vmatpush1.bf16.msra.mxu0 0
      %655 = vmatprep.subr.bf16.mxu0 0
      %656 = vmatpush1.bf16.msra.mxu0 0
      %657 = vmatprep.mubr.bf16.mxu0 0
      %658 = vmatmul.mubr.bf16.gmra.mrb[0].mxu0 %v614
      %v659 = vpop.f32.mrb[0].mxu0
      %v660 = vadd.f32 0.0, %v659
      %v661 = vpop.f32.mrb[0].mxu0
      %v662 = vpop.f32.mrb[0].mxu0
      %v663 = vadd.f32 0.0, %v662
      %v664 = vpop.f32.mrb[0].mxu0
      %665 = vmatprep.mubr.bf16.mxu0 0
      %666 = vmatmul.mubr.bf16.gmra.mrb[0].mxu0 %v617
      %v667 = vpop.f32.mrb[0].mxu0
      %v668 = vadd.f32 0.0, %v667
      %v669 = vpop.f32.mrb[0].mxu0
      %v670 = vpop.f32.mrb[0].mxu0
      %v671 = vadd.f32 0.0, %v670
      %v672 = vpop.f32.mrb[0].mxu0
      %673 = vmatprep.mubr.bf16.mxu0 0
      %674 = vmatmul.mubr.bf16.gmra.mrb[0].mxu0 %v620
      %v675 = vpop.f32.mrb[0].mxu0
      %v676 = vadd.f32 0.0, %v675
      %v677 = vpop.f32.mrb[0].mxu0
      %v678 = vpop.f32.mrb[0].mxu0
      %v679 = vpop.f32.mrb[0].mxu0
      %680 = vdwg.mxu0
      %v681 = vadd.f32 %v576, %v660
      %v682 = vadd.f32 %v577, %v663
      %v683 = vadd.f32 %v578, %v668
      %v684 = vadd.f32 %v579, %v671
      %v685 = vadd.f32 %v580, %v676
      %v686 = vld [vmem:[%s203 + $0x8] sm:$0xc]
      %v687 = vld [vmem:[%s1 + $0x14] sm:$0xf]
      %v689 = vunpack.c.l.b16 %v686
      %v690 = vpack.c.b16 %v496, %v689
      %vm691 = vcmask 1045504
      %v692 = vrot.slane %v690, 2
      %v693 = vrot.slane %v501, 2
      %v694 = vsel %vm691, %v692, %v693
      %v695 = vrot.slane %v585, 2
      %v696 = vsel %vm691, %v693, %v695
      %v698 = vsel %vm261, %v694, 0
      %v701 = vsel %vm261, %v696, 0
      %v704 = vsel %vm261, %v695, 0
      %v707 = vsel %vm271, %v687, 0
      %709 = vmatprep.subr.bf16.mxu0 0
      %710 = vmatpush1.bf16.msra.mxu0 %v707
      %711 = vmatprep.subr.bf16.mxu0 0
      %712 = vmatpush1.bf16.msra.mxu0 0
      %713 = vmatprep.subr.bf16.mxu0 0
      %714 = vmatpush1.bf16.msra.mxu0 0
      %715 = vmatprep.subr.bf16.mxu0 0
      %716 = vmatpush1.bf16.msra.mxu0 0
      %717 = vmatprep.subr.bf16.mxu0 0
      %718 = vmatpush1.bf16.msra.mxu0 0
      %719 = vmatprep.subr.bf16.mxu0 0
      %720 = vmatpush1.bf16.msra.mxu0 0
      %721 = vmatprep.subr.bf16.mxu0 0
      %722 = vmatpush1.bf16.msra.mxu0 0
      %723 = vmatprep.subr.bf16.mxu0 0
      %724 = vmatpush1.bf16.msra.mxu0 0
      %725 = vmatprep.subr.bf16.mxu0 0
      %726 = vmatpush1.bf16.msra.mxu0 0
      %727 = vmatprep.subr.bf16.mxu0 0
      %728 = vmatpush1.bf16.msra.mxu0 0
      %729 = vmatprep.subr.bf16.mxu0 0
      %730 = vmatpush1.bf16.msra.mxu0 0
      %731 = vmatprep.subr.bf16.mxu0 0
      %732 = vmatpush1.bf16.msra.mxu0 0
      %733 = vmatprep.subr.bf16.mxu0 0
      %734 = vmatpush1.bf16.msra.mxu0 0
      %735 = vmatprep.subr.bf16.mxu0 0
      %736 = vmatpush1.bf16.msra.mxu0 0
      %737 = vmatprep.subr.bf16.mxu0 0
      %738 = vmatpush1.bf16.msra.mxu0 0
      %739 = vmatprep.subr.bf16.mxu0 0
      %740 = vmatpush1.bf16.msra.mxu0 0
      %741 = vmatprep.mubr.bf16.mxu0 0
      %742 = vmatmul.mubr.bf16.gmra.mrb[0].mxu0 %v698
      %v743 = vpop.f32.mrb[0].mxu0
      %v744 = vadd.f32 0.0, %v743
      %v745 = vpop.f32.mrb[0].mxu0
      %v746 = vpop.f32.mrb[0].mxu0
      %v747 = vadd.f32 0.0, %v746
      %v748 = vpop.f32.mrb[0].mxu0
      %749 = vmatprep.mubr.bf16.mxu0 0
      %750 = vmatmul.mubr.bf16.gmra.mrb[0].mxu0 %v701
      %v751 = vpop.f32.mrb[0].mxu0
      %v752 = vadd.f32 0.0, %v751
      %v753 = vpop.f32.mrb[0].mxu0
      %v754 = vpop.f32.mrb[0].mxu0
      %v755 = vadd.f32 0.0, %v754
      %v756 = vpop.f32.mrb[0].mxu0
      %757 = vmatprep.mubr.bf16.mxu0 0
      %758 = vmatmul.mubr.bf16.gmra.mrb[0].mxu0 %v704
      %v759 = vpop.f32.mrb[0].mxu0
      %v760 = vadd.f32 0.0, %v759
      %v761 = vpop.f32.mrb[0].mxu0
      %v762 = vpop.f32.mrb[0].mxu0
      %v763 = vpop.f32.mrb[0].mxu0
      %764 = vdwg.mxu0
      %v765 = vadd.f32 %v681, %v744
      %v766 = vadd.f32 %v682, %v747
      %v767 = vadd.f32 %v683, %v752
      %v768 = vadd.f32 %v684, %v755
      %v769 = vadd.f32 %v685, %v760
      %v770 = vld [vmem:[%s203 + $0x10] sm:$0xc]
      %v771 = vld [vmem:[%s203 + $0x14] sm:$0xf]
      %v772 = vld [vmem:[%s203 + $0x18] sm:$0xf]
      %v773 = vld [vmem:[%s203 + $0x1c] sm:$0xf]
      %v774 = vld [vmem:[%s203 + $0x20] sm:$0xf]
      %v775 = vld [vmem:[%s1 + $0x18] sm:$0xf]
      %v781 = vunpack.c.l.b16 %v770
      %v782 = vunpack.c.l.b16 %v771
      %v783 = vunpack.c.l.b16 %v772
      %v784 = vunpack.c.l.b16 %v773
      %v785 = vunpack.c.l.b16 %v774
      %v786 = vpack.c.b16 %v782, %v781
      %v787 = vpack.c.b16 %v784, %v783
      %v788 = vpack.c.b16 %v785, %v785
      %v789 = vrot.slane %v786, 2
      %v790 = vrot.slane %v787, 2
      %v791 = vsel %vm691, %v789, %v790
      %v792 = vrot.slane %v788, 2
      %v793 = vsel %vm691, %v790, %v792
      %v795 = vsel %vm261, %v791, 0
      %v798 = vsel %vm261, %v793, 0
      %v801 = vsel %vm261, %v792, 0
      %v804 = vsel %vm271, %v775, 0
      %806 = vmatprep.subr.bf16.mxu0 0
      %807 = vmatpush1.bf16.msra.mxu0 %v804
      %808 = vmatprep.subr.bf16.mxu0 0
      %809 = vmatpush1.bf16.msra.mxu0 0
      %810 = vmatprep.subr.bf16.mxu0 0
      %811 = vmatpush1.bf16.msra.mxu0 0
      %812 = vmatprep.subr.bf16.mxu0 0
      %813 = vmatpush1.bf16.msra.mxu0 0
      %814 = vmatprep.subr.bf16.mxu0 0
      %815 = vmatpush1.bf16.msra.mxu0 0
      %816 = vmatprep.subr.bf16.mxu0 0
      %817 = vmatpush1.bf16.msra.mxu0 0
      %818 = vmatprep.subr.bf16.mxu0 0
      %819 = vmatpush1.bf16.msra.mxu0 0
      %820 = vmatprep.subr.bf16.mxu0 0
      %821 = vmatpush1.bf16.msra.mxu0 0
      %822 = vmatprep.subr.bf16.mxu0 0
      %823 = vmatpush1.bf16.msra.mxu0 0
      %824 = vmatprep.subr.bf16.mxu0 0
      %825 = vmatpush1.bf16.msra.mxu0 0
      %826 = vmatprep.subr.bf16.mxu0 0
      %827 = vmatpush1.bf16.msra.mxu0 0
      %828 = vmatprep.subr.bf16.mxu0 0
      %829 = vmatpush1.bf16.msra.mxu0 0
      %830 = vmatprep.subr.bf16.mxu0 0
      %831 = vmatpush1.bf16.msra.mxu0 0
      %832 = vmatprep.subr.bf16.mxu0 0
      %833 = vmatpush1.bf16.msra.mxu0 0
      %834 = vmatprep.subr.bf16.mxu0 0
      %835 = vmatpush1.bf16.msra.mxu0 0
      %836 = vmatprep.subr.bf16.mxu0 0
      %837 = vmatpush1.bf16.msra.mxu0 0
      %838 = vmatprep.mubr.bf16.mxu0 0
      %839 = vmatmul.mubr.bf16.gmra.mrb[0].mxu0 %v795
      %v840 = vpop.f32.mrb[0].mxu0
      %v841 = vadd.f32 0.0, %v840
      %v842 = vpop.f32.mrb[0].mxu0
      %v843 = vpop.f32.mrb[0].mxu0
      %v844 = vadd.f32 0.0, %v843
      %v845 = vpop.f32.mrb[0].mxu0
      %846 = vmatprep.mubr.bf16.mxu0 0
      %847 = vmatmul.mubr.bf16.gmra.mrb[0].mxu0 %v798
      %v848 = vpop.f32.mrb[0].mxu0
      %v849 = vadd.f32 0.0, %v848
      %v850 = vpop.f32.mrb[0].mxu0
      %v851 = vpop.f32.mrb[0].mxu0
      %v852 = vadd.f32 0.0, %v851
      %v853 = vpop.f32.mrb[0].mxu0
      %854 = vmatprep.mubr.bf16.mxu0 0
      %855 = vmatmul.mubr.bf16.gmra.mrb[0].mxu0 %v801
      %v856 = vpop.f32.mrb[0].mxu0
      %v857 = vadd.f32 0.0, %v856
      %v858 = vpop.f32.mrb[0].mxu0
      %v859 = vpop.f32.mrb[0].mxu0
      %v860 = vpop.f32.mrb[0].mxu0
      %861 = vdwg.mxu0
      %v862 = vadd.f32 %v765, %v841
      %v863 = vadd.f32 %v766, %v844
      %v864 = vadd.f32 %v767, %v849
      %v865 = vadd.f32 %v768, %v852
      %v866 = vadd.f32 %v769, %v857
      %v867 = vld [vmem:[%s203 + $0x10] sm:$0xc]
      %v868 = vld [vmem:[%s203 + $0x14] sm:$0xf]
      %v869 = vld [vmem:[%s203 + $0x18] sm:$0xf]
      %v870 = vld [vmem:[%s203 + $0x1c] sm:$0xf]
      %v871 = vld [vmem:[%s203 + $0x20] sm:$0xf]
      %v872 = vld [vmem:[%s203 + $0x24] sm:$0x1]
      %v873 = vld [vmem:[%s1 + $0x1c] sm:$0xf]
      %v880 = vunpack.c.l.b16 %v867
      %v881 = vunpack.c.l.b16 %v868
      %v882 = vunpack.c.l.b16 %v869
      %v883 = vunpack.c.l.b16 %v870
      %v884 = vunpack.c.l.b16 %v871
      %v885 = vunpack.c.l.b16 %v872
      %v886 = vpack.c.b16 %v881, %v880
      %v887 = vpack.c.b16 %v883, %v882
      %v888 = vpack.c.b16 %v885, %v884
      %vm889 = vsmask.f32 5376
      %v891 = vshrl.u32 %v886, 16
      %v893 = vrot.slane %v891, 2
      %v894 = vshll.u32 %v886, 16
      %v896 = vrot.slane %v894, 3
      %v897 = vor.u32 %v893, %v896
      %v899 = vshrl.u32 %v887, 16
      %v901 = vrot.slane %v899, 2
      %v902 = vshll.u32 %v887, 16
      %v904 = vrot.slane %v902, 3
      %v905 = vor.u32 %v901, %v904
      %v906 = vsel %vm889, %v897, %v905
      %v908 = vshrl.u32 %v888, 16
      %v910 = vrot.slane %v908, 2
      %v911 = vshll.u32 %v888, 16
      %v913 = vrot.slane %v911, 3
      %v914 = vor.u32 %v910, %v913
      %v915 = vsel %vm889, %v905, %v914
      %v917 = vsel %vm261, %v906, 0
      %v920 = vsel %vm261, %v915, 0
      %v923 = vsel %vm261, %v914, 0
      %v926 = vsel %vm271, %v873, 0
      %928 = vmatprep.subr.bf16.mxu0 0
      %929 = vmatpush1.bf16.msra.mxu0 %v926
      %930 = vmatprep.subr.bf16.mxu0 0
      %931 = vmatpush1.bf16.msra.mxu0 0
      %932 = vmatprep.subr.bf16.mxu0 0
      %933 = vmatpush1.bf16.msra.mxu0 0
      %934 = vmatprep.subr.bf16.mxu0 0
      %935 = vmatpush1.bf16.msra.mxu0 0
      %936 = vmatprep.subr.bf16.mxu0 0
      %937 = vmatpush1.bf16.msra.mxu0 0
      %938 = vmatprep.subr.bf16.mxu0 0
      %939 = vmatpush1.bf16.msra.mxu0 0
      %940 = vmatprep.subr.bf16.mxu0 0
      %941 = vmatpush1.bf16.msra.mxu0 0
      %942 = vmatprep.subr.bf16.mxu0 0
      %943 = vmatpush1.bf16.msra.mxu0 0
      %944 = vmatprep.subr.bf16.mxu0 0
      %945 = vmatpush1.bf16.msra.mxu0 0
      %946 = vmatprep.subr.bf16.mxu0 0
      %947 = vmatpush1.bf16.msra.mxu0 0
      %948 = vmatprep.subr.bf16.mxu0 0
      %949 = vmatpush1.bf16.msra.mxu0 0
      %950 = vmatprep.subr.bf16.mxu0 0
      %951 = vmatpush1.bf16.msra.mxu0 0
      %952 = vmatprep.subr.bf16.mxu0 0
      %953 = vmatpush1.bf16.msra.mxu0 0
      %954 = vmatprep.subr.bf16.mxu0 0
      %955 = vmatpush1.bf16.msra.mxu0 0
      %956 = vmatprep.subr.bf16.mxu0 0
      %957 = vmatpush1.bf16.msra.mxu0 0
      %958 = vmatprep.subr.bf16.mxu0 0
      %959 = vmatpush1.bf16.msra.mxu0 0
      %960 = vmatprep.mubr.bf16.mxu0 0
      %961 = vmatmul.mubr.bf16.gmra.mrb[0].mxu0 %v917
      %v962 = vpop.f32.mrb[0].mxu0
      %v963 = vadd.f32 0.0, %v962
      %v964 = vpop.f32.mrb[0].mxu0
      %v965 = vpop.f32.mrb[0].mxu0
      %v966 = vadd.f32 0.0, %v965
      %v967 = vpop.f32.mrb[0].mxu0
      %968 = vmatprep.mubr.bf16.mxu0 0
      %969 = vmatmul.mubr.bf16.gmra.mrb[0].mxu0 %v920
      %v970 = vpop.f32.mrb[0].mxu0
      %v971 = vadd.f32 0.0, %v970
      %v972 = vpop.f32.mrb[0].mxu0
      %v973 = vpop.f32.mrb[0].mxu0
      %v974 = vadd.f32 0.0, %v973
      %v975 = vpop.f32.mrb[0].mxu0
      %976 = vmatprep.mubr.bf16.mxu0 0
      %977 = vmatmul.mubr.bf16.gmra.mrb[0].mxu0 %v923
      %v978 = vpop.f32.mrb[0].mxu0
      %v979 = vadd.f32 0.0, %v978
      %v980 = vpop.f32.mrb[0].mxu0
      %v981 = vpop.f32.mrb[0].mxu0
      %v982 = vpop.f32.mrb[0].mxu0
      %983 = vdwg.mxu0
      %v984 = vadd.f32 %v862, %v963
      %v985 = vadd.f32 %v863, %v966
      %v986 = vadd.f32 %v864, %v971
      %v987 = vadd.f32 %v865, %v974
      %v988 = vadd.f32 %v866, %v979
      %v989 = vld [vmem:[%s203 + $0x10] sm:$0x8]
      %v990 = vld [vmem:[%s1 + $0x20] sm:$0xf]
      %v992 = vunpack.c.l.b16 %v989
      %v993 = vpack.c.b16 %v881, %v992
      %vm994 = vcmask 1044480
      %v995 = vrot.slane %v993, 3
      %v996 = vrot.slane %v887, 3
      %v997 = vsel %vm994, %v995, %v996
      %v998 = vrot.slane %v888, 3
      %v999 = vsel %vm994, %v996, %v998
      %v1001 = vsel %vm261, %v997, 0
      %v1004 = vsel %vm261, %v999, 0
      %v1007 = vsel %vm261, %v998, 0
      %v1010 = vsel %vm271, %v990, 0
      %1012 = vmatprep.subr.bf16.mxu0 0
      %1013 = vmatpush1.bf16.msra.mxu0 %v1010
      %1014 = vmatprep.subr.bf16.mxu0 0
      %1015 = vmatpush1.bf16.msra.mxu0 0
      %1016 = vmatprep.subr.bf16.mxu0 0
      %1017 = vmatpush1.bf16.msra.mxu0 0
      %1018 = vmatprep.subr.bf16.mxu0 0
      %1019 = vmatpush1.bf16.msra.mxu0 0
      %1020 = vmatprep.subr.bf16.mxu0 0
      %1021 = vmatpush1.bf16.msra.mxu0 0
      %1022 = vmatprep.subr.bf16.mxu0 0
      %1023 = vmatpush1.bf16.msra.mxu0 0
      %1024 = vmatprep.subr.bf16.mxu0 0
      %1025 = vmatpush1.bf16.msra.mxu0 0
      %1026 = vmatprep.subr.bf16.mxu0 0
      %1027 = vmatpush1.bf16.msra.mxu0 0
      %1028 = vmatprep.subr.bf16.mxu0 0
      %1029 = vmatpush1.bf16.msra.mxu0 0
      %1030 = vmatprep.subr.bf16.mxu0 0
      %1031 = vmatpush1.bf16.msra.mxu0 0
      %1032 = vmatprep.subr.bf16.mxu0 0
      %1033 = vmatpush1.bf16.msra.mxu0 0
      %1034 = vmatprep.subr.bf16.mxu0 0
      %1035 = vmatpush1.bf16.msra.mxu0 0
      %1036 = vmatprep.subr.bf16.mxu0 0
      %1037 = vmatpush1.bf16.msra.mxu0 0
      %1038 = vmatprep.subr.bf16.mxu0 0
      %1039 = vmatpush1.bf16.msra.mxu0 0
      %1040 = vmatprep.subr.bf16.mxu0 0
      %1041 = vmatpush1.bf16.msra.mxu0 0
      %1042 = vmatprep.subr.bf16.mxu0 0
      %1043 = vmatpush1.bf16.msra.mxu0 0
      %1044 = vmatprep.mubr.bf16.mxu0 0
      %1045 = vmatmul.mubr.bf16.gmra.mrb[0].mxu0 %v1001
      %v1046 = vpop.f32.mrb[0].mxu0
      %v1047 = vadd.f32 0.0, %v1046
      %v1048 = vpop.f32.mrb[0].mxu0
      %v1049 = vpop.f32.mrb[0].mxu0
      %v1050 = vadd.f32 0.0, %v1049
      %v1051 = vpop.f32.mrb[0].mxu0
      %1052 = vmatprep.mubr.bf16.mxu0 0
      %1053 = vmatmul.mubr.bf16.gmra.mrb[0].mxu0 %v1004
      %v1054 = vpop.f32.mrb[0].mxu0
      %v1055 = vadd.f32 0.0, %v1054
      %v1056 = vpop.f32.mrb[0].mxu0
      %v1057 = vpop.f32.mrb[0].mxu0
      %v1058 = vadd.f32 0.0, %v1057
      %v1059 = vpop.f32.mrb[0].mxu0
      %1060 = vmatprep.mubr.bf16.mxu0 0
      %1061 = vmatmul.mubr.bf16.gmra.mrb[0].mxu0 %v1007
      %v1062 = vpop.f32.mrb[0].mxu0
      %v1063 = vadd.f32 0.0, %v1062
      %v1064 = vpop.f32.mrb[0].mxu0
      %v1065 = vpop.f32.mrb[0].mxu0
      %v1066 = vpop.f32.mrb[0].mxu0
      %1067 = vdwg.mxu0
      %v1068 = vadd.f32 %v984, %v1047
      %v1069 = vadd.f32 %v985, %v1050
      %v1070 = vadd.f32 %v986, %v1055
      %v1071 = vadd.f32 %v987, %v1058
      %v1072 = vadd.f32 %v988, %v1063
      %v1073 = vpack.c.bf16 %v1069, %v1068
      %v1074 = vpack.c.bf16 %v1071, %v1070
      %v1075 = vpack.c.bf16 %v1072, %v1072
      %v1079 = vunpack.c.l.b16 %v1073
      %v1080 = vunpack.c.h.b16 %v1073
      %v1081 = vunpack.c.l.b16 %v1074
      %v1082 = vunpack.c.h.b16 %v1074
      %v1083 = vunpack.c.l.b16 %v1075
      %v1084 = vpack.c.b16 %v1079, %v1079
      %v1085 = vpack.c.b16 %v1080, %v1080
      %v1086 = vpack.c.b16 %v1081, %v1081
      %v1087 = vpack.c.b16 %v1082, %v1082
      %v1088 = vpack.c.b16 %v1083, %v1083
      %1094 = vst [vmem:[%s208] sm:$0xf] %v1084
      %1095 = vst [vmem:[%s208 + $0x4] sm:$0xf] %v1085
      %1096 = vst [vmem:[%s208 + $0x8] sm:$0xf] %v1086
      %1097 = vst [vmem:[%s208 + $0xc] sm:$0xf] %v1087
      %1098 = vst [vmem:[%s208 + $0x10] sm:$0x3] %v1088
      %v1099 = vlaneseq
      %v1100 = vshrl.u32 %v1099, 7
      %v1101 = vadd.s32 %v1100, 8
      %v1102 = vadd.s32 %v1100, 16
      %v1103 = vadd.s32 %v1100, 24
      %v1104 = vadd.s32 %v1100, 32
      %vm1105 = vcmp.lt.s32.totalorder %v1100, 0
      %v1106 = vsub.s32 0, %v1100
      %v1107 = vsel %vm1105, %v1106, %v1100
      %v1108 = vmul.u32.u64.compose %v1107, 3817748708
      %v1109 = vextract.low.u32 %v1108
      %v1110 = vextract.high.u32 %v1108
      %v1111 = vshrl.u32 %v1110, 4
      %v1112 = vmul.u32 %v1111, 18
      %v1113 = vsub.s32 %v1107, %v1112
      %v1114 = vsub.s32 0, %v1113
      %v1115 = vsel %vm1105, %v1114, %v1113
      %vm1116 = vcmp.lt.s32.totalorder %v1101, 0
      %v1117 = vsub.s32 0, %v1101
      %v1118 = vsel %vm1116, %v1117, %v1101
      %v1119 = vmul.u32.u64.compose %v1118, 3817748708
      %v1120 = vextract.low.u32 %v1119
      %v1121 = vextract.high.u32 %v1119
      %v1122 = vshrl.u32 %v1121, 4
      %v1123 = vmul.u32 %v1122, 18
      %v1124 = vsub.s32 %v1118, %v1123
      %v1125 = vsub.s32 0, %v1124
      %v1126 = vsel %vm1116, %v1125, %v1124
      %vm1127 = vcmp.lt.s32.totalorder %v1102, 0
      %v1128 = vsub.s32 0, %v1102
      %v1129 = vsel %vm1127, %v1128, %v1102
      %v1130 = vmul.u32.u64.compose %v1129, 3817748708
      %v1131 = vextract.low.u32 %v1130
      %v1132 = vextract.high.u32 %v1130
      %v1133 = vshrl.u32 %v1132, 4
      %v1134 = vmul.u32 %v1133, 18
      %v1135 = vsub.s32 %v1129, %v1134
      %v1136 = vsub.s32 0, %v1135
      %v1137 = vsel %vm1127, %v1136, %v1135
      %vm1138 = vcmp.lt.s32.totalorder %v1103, 0
      %v1139 = vsub.s32 0, %v1103
      %v1140 = vsel %vm1138, %v1139, %v1103
      %v1141 = vmul.u32.u64.compose %v1140, 3817748708
      %v1142 = vextract.low.u32 %v1141
      %v1143 = vextract.high.u32 %v1141
      %v1144 = vshrl.u32 %v1143, 4
      %v1145 = vmul.u32 %v1144, 18
      %v1146 = vsub.s32 %v1140, %v1145
      %v1147 = vsub.s32 0, %v1146
      %v1148 = vsel %vm1138, %v1147, %v1146
      %vm1149 = vcmp.lt.s32.totalorder %v1104, 0
      %v1150 = vsub.s32 0, %v1104
      %v1151 = vsel %vm1149, %v1150, %v1104
      %v1152 = vmul.u32.u64.compose %v1151, 3817748708
      %v1153 = vextract.low.u32 %v1152
      %v1154 = vextract.high.u32 %v1152
      %v1155 = vshrl.u32 %v1154, 4
      %v1156 = vmul.u32 %v1155, 18
      %v1157 = vsub.s32 %v1151, %v1156
      %v1158 = vsub.s32 0, %v1157
      %v1159 = vsel %vm1149, %v1158, %v1157
      %vm1160 = vcmp.ne.s32.totalorder %v1115, 0
      %vm1161 = vcmp.ne.s32.totalorder %v1126, 0
      %vm1162 = vcmp.ne.s32.totalorder %v1137, 0
      %vm1163 = vcmp.ne.s32.totalorder %v1148, 0
      %vm1164 = vcmp.ne.s32.totalorder %v1159, 0
      %vm1165 = vcmp.lt.s32.totalorder %v1115, 0
      %vm1166 = vcmp.lt.s32.totalorder %v1126, 0
      %vm1167 = vcmp.lt.s32.totalorder %v1137, 0
      %vm1168 = vcmp.lt.s32.totalorder %v1148, 0
      %vm1169 = vcmp.lt.s32.totalorder %v1159, 0
      %vm1170 = vmand %vm1165, %vm1160
      %vm1171 = vmand %vm1166, %vm1161
      %vm1172 = vmand %vm1167, %vm1162
      %vm1173 = vmand %vm1168, %vm1163
      %vm1174 = vmand %vm1169, %vm1164
      %v1175 = vadd.s32 %v1115, 18
      %v1176 = vadd.s32 %v1126, 18
      %v1177 = vadd.s32 %v1137, 18
      %v1178 = vadd.s32 %v1148, 18
      %v1179 = vadd.s32 %v1159, 18
      %v1180 = vsel %vm1170, %v1175, %v1115
      %v1181 = vsel %vm1171, %v1176, %v1126
      %v1182 = vsel %vm1172, %v1177, %v1137
      %v1183 = vsel %vm1173, %v1178, %v1148
      %v1184 = vsel %vm1174, %v1179, %v1159
      %vm1185 = vcmp.lt.s32.totalorder %v1180, 16
      %vm1186 = vcmp.lt.s32.totalorder %v1181, 16
      %vm1187 = vcmp.lt.s32.totalorder %v1182, 16
      %vm1188 = vcmp.lt.s32.totalorder %v1183, 16
      %vm1189 = vcmp.lt.s32.totalorder %v1184, 16
      %v1190 = vsel %vm1185, %v1068, 0.0
      %v1191 = vsel %vm1186, %v1069, 0.0
      %v1192 = vsel %vm1187, %v1070, 0.0
      %v1193 = vsel %vm1188, %v1071, 0.0
      %v1194 = vsel %vm1189, %v1072, 0.0
      %v1195 = vadd.f32 %v1190, %v1191
      %v1196 = vadd.f32 %v1195, %v1192
      %v1197 = vadd.f32 %v1196, %v1193
      %v1198 = vsel %vm271, %v1194, 0.0
      %v1199 = vadd.f32 %v1197, %v1198
      %v1200 = vrot.slane %v1199, 4
      %v1201 = vadd.f32 %v1199, %v1200
      %v1202 = vrot.slane %v1201, 2
      %v1203 = vadd.f32 %v1201, %v1202
      %v1204 = vrot.slane %v1203, 1
      %v1205 = vadd.f32 %v1203, %v1204
      %1206 = vst [vmem:[%s211] sm:$0x1] %v1205
      %v1207 = vmul.f32 %v1190, %v1190
      %v1208 = vmul.f32 %v1191, %v1191
      %v1209 = vmul.f32 %v1192, %v1192
      %v1210 = vmul.f32 %v1193, %v1193
      %v1211 = vmul.f32 %v1194, %v1194
      %v1212 = vadd.f32 %v1207, %v1208
      %v1213 = vadd.f32 %v1212, %v1209
      %v1214 = vadd.f32 %v1213, %v1210
      %v1215 = vsel %vm271, %v1211, 0.0
      %v1216 = vadd.f32 %v1214, %v1215
      %v1217 = vrot.slane %v1216, 4
      %v1218 = vadd.f32 %v1216, %v1217
      %v1219 = vrot.slane %v1218, 2
      %v1220 = vadd.f32 %v1218, %v1219
      %v1221 = vrot.slane %v1220, 1
      %v1222 = vadd.f32 %v1220, %v1221
      %1223 = vst [vmem:[%s214] sm:$0x1] %v1222
      %p1224 = scmp.lt.s32.totalorder %s16, 15
      %s1225 = scalar_select %p1224, %s16, 15
      %s1226 = smul.addr %s1225, 5
      %s1227 = smul.addr %s1226, 4
      %s1228 = scalar_lea.vmem %s2, %s1227
      %p1229 = scmp.lt.s32.totalorder %s16, 15
      %s1230 = scalar_select %p1229, %s16, 15
      %s1231 = scalar_lea.vmem %s3, %s1230
      %p1232 = scmp.lt.s32.totalorder %s16, 15
      %s1233 = scalar_select %p1232, %s16, 15
      %s1234 = scalar_lea.vmem %s4, %s1233
      // Predicated region
      $region29: #{resblock_forward.8} parent=27 // pred_check
        %p1235 = pneg %p81
      $region30: #{resblock_forward.8} parent=27 // pred_check_branch
        %1237 = sbr.rel (%p1235) target = $region32
      $region31: #{resblock_forward.8} parent=27 // pred_region
        _
      $region32: #{resblock_forward.8} parent=27 // pred_fallthru
        _
      // Predicated region
      $region33: #{resblock_forward.8} parent=27 // pred_check
        %p1238 = pneg %p107
      $region34: #{resblock_forward.8} parent=27 // pred_check_branch
        %1240 = sbr.rel (%p1238) target = $region36
      $region35: #{resblock_forward.8} parent=27 // pred_region
        _
      $region36: #{resblock_forward.8} parent=27 // pred_fallthru
        _
      // Predicated region
      $region37: #{resblock_forward.8} parent=27 // pred_check
        %p1241 = pneg %p133
      $region38: #{resblock_forward.8} parent=27 // pred_check_branch
        %1243 = sbr.rel (%p1241) target = $region40
      $region39: #{resblock_forward.8} parent=27 // pred_region
        _
      $region40: #{resblock_forward.8} parent=27 // pred_fallthru
        _
    $region28: #{resblock_forward.8} parent=5 // pred_fallthru
      _
    %p1244 = scmp.le.s32.totalorder 2, %s11
    // Predicated region
    $region41: #{resblock_forward.8} parent=5 // pred_check
      %p1245 = pneg %p1244
    $region42: #{resblock_forward.8} parent=5 // pred_check_branch
      %1247 = sbr.rel (%p1245) target = $region44
    $region43: #{resblock_forward.8} parent=5 // pred_region
      %s1248 = ssub.s32 %s11, 2
      // Predicated region
      $region45: #{resblock_forward.8} parent=43 // pred_check
        %p1249 = pneg %p87
      $region46: #{resblock_forward.8} parent=43 // pred_check_branch
        %1251 = sbr.rel (%p1249) target = $region48
      $region47: #{resblock_forward.8} parent=43 // pred_region
        %p1252 = scmp.lt.s32.totalorder %s17, 15
        %s1253 = scalar_select %p1252, %s17, 15
        %s1254 = smul.addr %s1253, 5
        %s1255 = smul.addr %s1254, 4
        %s1256 = scalar_lea.vmem %s2, %s1255
      $region48: #{resblock_forward.8} parent=43 // pred_fallthru
        _
      // Predicated region
      $region49: #{resblock_forward.8} parent=43 // pred_check
        %p1257 = pneg %p113
      $region50: #{resblock_forward.8} parent=43 // pred_check_branch
        %1259 = sbr.rel (%p1257) target = $region52
      $region51: #{resblock_forward.8} parent=43 // pred_region
        %p1260 = scmp.lt.s32.totalorder %s17, 15
        %s1261 = scalar_select %p1260, %s17, 15
        %s1262 = scalar_lea.vmem %s3, %s1261
      $region52: #{resblock_forward.8} parent=43 // pred_fallthru
        _
      // Predicated region
      $region53: #{resblock_forward.8} parent=43 // pred_check
        %p1263 = pneg %p139
      $region54: #{resblock_forward.8} parent=43 // pred_check_branch
        %1265 = sbr.rel (%p1263) target = $region56
      $region55: #{resblock_forward.8} parent=43 // pred_region
        %p1266 = scmp.lt.s32.totalorder %s17, 15
        %s1267 = scalar_select %p1266, %s17, 15
        %s1268 = scalar_lea.vmem %s4, %s1267
      $region56: #{resblock_forward.8} parent=43 // pred_fallthru
        _
    $region44: #{resblock_forward.8} parent=5 // pred_fallthru
      _
  $region6: #{resblock_forward.8} parent=0 // loop_footer
    %s15 = sadd.s32 1, %s11
  $region7: #{resblock_forward.8} parent=0 // loop_footer_branch
    %10 = sbr.rel target = $region3
  $region8: #{resblock_forward.8} parent=0 // loop_exit
    _

// kernel: resblock_forward.7
$region0: #{resblock_forward.7}
  #allocation0 [shape = 'u32[]', space=smem, size = 0x4, offset = 0x4, fixed_abs, tag = 'smem constant byte address 0x4 - core index']
  #allocation1 [shape = 'u32[144,128]{1,0:T(1,128)}', space=vmem, size = 0x12000, scoped, tag = 'internal scratch']
  %s0 = inlined_call_operand.vmem [shape: bf16[16,36,4], index: 0, kind: input, shape index: {}]
  %s1 = inlined_call_operand.vmem [shape: bf16[4,128], index: 1, kind: input, shape index: {}]
  %s2 = inlined_call_operand.vmem [shape: bf16[16,36,128], index: 2, kind: output, shape index: {0}]
  %s3 = inlined_call_operand.vmem [shape: f32[16,1,128], index: 3, kind: output, shape index: {1}]
  %s4 = inlined_call_operand.vmem [shape: f32[16,1,128], index: 4, kind: output, shape index: {2}]
  %5 = xla_tuple %s2, %s3, %s4
  %s6 = sld [smem:[#allocation0]]
  $region57: #{resblock_forward.7} parent=0
    _
  %s8 = ssub.s32 1, %s6
  %s9 = scalar_select 0, %s8, %s6
  loop: start=0, step=1, limit=18
  $region2: #{resblock_forward.7} parent=0 // loop_pre_header
    _
  $region3: #{resblock_forward.7} parent=0 // loop_header
    %s11 = sphi 0, %s15
    %p12 = scmp.ge.s32.totalorder %s11, 18
    %s21 = sphi 0, %s23
    %s24 = sphi 0, %s21
    %s25 = sphi 0, %s24
    %s41 = sphi 0, %s25
    %s45 = sphi 0, %s45
    %s47 = sphi 0, %s45
    %s48 = sphi 0, %s47
    %s62 = sphi 0, %s48
    %s68 = sphi 0, %s70
    %s71 = sphi 0, %s68
    %s72 = sphi 0, %s71
    %s88 = sphi 0, %s72
    %s94 = sphi 0, %s96
    %s97 = sphi 0, %s94
    %s98 = sphi 0, %s97
    %s114 = sphi 0, %s98
    %s120 = sphi 0, %s122
    %s123 = sphi 0, %s120
    %s124 = sphi 0, %s123
    %s140 = sphi 0, %s124
  $region4: #{resblock_forward.7} parent=0 // loop_header_branch
    %14 = sbr.rel (%p12) target = $region8
  $region5: #{resblock_forward.7} parent=0 // loop_body
    %s16 = ssub.s32 %s11, 1
    %s17 = ssub.s32 %s11, 2
    %s18 = sadd.s32 %s11, 1
    %s19 = ssub.s32 %s11, %s18
    %p20 = scmp.eq.s32.totalorder %s19, 0
    %s22 = sadd.s32 %s21, 1
    %s23 = scalar_select %p20, %s21, %s22
    %p26 = pneg %p20
    %p27 = scmp.eq.s32.totalorder %s11, 15
    %p28 = por %p26, %p27
    %p29 = scmp.ne.s32.totalorder %s21, %s24
    %p30 = scmp.eq.s32.totalorder %s11, 0
    %p31 = por %p29, %p30
    %p32 = scmp.ne.s32.totalorder %s21, %s24
    %p33 = scmp.eq.s32.totalorder %s16, 15
    %p34 = por %p32, %p33
    %p35 = scmp.ne.s32.totalorder %s24, %s25
    %p36 = scmp.eq.s32.totalorder %s16, 0
    %p37 = por %p35, %p36
    %p38 = scmp.ne.s32.totalorder %s24, %s25
    %p39 = scmp.eq.s32.totalorder %s17, 15
    %p40 = por %p38, %p39
    %p42 = scmp.ne.s32.totalorder %s25, %s41
    %p43 = scmp.eq.s32.totalorder %s17, 0
    %p44 = por %p42, %p43
    %s46 = sadd.s32 %s45, 1
    %p49 = scmp.eq.s32.totalorder %s11, 15
    %p50 = scmp.ne.s32.totalorder %s45, %s47
    %p51 = scmp.eq.s32.totalorder %s11, 0
    %p52 = por %p50, %p51
    %p53 = scmp.ne.s32.totalorder %s45, %s47
    %p54 = scmp.eq.s32.totalorder %s16, 15
    %p55 = por %p53, %p54
    %p56 = scmp.ne.s32.totalorder %s47, %s48
    %p57 = scmp.eq.s32.totalorder %s16, 0
    %p58 = por %p56, %p57
    %p59 = scmp.ne.s32.totalorder %s47, %s48
    %p60 = scmp.eq.s32.totalorder %s17, 15
    %p61 = por %p59, %p60
    %p63 = scmp.ne.s32.totalorder %s48, %s62
    %p64 = scmp.eq.s32.totalorder %s17, 0
    %p65 = por %p63, %p64
    %s66 = ssub.s32 %s11, %s18
    %p67 = scmp.eq.s32.totalorder %s66, 0
    %s69 = sadd.s32 %s68, 1
    %s70 = scalar_select %p67, %s68, %s69
    %p73 = pneg %p67
    %p74 = scmp.eq.s32.totalorder %s11, 15
    %p75 = por %p73, %p74
    %p76 = scmp.ne.s32.totalorder %s68, %s71
    %p77 = scmp.eq.s32.totalorder %s11, 0
    %p78 = por %p76, %p77
    %p79 = scmp.ne.s32.totalorder %s68, %s71
    %p80 = scmp.eq.s32.totalorder %s16, 15
    %p81 = por %p79, %p80
    %p82 = scmp.ne.s32.totalorder %s71, %s72
    %p83 = scmp.eq.s32.totalorder %s16, 0
    %p84 = por %p82, %p83
    %p85 = scmp.ne.s32.totalorder %s71, %s72
    %p86 = scmp.eq.s32.totalorder %s17, 15
    %p87 = por %p85, %p86
    %p89 = scmp.ne.s32.totalorder %s72, %s88
    %p90 = scmp.eq.s32.totalorder %s17, 0
    %p91 = por %p89, %p90
    %s92 = ssub.s32 %s11, %s18
    %p93 = scmp.eq.s32.totalorder %s92, 0
    %s95 = sadd.s32 %s94, 1
    %s96 = scalar_select %p93, %s94, %s95
    %p99 = pneg %p93
    %p100 = scmp.eq.s32.totalorder %s11, 15
    %p101 = por %p99, %p100
    %p102 = scmp.ne.s32.totalorder %s94, %s97
    %p103 = scmp.eq.s32.totalorder %s11, 0
    %p104 = por %p102, %p103
    %p105 = scmp.ne.s32.totalorder %s94, %s97
    %p106 = scmp.eq.s32.totalorder %s16, 15
    %p107 = por %p105, %p106
    %p108 = scmp.ne.s32.totalorder %s97, %s98
    %p109 = scmp.eq.s32.totalorder %s16, 0
    %p110 = por %p108, %p109
    %p111 = scmp.ne.s32.totalorder %s97, %s98
    %p112 = scmp.eq.s32.totalorder %s17, 15
    %p113 = por %p111, %p112
    %p115 = scmp.ne.s32.totalorder %s98, %s114
    %p116 = scmp.eq.s32.totalorder %s17, 0
    %p117 = por %p115, %p116
    %s118 = ssub.s32 %s11, %s18
    %p119 = scmp.eq.s32.totalorder %s118, 0
    %s121 = sadd.s32 %s120, 1
    %s122 = scalar_select %p119, %s120, %s121
    %p125 = pneg %p119
    %p126 = scmp.eq.s32.totalorder %s11, 15
    %p127 = por %p125, %p126
    %p128 = scmp.ne.s32.totalorder %s120, %s123
    %p129 = scmp.eq.s32.totalorder %s11, 0
    %p130 = por %p128, %p129
    %p131 = scmp.ne.s32.totalorder %s120, %s123
    %p132 = scmp.eq.s32.totalorder %s16, 15
    %p133 = por %p131, %p132
    %p134 = scmp.ne.s32.totalorder %s123, %s124
    %p135 = scmp.eq.s32.totalorder %s16, 0
    %p136 = por %p134, %p135
    %p137 = scmp.ne.s32.totalorder %s123, %s124
    %p138 = scmp.eq.s32.totalorder %s17, 15
    %p139 = por %p137, %p138
    %p141 = scmp.ne.s32.totalorder %s124, %s140
    %p142 = scmp.eq.s32.totalorder %s17, 0
    %p143 = por %p141, %p142
    %p144 = scmp.le.s32.totalorder 1, %s11
    %p145 = scmp.lt.s32.totalorder %s11, 17
    %p146 = pnand %p144, %p145
    %p147 = pneg %p146
    // Predicated region
    $region9: #{resblock_forward.7} parent=5 // pred_check
      _
    $region10: #{resblock_forward.7} parent=5 // pred_check_branch
      %149 = sbr.rel (%p146) target = $region12
    $region11: #{resblock_forward.7} parent=5 // pred_region
      %s150 = ssub.s32 %s11, 1
      // Predicated region
      $region13: #{resblock_forward.7} parent=11 // pred_check
        %p151 = pneg %p58
      $region14: #{resblock_forward.7} parent=11 // pred_check_branch
        %153 = sbr.rel (%p151) target = $region16
      $region15: #{resblock_forward.7} parent=11 // pred_region
        _
      $region16: #{resblock_forward.7} parent=11 // pred_fallthru
        _
    $region12: #{resblock_forward.7} parent=5 // pred_fallthru
      _
    %p154 = scmp.lt.s32.totalorder %s11, 16
    // Predicated region
    $region17: #{resblock_forward.7} parent=5 // pred_check
      %p155 = pneg %p154
    $region18: #{resblock_forward.7} parent=5 // pred_check_branch
      %157 = sbr.rel (%p155) target = $region20
    $region19: #{resblock_forward.7} parent=5 // pred_region
      // Predicated region
      $region21: #{resblock_forward.7} parent=19 // pred_check
        %p158 = pneg %p31
      $region22: #{resblock_forward.7} parent=19 // pred_check_branch
        %160 = sbr.rel (%p158) target = $region24
      $region23: #{resblock_forward.7} parent=19 // pred_region
        %p161 = scmp.lt.s32.totalorder %s11, 15
        %s162 = scalar_select %p161, %s11, 15
        %s163 = smul.addr %s162, 5
        %s164 = smul.addr %s163, 4
        %s165 = scalar_lea.vmem %s0, %s164
      $region24: #{resblock_forward.7} parent=19 // pred_fallthru
        _
    $region20: #{resblock_forward.7} parent=5 // pred_fallthru
      _
    %p166 = scmp.le.s32.totalorder 1, %s11
    %p167 = scmp.lt.s32.totalorder %s11, 17
    %p168 = pnand %p166, %p167
    %p169 = pneg %p168
    // Predicated region
    $region25: #{resblock_forward.7} parent=5 // pred_check
      _
    $region26: #{resblock_forward.7} parent=5 // pred_check_branch
      %171 = sbr.rel (%p168) target = $region28
    $region27: #{resblock_forward.7} parent=5 // pred_region
      %s172 = ssub.s32 %s11, 1
      %p173 = scmp.lt.s32.totalorder %s16, 15
      %s174 = scalar_select %p173, %s16, 15
      %s175 = smul.addr %s174, 5
      %s176 = smul.addr %s175, 4
      %s177 = scalar_lea.vmem %s0, %s176
      %p178 = pneg %p37
      %p179 = pneg %p34
      %p180 = pneg %p58
      %p181 = pneg %p55
      %p182 = pneg %p84
      %p183 = pneg %p81
      %p184 = scmp.lt.s32.totalorder %s16, 15
      %s185 = scalar_select %p184, %s16, 15
      %s186 = smul.addr %s185, 5
      %s187 = smul.addr %s186, 4
      %s188 = scalar_lea.vmem %s2, %s187
      %p189 = pneg %p110
      %p190 = pneg %p107
      %p191 = scmp.lt.s32.totalorder %s16, 15
      %s192 = scalar_select %p191, %s16, 15
      %s193 = scalar_lea.vmem %s3, %s192
      %p194 = pneg %p136
      %p195 = pneg %p133
      %p196 = scmp.lt.s32.totalorder %s16, 15
      %s197 = scalar_select %p196, %s16, 15
      %s198 = scalar_lea.vmem %s4, %s197
      %p199 = scmp.lt.s32.totalorder %s16, 15
      %s200 = scalar_select %p199, %s16, 15
      %s201 = smul.addr %s200, 5
      %s202 = smul.addr %s201, 4
      %s203 = scalar_lea.vmem %s0, %s202
      %p204 = scmp.lt.s32.totalorder %s16, 15
      %s205 = scalar_select %p204, %s16, 15
      %s206 = smul.addr %s205, 5
      %s207 = smul.addr %s206, 4
      %s208 = scalar_lea.vmem %s2, %s207
      %p209 = scmp.lt.s32.totalorder %s16, 15
      %s210 = scalar_select %p209, %s16, 15
      %s211 = scalar_lea.vmem %s3, %s210
      %p212 = scmp.lt.s32.totalorder %s16, 15
      %s213 = scalar_select %p212, %s16, 15
      %s214 = scalar_lea.vmem %s4, %s213
      %v216 = vld [vmem:[%s203] sm:$0xf]
      %v217 = vld [vmem:[%s203 + $0x4] sm:$0xf]
      %v218 = vld [vmem:[%s203 + $0x8] sm:$0xf]
      %v219 = vld [vmem:[%s203 + $0xc] sm:$0xf]
      %v220 = vld [vmem:[%s203 + $0x10] sm:$0x3]
      %v221 = vld [vmem:[%s1] sm:$0x3]
      %v227 = vunpack.c.l.b16 %v216
      %v228 = vunpack.c.l.b16 %v217
      %v229 = vunpack.c.l.b16 %v218
      %v230 = vunpack.c.l.b16 %v219
      %v231 = vunpack.c.l.b16 %v220
      %v232 = vpack.c.b16 %v228, %v227
      %v233 = vpack.c.b16 %v230, %v229
      %v234 = vpack.c.b16 %v231, %v231
      %vm235 = vcmask 31744
      %v237 = vsel %vm235, %v232, 0
      %v240 = vsel %vm235, %v233, 0
      %v243 = vsel %vm235, %v234, 0
      %vm245 = vcmask 1041408
      %v247 = vsel %vm245, %v221, 0
      %249 = vmatprep.subr.bf16.mxu0 0
      %250 = vmatpush1.bf16.msra.mxu0 %v247
      %251 = vmatprep.subr.bf16.mxu0 0
      %252 = vmatpush1.bf16.msra.mxu0 0
      %253 = vmatprep.subr.bf16.mxu0 0
      %254 = vmatpush1.bf16.msra.mxu0 0
      %255 = vmatprep.subr.bf16.mxu0 0
      %256 = vmatpush1.bf16.msra.mxu0 0
      %257 = vmatprep.subr.bf16.mxu0 0
      %258 = vmatpush1.bf16.msra.mxu0 0
      %259 = vmatprep.subr.bf16.mxu0 0
      %260 = vmatpush1.bf16.msra.mxu0 0
      %261 = vmatprep.subr.bf16.mxu0 0
      %262 = vmatpush1.bf16.msra.mxu0 0
      %263 = vmatprep.subr.bf16.mxu0 0
      %264 = vmatpush1.bf16.msra.mxu0 0
      %265 = vmatprep.subr.bf16.mxu0 0
      %266 = vmatpush1.bf16.msra.mxu0 0
      %267 = vmatprep.subr.bf16.mxu0 0
      %268 = vmatpush1.bf16.msra.mxu0 0
      %269 = vmatprep.subr.bf16.mxu0 0
      %270 = vmatpush1.bf16.msra.mxu0 0
      %271 = vmatprep.subr.bf16.mxu0 0
      %272 = vmatpush1.bf16.msra.mxu0 0
      %273 = vmatprep.subr.bf16.mxu0 0
      %274 = vmatpush1.bf16.msra.mxu0 0
      %275 = vmatprep.subr.bf16.mxu0 0
      %276 = vmatpush1.bf16.msra.mxu0 0
      %277 = vmatprep.subr.bf16.mxu0 0
      %278 = vmatpush1.bf16.msra.mxu0 0
      %279 = vmatprep.subr.bf16.mxu0 0
      %280 = vmatpush1.bf16.msra.mxu0 0
      %281 = vmatprep.mubr.bf16.mxu0 0
      %282 = vmatmul.mubr.bf16.gmra.mrb[0].mxu0 %v237
      %v283 = vpop.f32.mrb[0].mxu0
      %v284 = vadd.f32 0.0, %v283
      %v285 = vpop.f32.mrb[0].mxu0
      %v286 = vpop.f32.mrb[0].mxu0
      %v287 = vadd.f32 0.0, %v286
      %v288 = vpop.f32.mrb[0].mxu0
      %289 = vmatprep.mubr.bf16.mxu0 0
      %290 = vmatmul.mubr.bf16.gmra.mrb[0].mxu0 %v240
      %v291 = vpop.f32.mrb[0].mxu0
      %v292 = vadd.f32 0.0, %v291
      %v293 = vpop.f32.mrb[0].mxu0
      %v294 = vpop.f32.mrb[0].mxu0
      %v295 = vadd.f32 0.0, %v294
      %v296 = vpop.f32.mrb[0].mxu0
      %297 = vmatprep.mubr.bf16.mxu0 0
      %298 = vmatmul.mubr.bf16.gmra.mrb[0].mxu0 %v243
      %v299 = vpop.f32.mrb[0].mxu0
      %v300 = vadd.f32 0.0, %v299
      %v301 = vpop.f32.mrb[0].mxu0
      %v302 = vpop.f32.mrb[0].mxu0
      %v303 = vpop.f32.mrb[0].mxu0
      %304 = vdwg.mxu0
      %v305 = vpack.c.bf16 %v287, %v284
      %v306 = vpack.c.bf16 %v295, %v292
      %v307 = vpack.c.bf16 %v300, %v300
      %v311 = vunpack.c.l.b16 %v305
      %v312 = vunpack.c.h.b16 %v305
      %v313 = vunpack.c.l.b16 %v306
      %v314 = vunpack.c.h.b16 %v306
      %v315 = vunpack.c.l.b16 %v307
      %v316 = vpack.c.b16 %v311, %v311
      %v317 = vpack.c.b16 %v312, %v312
      %v318 = vpack.c.b16 %v313, %v313
      %v319 = vpack.c.b16 %v314, %v314
      %v320 = vpack.c.b16 %v315, %v315
      %326 = vst [vmem:[%s208] sm:$0xf] %v316
      %327 = vst [vmem:[%s208 + $0x4] sm:$0xf] %v317
      %328 = vst [vmem:[%s208 + $0x8] sm:$0xf] %v318
      %329 = vst [vmem:[%s208 + $0xc] sm:$0xf] %v319
      %330 = vst [vmem:[%s208 + $0x10] sm:$0x3] %v320
      %v331 = vadd.f32 %v284, %v287
      %v332 = vadd.f32 %v331, %v292
      %v333 = vadd.f32 %v332, %v295
      %vm334 = vcmask 1043456
      %v335 = vsel %vm334, %v300, 0.0
      %v336 = vadd.f32 %v333, %v335
      %v337 = vrot.slane %v336, 4
      %v338 = vadd.f32 %v336, %v337
      %v339 = vrot.slane %v338, 2
      %v340 = vadd.f32 %v338, %v339
      %v341 = vrot.slane %v340, 1
      %v342 = vadd.f32 %v340, %v341
      %343 = vst [vmem:[%s211] sm:$0x1] %v342
      %v344 = vmul.f32 %v284, %v284
      %v345 = vmul.f32 %v287, %v287
      %v346 = vmul.f32 %v292, %v292
      %v347 = vmul.f32 %v295, %v295
      %v348 = vmul.f32 %v300, %v300
      %v349 = vadd.f32 %v344, %v345
      %v350 = vadd.f32 %v349, %v346
      %v351 = vadd.f32 %v350, %v347
      %v352 = vsel %vm334, %v348, 0.0
      %v353 = vadd.f32 %v351, %v352
      %v354 = vrot.slane %v353, 4
      %v355 = vadd.f32 %v353, %v354
      %v356 = vrot.slane %v355, 2
      %v357 = vadd.f32 %v355, %v356
      %v358 = vrot.slane %v357, 1
      %v359 = vadd.f32 %v357, %v358
      %360 = vst [vmem:[%s214] sm:$0x1] %v359
      %p361 = scmp.lt.s32.totalorder %s16, 15
      %s362 = scalar_select %p361, %s16, 15
      %s363 = smul.addr %s362, 5
      %s364 = smul.addr %s363, 4
      %s365 = scalar_lea.vmem %s2, %s364
      %p366 = scmp.lt.s32.totalorder %s16, 15
      %s367 = scalar_select %p366, %s16, 15
      %s368 = scalar_lea.vmem %s3, %s367
      %p369 = scmp.lt.s32.totalorder %s16, 15
      %s370 = scalar_select %p369, %s16, 15
      %s371 = scalar_lea.vmem %s4, %s370
      // Predicated region
      $region29: #{resblock_forward.7} parent=27 // pred_check
        %p372 = pneg %p81
      $region30: #{resblock_forward.7} parent=27 // pred_check_branch
        %374 = sbr.rel (%p372) target = $region32
      $region31: #{resblock_forward.7} parent=27 // pred_region
        _
      $region32: #{resblock_forward.7} parent=27 // pred_fallthru
        _
      // Predicated region
      $region33: #{resblock_forward.7} parent=27 // pred_check
        %p375 = pneg %p107
      $region34: #{resblock_forward.7} parent=27 // pred_check_branch
        %377 = sbr.rel (%p375) target = $region36
      $region35: #{resblock_forward.7} parent=27 // pred_region
        _
      $region36: #{resblock_forward.7} parent=27 // pred_fallthru
        _
      // Predicated region
      $region37: #{resblock_forward.7} parent=27 // pred_check
        %p378 = pneg %p133
      $region38: #{resblock_forward.7} parent=27 // pred_check_branch
        %380 = sbr.rel (%p378) target = $region40
      $region39: #{resblock_forward.7} parent=27 // pred_region
        _
      $region40: #{resblock_forward.7} parent=27 // pred_fallthru
        _
    $region28: #{resblock_forward.7} parent=5 // pred_fallthru
      _
    %p381 = scmp.le.s32.totalorder 2, %s11
    // Predicated region
    $region41: #{resblock_forward.7} parent=5 // pred_check
      %p382 = pneg %p381
    $region42: #{resblock_forward.7} parent=5 // pred_check_branch
      %384 = sbr.rel (%p382) target = $region44
    $region43: #{resblock_forward.7} parent=5 // pred_region
      %s385 = ssub.s32 %s11, 2
      // Predicated region
      $region45: #{resblock_forward.7} parent=43 // pred_check
        %p386 = pneg %p87
      $region46: #{resblock_forward.7} parent=43 // pred_check_branch
        %388 = sbr.rel (%p386) target = $region48
      $region47: #{resblock_forward.7} parent=43 // pred_region
        %p389 = scmp.lt.s32.totalorder %s17, 15
        %s390 = scalar_select %p389, %s17, 15
        %s391 = smul.addr %s390, 5
        %s392 = smul.addr %s391, 4
        %s393 = scalar_lea.vmem %s2, %s392
      $region48: #{resblock_forward.7} parent=43 // pred_fallthru
        _
      // Predicated region
      $region49: #{resblock_forward.7} parent=43 // pred_check
        %p394 = pneg %p113
      $region50: #{resblock_forward.7} parent=43 // pred_check_branch
        %396 = sbr.rel (%p394) target = $region52
      $region51: #{resblock_forward.7} parent=43 // pred_region
        %p397 = scmp.lt.s32.totalorder %s17, 15
        %s398 = scalar_select %p397, %s17, 15
        %s399 = scalar_lea.vmem %s3, %s398
      $region52: #{resblock_forward.7} parent=43 // pred_fallthru
        _
      // Predicated region
      $region53: #{resblock_forward.7} parent=43 // pred_check
        %p400 = pneg %p139
      $region54: #{resblock_forward.7} parent=43 // pred_check_branch
        %402 = sbr.rel (%p400) target = $region56
      $region55: #{resblock_forward.7} parent=43 // pred_region
        %p403 = scmp.lt.s32.totalorder %s17, 15
        %s404 = scalar_select %p403, %s17, 15
        %s405 = scalar_lea.vmem %s4, %s404
      $region56: #{resblock_forward.7} parent=43 // pred_fallthru
        _
    $region44: #{resblock_forward.7} parent=5 // pred_fallthru
      _
  $region6: #{resblock_forward.7} parent=0 // loop_footer
    %s15 = sadd.s32 1, %s11
  $region7: #{resblock_forward.7} parent=0 // loop_footer_branch
    %10 = sbr.rel target = $region3
  $region8: #{resblock_forward.7} parent=0 // loop_exit
    _

// kernel: resblock_forward.9
$region0: #{resblock_forward.9}
  #allocation0 [shape = 'u32[]', space=smem, size = 0x4, offset = 0x4, fixed_abs, tag = 'smem constant byte address 0x4 - core index']
  #allocation1 [shape = 'u32[144,128]{1,0:T(1,128)}', space=vmem, size = 0x12000, scoped, tag = 'internal scratch']
  %s0 = inlined_call_operand.vmem [shape: bf16[16,36,128], index: 0, kind: input, shape index: {}]
  %s1 = inlined_call_operand.vmem [shape: f32[1,128], index: 1, kind: input, shape index: {}]
  %s2 = inlined_call_operand.vmem [shape: f32[1,128], index: 2, kind: input, shape index: {}]
  %s3 = inlined_call_operand.vmem [shape: bf16[16,36,128], index: 3, kind: input, shape index: {}]
  %s4 = inlined_call_operand.vmem [shape: f32[1,128], index: 4, kind: input, shape index: {}]
  %s5 = inlined_call_operand.vmem [shape: f32[1,128], index: 5, kind: input, shape index: {}]
  %s6 = inlined_call_operand.vmem [shape: f32[16,36,128], index: 6, kind: output, shape index: {}]
  %s7 = sld [smem:[#allocation0]]
  $region57: #{resblock_forward.9} parent=0
    _
  %s9 = ssub.s32 1, %s7
  %s10 = scalar_select 0, %s9, %s7
  loop: start=0, step=1, limit=18
  $region2: #{resblock_forward.9} parent=0 // loop_pre_header
    _
  $region3: #{resblock_forward.9} parent=0 // loop_header
    %s12 = sphi 0, %s16
    %p13 = scmp.ge.s32.totalorder %s12, 18
    %s22 = sphi 0, %s24
    %s25 = sphi 0, %s22
    %s26 = sphi 0, %s25
    %s42 = sphi 0, %s26
    %s46 = sphi 0, %s46
    %s48 = sphi 0, %s46
    %s49 = sphi 0, %s48
    %s63 = sphi 0, %s49
    %s67 = sphi 0, %s67
    %s69 = sphi 0, %s67
    %s70 = sphi 0, %s69
    %s84 = sphi 0, %s70
    %s90 = sphi 0, %s92
    %s93 = sphi 0, %s90
    %s94 = sphi 0, %s93
    %s110 = sphi 0, %s94
    %s114 = sphi 0, %s114
    %s116 = sphi 0, %s114
    %s117 = sphi 0, %s116
    %s131 = sphi 0, %s117
    %s135 = sphi 0, %s135
    %s137 = sphi 0, %s135
    %s138 = sphi 0, %s137
    %s152 = sphi 0, %s138
    %s158 = sphi 0, %s160
    %s161 = sphi 0, %s158
    %s162 = sphi 0, %s161
    %s178 = sphi 0, %s162
  $region4: #{resblock_forward.9} parent=0 // loop_header_branch
    %15 = sbr.rel (%p13) target = $region8
  $region5: #{resblock_forward.9} parent=0 // loop_body
    %s17 = ssub.s32 %s12, 1
    %s18 = ssub.s32 %s12, 2
    %s19 = sadd.s32 %s12, 1
    %s20 = ssub.s32 %s12, %s19
    %p21 = scmp.eq.s32.totalorder %s20, 0
    %s23 = sadd.s32 %s22, 1
    %s24 = scalar_select %p21, %s22, %s23
    %p27 = pneg %p21
    %p28 = scmp.eq.s32.totalorder %s12, 15
    %p29 = por %p27, %p28
    %p30 = scmp.ne.s32.totalorder %s22, %s25
    %p31 = scmp.eq.s32.totalorder %s12, 0
    %p32 = por %p30, %p31
    %p33 = scmp.ne.s32.totalorder %s22, %s25
    %p34 = scmp.eq.s32.totalorder %s17, 15
    %p35 = por %p33, %p34
    %p36 = scmp.ne.s32.totalorder %s25, %s26
    %p37 = scmp.eq.s32.totalorder %s17, 0
    %p38 = por %p36, %p37
    %p39 = scmp.ne.s32.totalorder %s25, %s26
    %p40 = scmp.eq.s32.totalorder %s18, 15
    %p41 = por %p39, %p40
    %p43 = scmp.ne.s32.totalorder %s26, %s42
    %p44 = scmp.eq.s32.totalorder %s18, 0
    %p45 = por %p43, %p44
    %s47 = sadd.s32 %s46, 1
    %p50 = scmp.eq.s32.totalorder %s12, 15
    %p51 = scmp.ne.s32.totalorder %s46, %s48
    %p52 = scmp.eq.s32.totalorder %s12, 0
    %p53 = por %p51, %p52
    %p54 = scmp.ne.s32.totalorder %s46, %s48
    %p55 = scmp.eq.s32.totalorder %s17, 15
    %p56 = por %p54, %p55
    %p57 = scmp.ne.s32.totalorder %s48, %s49
    %p58 = scmp.eq.s32.totalorder %s17, 0
    %p59 = por %p57, %p58
    %p60 = scmp.ne.s32.totalorder %s48, %s49
    %p61 = scmp.eq.s32.totalorder %s18, 15
    %p62 = por %p60, %p61
    %p64 = scmp.ne.s32.totalorder %s49, %s63
    %p65 = scmp.eq.s32.totalorder %s18, 0
    %p66 = por %p64, %p65
    %s68 = sadd.s32 %s67, 1
    %p71 = scmp.eq.s32.totalorder %s12, 15
    %p72 = scmp.ne.s32.totalorder %s67, %s69
    %p73 = scmp.eq.s32.totalorder %s12, 0
    %p74 = por %p72, %p73
    %p75 = scmp.ne.s32.totalorder %s67, %s69
    %p76 = scmp.eq.s32.totalorder %s17, 15
    %p77 = por %p75, %p76
    %p78 = scmp.ne.s32.totalorder %s69, %s70
    %p79 = scmp.eq.s32.totalorder %s17, 0
    %p80 = por %p78, %p79
    %p81 = scmp.ne.s32.totalorder %s69, %s70
    %p82 = scmp.eq.s32.totalorder %s18, 15
    %p83 = por %p81, %p82
    %p85 = scmp.ne.s32.totalorder %s70, %s84
    %p86 = scmp.eq.s32.totalorder %s18, 0
    %p87 = por %p85, %p86
    %s88 = ssub.s32 %s12, %s19
    %p89 = scmp.eq.s32.totalorder %s88, 0
    %s91 = sadd.s32 %s90, 1
    %s92 = scalar_select %p89, %s90, %s91
    %p95 = pneg %p89
    %p96 = scmp.eq.s32.totalorder %s12, 15
    %p97 = por %p95, %p96
    %p98 = scmp.ne.s32.totalorder %s90, %s93
    %p99 = scmp.eq.s32.totalorder %s12, 0
    %p100 = por %p98, %p99
    %p101 = scmp.ne.s32.totalorder %s90, %s93
    %p102 = scmp.eq.s32.totalorder %s17, 15
    %p103 = por %p101, %p102
    %p104 = scmp.ne.s32.totalorder %s93, %s94
    %p105 = scmp.eq.s32.totalorder %s17, 0
    %p106 = por %p104, %p105
    %p107 = scmp.ne.s32.totalorder %s93, %s94
    %p108 = scmp.eq.s32.totalorder %s18, 15
    %p109 = por %p107, %p108
    %p111 = scmp.ne.s32.totalorder %s94, %s110
    %p112 = scmp.eq.s32.totalorder %s18, 0
    %p113 = por %p111, %p112
    %s115 = sadd.s32 %s114, 1
    %p118 = scmp.eq.s32.totalorder %s12, 15
    %p119 = scmp.ne.s32.totalorder %s114, %s116
    %p120 = scmp.eq.s32.totalorder %s12, 0
    %p121 = por %p119, %p120
    %p122 = scmp.ne.s32.totalorder %s114, %s116
    %p123 = scmp.eq.s32.totalorder %s17, 15
    %p124 = por %p122, %p123
    %p125 = scmp.ne.s32.totalorder %s116, %s117
    %p126 = scmp.eq.s32.totalorder %s17, 0
    %p127 = por %p125, %p126
    %p128 = scmp.ne.s32.totalorder %s116, %s117
    %p129 = scmp.eq.s32.totalorder %s18, 15
    %p130 = por %p128, %p129
    %p132 = scmp.ne.s32.totalorder %s117, %s131
    %p133 = scmp.eq.s32.totalorder %s18, 0
    %p134 = por %p132, %p133
    %s136 = sadd.s32 %s135, 1
    %p139 = scmp.eq.s32.totalorder %s12, 15
    %p140 = scmp.ne.s32.totalorder %s135, %s137
    %p141 = scmp.eq.s32.totalorder %s12, 0
    %p142 = por %p140, %p141
    %p143 = scmp.ne.s32.totalorder %s135, %s137
    %p144 = scmp.eq.s32.totalorder %s17, 15
    %p145 = por %p143, %p144
    %p146 = scmp.ne.s32.totalorder %s137, %s138
    %p147 = scmp.eq.s32.totalorder %s17, 0
    %p148 = por %p146, %p147
    %p149 = scmp.ne.s32.totalorder %s137, %s138
    %p150 = scmp.eq.s32.totalorder %s18, 15
    %p151 = por %p149, %p150
    %p153 = scmp.ne.s32.totalorder %s138, %s152
    %p154 = scmp.eq.s32.totalorder %s18, 0
    %p155 = por %p153, %p154
    %s156 = ssub.s32 %s12, %s19
    %p157 = scmp.eq.s32.totalorder %s156, 0
    %s159 = sadd.s32 %s158, 1
    %s160 = scalar_select %p157, %s158, %s159
    %p163 = pneg %p157
    %p164 = scmp.eq.s32.totalorder %s12, 15
    %p165 = por %p163, %p164
    %p166 = scmp.ne.s32.totalorder %s158, %s161
    %p167 = scmp.eq.s32.totalorder %s12, 0
    %p168 = por %p166, %p167
    %p169 = scmp.ne.s32.totalorder %s158, %s161
    %p170 = scmp.eq.s32.totalorder %s17, 15
    %p171 = por %p169, %p170
    %p172 = scmp.ne.s32.totalorder %s161, %s162
    %p173 = scmp.eq.s32.totalorder %s17, 0
    %p174 = por %p172, %p173
    %p175 = scmp.ne.s32.totalorder %s161, %s162
    %p176 = scmp.eq.s32.totalorder %s18, 15
    %p177 = por %p175, %p176
    %p179 = scmp.ne.s32.totalorder %s162, %s178
    %p180 = scmp.eq.s32.totalorder %s18, 0
    %p181 = por %p179, %p180
    %p182 = scmp.le.s32.totalorder 1, %s12
    %p183 = scmp.lt.s32.totalorder %s12, 17
    %p184 = pnand %p182, %p183
    %p185 = pneg %p184
    // Predicated region
    $region9: #{resblock_forward.9} parent=5 // pred_check
      _
    $region10: #{resblock_forward.9} parent=5 // pred_check_branch
      %187 = sbr.rel (%p184) target = $region12
    $region11: #{resblock_forward.9} parent=5 // pred_region
      %s188 = ssub.s32 %s12, 1
      // Predicated region
      $region13: #{resblock_forward.9} parent=11 // pred_check
        %p189 = pneg %p59
      $region14: #{resblock_forward.9} parent=11 // pred_check_branch
        %191 = sbr.rel (%p189) target = $region16
      $region15: #{resblock_forward.9} parent=11 // pred_region
        _
      $region16: #{resblock_forward.9} parent=11 // pred_fallthru
        _
      // Predicated region
      $region17: #{resblock_forward.9} parent=11 // pred_check
        %p192 = pneg %p80
      $region18: #{resblock_forward.9} parent=11 // pred_check_branch
        %194 = sbr.rel (%p192) target = $region20
      $region19: #{resblock_forward.9} parent=11 // pred_region
        _
      $region20: #{resblock_forward.9} parent=11 // pred_fallthru
        _
      // Predicated region
      $region21: #{resblock_forward.9} parent=11 // pred_check
        %p195 = pneg %p127
      $region22: #{resblock_forward.9} parent=11 // pred_check_branch
        %197 = sbr.rel (%p195) target = $region24
      $region23: #{resblock_forward.9} parent=11 // pred_region
        _
      $region24: #{resblock_forward.9} parent=11 // pred_fallthru
        _
      // Predicated region
      $region25: #{resblock_forward.9} parent=11 // pred_check
        %p198 = pneg %p148
      $region26: #{resblock_forward.9} parent=11 // pred_check_branch
        %200 = sbr.rel (%p198) target = $region28
      $region27: #{resblock_forward.9} parent=11 // pred_region
        _
      $region28: #{resblock_forward.9} parent=11 // pred_fallthru
        _
    $region12: #{resblock_forward.9} parent=5 // pred_fallthru
      _
    %p201 = scmp.lt.s32.totalorder %s12, 16
    // Predicated region
    $region29: #{resblock_forward.9} parent=5 // pred_check
      %p202 = pneg %p201
    $region30: #{resblock_forward.9} parent=5 // pred_check_branch
      %204 = sbr.rel (%p202) target = $region32
    $region31: #{resblock_forward.9} parent=5 // pred_region
      // Predicated region
      $region33: #{resblock_forward.9} parent=31 // pred_check
        %p205 = pneg %p32
      $region34: #{resblock_forward.9} parent=31 // pred_check_branch
        %207 = sbr.rel (%p205) target = $region36
      $region35: #{resblock_forward.9} parent=31 // pred_region
        %p208 = scmp.lt.s32.totalorder %s12, 15
        %s209 = scalar_select %p208, %s12, 15
        %s210 = smul.addr %s209, 5
        %s211 = smul.addr %s210, 4
        %s212 = scalar_lea.vmem %s0, %s211
      $region36: #{resblock_forward.9} parent=31 // pred_fallthru
        _
      // Predicated region
      $region37: #{resblock_forward.9} parent=31 // pred_check
        %p213 = pneg %p100
      $region38: #{resblock_forward.9} parent=31 // pred_check_branch
        %215 = sbr.rel (%p213) target = $region40
      $region39: #{resblock_forward.9} parent=31 // pred_region
        %p216 = scmp.lt.s32.totalorder %s12, 15
        %s217 = scalar_select %p216, %s12, 15
        %s218 = smul.addr %s217, 5
        %s219 = smul.addr %s218, 4
        %s220 = scalar_lea.vmem %s3, %s219
      $region40: #{resblock_forward.9} parent=31 // pred_fallthru
        _
    $region32: #{resblock_forward.9} parent=5 // pred_fallthru
      _
    %p221 = scmp.le.s32.totalorder 1, %s12
    %p222 = scmp.lt.s32.totalorder %s12, 17
    %p223 = pnand %p221, %p222
    %p224 = pneg %p223
    // Predicated region
    $region41: #{resblock_forward.9} parent=5 // pred_check
      _
    $region42: #{resblock_forward.9} parent=5 // pred_check_branch
      %226 = sbr.rel (%p223) target = $region44
    $region43: #{resblock_forward.9} parent=5 // pred_region
      %s227 = ssub.s32 %s12, 1
      %p228 = scmp.lt.s32.totalorder %s17, 15
      %s229 = scalar_select %p228, %s17, 15
      %s230 = smul.addr %s229, 5
      %s231 = smul.addr %s230, 4
      %s232 = scalar_lea.vmem %s0, %s231
      %p233 = pneg %p38
      %p234 = pneg %p35
      %p235 = pneg %p59
      %p236 = pneg %p56
      %p237 = pneg %p80
      %p238 = pneg %p77
      %p239 = scmp.lt.s32.totalorder %s17, 15
      %s240 = scalar_select %p239, %s17, 15
      %s241 = smul.addr %s240, 5
      %s242 = smul.addr %s241, 4
      %s243 = scalar_lea.vmem %s3, %s242
      %p244 = pneg %p106
      %p245 = pneg %p103
      %p246 = pneg %p127
      %p247 = pneg %p124
      %p248 = pneg %p148
      %p249 = pneg %p145
      %p250 = pneg %p174
      %p251 = pneg %p171
      %p252 = scmp.lt.s32.totalorder %s17, 15
      %s253 = scalar_select %p252, %s17, 15
      %s254 = smul.addr %s253, 5
      %s255 = smul.addr %s254, 8
      %s256 = scalar_lea.vmem %s6, %s255
      %p257 = scmp.lt.s32.totalorder %s17, 15
      %s258 = scalar_select %p257, %s17, 15
      %s259 = smul.addr %s258, 5
      %s260 = smul.addr %s259, 4
      %s261 = scalar_lea.vmem %s0, %s260
      %p262 = scmp.lt.s32.totalorder %s17, 15
      %s263 = scalar_select %p262, %s17, 15
      %s264 = smul.addr %s263, 5
      %s265 = smul.addr %s264, 4
      %s266 = scalar_lea.vmem %s3, %s265
      %p267 = scmp.lt.s32.totalorder %s17, 15
      %s268 = scalar_select %p267, %s17, 15
      %s269 = smul.addr %s268, 5
      %s270 = smul.addr %s269, 8
      %s271 = scalar_lea.vmem %s6, %s270
      %v272 = vld [vmem:[%s261] sm:$0xf]
      %v273 = vld [vmem:[%s261 + $0x4] sm:$0xf]
      %v274 = vld [vmem:[%s261 + $0x8] sm:$0xf]
      %v275 = vld [vmem:[%s261 + $0xc] sm:$0xf]
      %v276 = vld [vmem:[%s261 + $0x10] sm:$0x3]
      %v277 = vunpack.c.l.bf16 %v272
      %v278 = vunpack.c.l.bf16 %v273
      %v279 = vunpack.c.l.bf16 %v274
      %v280 = vunpack.c.l.bf16 %v275
      %v281 = vunpack.c.l.bf16 %v276
      %v282 = vld [vmem:[%s1] sm:$0x1]
      %v284 = vlaneseq
      %v285 = vshrl.u32 %v284, 7
      %v286 = vsub.s32 0, %v285
      %v287 = vrot.slane %v282, %v286
      %v289 = vmul.f32 %v277, %v287
      %v290 = vmul.f32 %v278, %v287
      %v291 = vmul.f32 %v279, %v287
      %v292 = vmul.f32 %v280, %v287
      %v293 = vmul.f32 %v281, %v287
      %v294 = vld [vmem:[%s2] sm:$0x1]
      %v296 = vlaneseq
      %v297 = vshrl.u32 %v296, 7
      %v298 = vsub.s32 0, %v297
      %v299 = vrot.slane %v294, %v298
      %v301 = vadd.f32 %v289, %v299
      %v302 = vadd.f32 %v290, %v299
      %v303 = vadd.f32 %v291, %v299
      %v304 = vadd.f32 %v292, %v299
      %v305 = vadd.f32 %v293, %v299
      %v306 = vld [vmem:[%s266] sm:$0xf]
      %v307 = vld [vmem:[%s266 + $0x4] sm:$0xf]
      %v308 = vld [vmem:[%s266 + $0x8] sm:$0xf]
      %v309 = vld [vmem:[%s266 + $0xc] sm:$0xf]
      %v310 = vld [vmem:[%s266 + $0x10] sm:$0x3]
      %v311 = vunpack.c.l.bf16 %v306
      %v312 = vunpack.c.l.bf16 %v307
      %v313 = vunpack.c.l.bf16 %v308
      %v314 = vunpack.c.l.bf16 %v309
      %v315 = vunpack.c.l.bf16 %v310
      %v316 = vld [vmem:[%s4] sm:$0x1]
      %v318 = vlaneseq
      %v319 = vshrl.u32 %v318, 7
      %v320 = vsub.s32 0, %v319
      %v321 = vrot.slane %v316, %v320
      %v323 = vmul.f32 %v311, %v321
      %v324 = vmul.f32 %v312, %v321
      %v325 = vmul.f32 %v313, %v321
      %v326 = vmul.f32 %v314, %v321
      %v327 = vmul.f32 %v315, %v321
      %v328 = vld [vmem:[%s5] sm:$0x1]
      %v330 = vlaneseq
      %v331 = vshrl.u32 %v330, 7
      %v332 = vsub.s32 0, %v331
      %v333 = vrot.slane %v328, %v332
      %v335 = vadd.f32 %v323, %v333
      %v336 = vadd.f32 %v324, %v333
      %v337 = vadd.f32 %v325, %v333
      %v338 = vadd.f32 %v326, %v333
      %v339 = vadd.f32 %v327, %v333
      %v340 = vadd.f32 %v301, %v335
      %v341 = vadd.f32 %v302, %v336
      %v342 = vadd.f32 %v303, %v337
      %v343 = vadd.f32 %v304, %v338
      %v344 = vadd.f32 %v305, %v339
      %v345 = vmax.f32 %v340, 0.0
      %v346 = vmax.f32 %v341, 0.0
      %v347 = vmax.f32 %v342, 0.0
      %v348 = vmax.f32 %v343, 0.0
      %v349 = vmax.f32 %v344, 0.0
      %350 = vst [vmem:[%s271] sm:$0xff] %v345
      %351 = vst [vmem:[%s271 + $0x8] sm:$0xff] %v346
      %352 = vst [vmem:[%s271 + $0x10] sm:$0xff] %v347
      %353 = vst [vmem:[%s271 + $0x18] sm:$0xff] %v348
      %354 = vst [vmem:[%s271 + $0x20] sm:$0xf] %v349
      %p355 = scmp.lt.s32.totalorder %s17, 15
      %s356 = scalar_select %p355, %s17, 15
      %s357 = smul.addr %s356, 5
      %s358 = smul.addr %s357, 8
      %s359 = scalar_lea.vmem %s6, %s358
      // Predicated region
      $region45: #{resblock_forward.9} parent=43 // pred_check
        %p360 = pneg %p171
      $region46: #{resblock_forward.9} parent=43 // pred_check_branch
        %362 = sbr.rel (%p360) target = $region48
      $region47: #{resblock_forward.9} parent=43 // pred_region
        _
      $region48: #{resblock_forward.9} parent=43 // pred_fallthru
        _
    $region44: #{resblock_forward.9} parent=5 // pred_fallthru
      _
    %p363 = scmp.le.s32.totalorder 2, %s12
    // Predicated region
    $region49: #{resblock_forward.9} parent=5 // pred_check
      %p364 = pneg %p363
    $region50: #{resblock_forward.9} parent=5 // pred_check_branch
      %366 = sbr.rel (%p364) target = $region52
    $region51: #{resblock_forward.9} parent=5 // pred_region
      %s367 = ssub.s32 %s12, 2
      // Predicated region
      $region53: #{resblock_forward.9} parent=51 // pred_check
        %p368 = pneg %p177
      $region54: #{resblock_forward.9} parent=51 // pred_check_branch
        %370 = sbr.rel (%p368) target = $region56
      $region55: #{resblock_forward.9} parent=51 // pred_region
        %p371 = scmp.lt.s32.totalorder %s18, 15
        %s372 = scalar_select %p371, %s18, 15
        %s373 = smul.addr %s372, 5
        %s374 = smul.addr %s373, 8
        %s375 = scalar_lea.vmem %s6, %s374
      $region56: #{resblock_forward.9} parent=51 // pred_fallthru
        _
    $region52: #{resblock_forward.9} parent=5 // pred_fallthru
      _
  $region6: #{resblock_forward.9} parent=0 // loop_footer
    %s16 = sadd.s32 1, %s12
  $region7: #{resblock_forward.9} parent=0 // loop_footer_branch
    %11 = sbr.rel target = $region3
  $region8: #{resblock_forward.9} parent=0 // loop_exit
    _

</llo_original>
